<compile_context>
chip_gen: v6e
topology: v6e:2x2x1
jax: 0.10.0
libtpu: 0.0.40
codegen_flags: <defaults>
</compile_context>

<pallas_src>
import functools

import jax
import jax.numpy as jnp
from jax import lax
from jax.experimental import pallas as pl
from jax.experimental.pallas import tpu as pltpu

BN_EPS = 1e-5
_SUBLANE = 8
_VMEM_LIMIT = 48 * 1024 * 1024       # safe on v7x (64 MiB physical); fine on v5e/v6e
_FUSED_MAX_ROWS = 1024               # row gate for the single fused kernel
_FUSED_MAX_BYTES = 24 * 1024 * 1024  # byte gate (keeps fused path inside VMEM on v7x)
_TILE_ROWS = 1024                    # preferred batch-tile rows for the staged path
_X_TILE_BUDGET = 8 * 1024 * 1024     # budget for the double-buffered x tile
_PRECISION = lax.Precision.HIGHEST   # pin f32 matmul numerics (PyTorch parity)


def _round_up(n, m):
    return ((n + m - 1) // m) * m


def _cdiv(a, b):
    return -(-a // b)


def _compiler_params(grid_axes=0):
    if grid_axes:
        return pltpu.CompilerParams(
            dimension_semantics=("parallel",) * grid_axes,
            vmem_limit_bytes=_VMEM_LIMIT)
    return pltpu.CompilerParams(vmem_limit_bytes=_VMEM_LIMIT)


def _dot(a, b):
    return jnp.dot(a, b, preferred_element_type=jnp.float32, precision=_PRECISION)


# --------------------------------------------------------------------------
# Path 1: small batch — everything fused in one kernel (whole batch in VMEM).
# --------------------------------------------------------------------------
def _bn_relu_fused(z, gamma, beta, n_rows):
    """ReLU then training-mode BatchNorm1d (single-pass stats, fused affine)."""
    h = jnp.maximum(z, 0.0)
    inv_n = 1.0 / n_rows
    s = jnp.sum(h, axis=0, keepdims=True)
    q = jnp.sum(h * h, axis=0, keepdims=True)
    mean = s * inv_n
    var = q * inv_n - mean * mean            # biased variance (fine at init scales)
    inv = lax.rsqrt(var + BN_EPS)
    scale = inv * gamma                      # (1, F)
    shift = beta - mean * scale              # (1, F)
    return h * scale + shift


def _fused_kernel(x_ref,
                  w1_ref, b1_ref, g1_ref, be1_ref,
                  w2_ref, b2_ref, g2_ref, be2_ref,
                  w3_ref, b3_ref, g3_ref, be3_ref,
                  w4_ref, b4_ref,
                  o_ref, *, n_rows):
    def layer(h, w_ref, b_ref, g_ref, be_ref):
        z = _dot(h, w_ref[...]) + b_ref[...]
        return _bn_relu_fused(z, g_ref[...], be_ref[...], n_rows)

    h = layer(x_ref[...], w1_ref, b1_ref, g1_ref, be1_ref)
    h = layer(h, w2_ref, b2_ref, g2_ref, be2_ref)
    h = layer(h, w3_ref, b3_ref, g3_ref, be3_ref)
    o_ref[...] = (_dot(h, w4_ref[...]) + b4_ref[...]).astype(o_ref.dtype)


def _fused_forward(x, params):
    B = x.shape[0]
    d_out = params[-2].shape[1]
    vspec = pl.BlockSpec(memory_space=pltpu.MemorySpace.VMEM)
    kern = functools.partial(_fused_kernel, n_rows=B)
    return pl.pallas_call(
        kern,
        out_shape=jax.ShapeDtypeStruct((B, d_out), jnp.float32),
        in_specs=[vspec] * (1 + len(params)),
        out_specs=vspec,
        compiler_params=_compiler_params(0),
    )(x, *params)


def _fused_vmem_bytes(B, d_in, d_out):
    acts = B * (d_in + 2 * 128 + 2 * 256 + 2 * 64 + d_out)
    weights = d_in * 128 + 128 * 256 + 256 * 64 + 64 * d_out
    vectors = 3 * (128 + 256 + 64) + d_out
    return 4 * (acts + weights + vectors)


# --------------------------------------------------------------------------
# Path 2: large batch — batch-tiled stages, recompute-from-x (no HBM
# intermediates), full-batch BN folded into the next linear between stages.
# --------------------------------------------------------------------------
def _choose_tiling(batch, d_in):
    """Tile rows: large enough to amortize per-step overhead, small enough
    that the double-buffered x tile stays in VMEM (guards wide D_in), and an
    even tile count so v7x's two TensorCores get equal work."""
    row_bytes = max(1, d_in) * 4
    cap = max(_SUBLANE, (_X_TILE_BUDGET // (2 * row_bytes)) // _SUBLANE * _SUBLANE)
    tile = min(_TILE_ROWS, cap)
    n_tiles = max(2, _cdiv(batch, tile))
    if n_tiles % 2:
        n_tiles += 1
    tile = _round_up(_cdiv(batch, n_tiles), _SUBLANE)
    n_tiles = _cdiv(batch, tile)
    if n_tiles % 2:
        n_tiles += 1
    return tile, n_tiles


def _stats_stage_kernel(x_ref, *refs, depth, batch, tile, need_mask):
    """Recompute layers 1..depth from x; emit per-tile (sum, sumsq) of h_depth."""
    stats_ref = refs[-1]
    h = x_ref[...]
    for l in range(depth):
        h = jnp.maximum(_dot(h, refs[2 * l][...]) + refs[2 * l + 1][...], 0.0)
    if need_mask:   # exclude batch-padding rows from the statistics
        row = lax.broadcasted_iota(jnp.int32, (tile, 1), 0) + pl.program_id(0) * tile
        h = jnp.where(row < batch, h, 0.0)
    stats_ref[:, 0:1, :] = jnp.sum(h, axis=0, keepdims=True)[None]
    stats_ref[:, 1:2, :] = jnp.sum(h * h, axis=0, keepdims=True)[None]


def _final_stage_kernel(x_ref, *refs, depth):
    """Recompute layers 1..depth-1 from x, then the final (un-activated) linear."""
    o_ref = refs[-1]
    h = x_ref[...]
    for l in range(depth - 1):
        h = jnp.maximum(_dot(h, refs[2 * l][...]) + refs[2 * l + 1][...], 0.0)
    o_ref[...] = (_dot(h, refs[2 * depth - 2][...]) + refs[2 * depth - 1][...]
                  ).astype(o_ref.dtype)


def _weight_specs(layers):
    specs, args = [], []
    for w, b in layers:
        specs.append(pl.BlockSpec(w.shape, lambda i: (0, 0)))   # weights resident
        specs.append(pl.BlockSpec(b.shape, lambda i: (0, 0)))   # bias resident
        args.extend((w, b))
    return specs, args


def _stats_stage(xp, layers, *, tile, n_tiles, batch):
    d_in = xp.shape[1]
    f_out = layers[-1][0].shape[1]
    w_specs, w_args = _weight_specs(layers)
    kern = functools.partial(
        _stats_stage_kernel, depth=len(layers), batch=batch, tile=tile,
        need_mask=(tile * n_tiles != batch))
    return pl.pallas_call(
        kern,
        grid=(n_tiles,),
        in_specs=[pl.BlockSpec((tile, d_in), lambda i: (i, 0))] + w_specs,
        out_specs=pl.BlockSpec((1, 2, f_out), lambda i: (i, 0, 0)),
        out_shape=jax.ShapeDtypeStruct((n_tiles, 2, f_out), jnp.float32),
        compiler_params=_compiler_params(1),
    )(xp, *w_args)


def _final_stage(xp, layers, *, tile, n_tiles):
    d_in = xp.shape[1]
    d_out = layers[-1][0].shape[1]
    rows = xp.shape[0]
    w_specs, w_args = _weight_specs(layers)
    kern = functools.partial(_final_stage_kernel, depth=len(layers))
    return pl.pallas_call(
        kern,
        grid=(n_tiles,),
        in_specs=[pl.BlockSpec((tile, d_in), lambda i: (i, 0))] + w_specs,
        out_specs=pl.BlockSpec((tile, d_out), lambda i: (i, 0)),   # un-padded output
        out_shape=jax.ShapeDtypeStruct((rows, d_out), jnp.float32),
        compiler_params=_compiler_params(1),
    )(xp, *w_args)


def _fold_bn_into_next(stats, gamma, beta, w_next, b_next, batch):
    """Reduce per-tile stats; fold the ReLU-side BN affine into the next linear."""
    tot = jnp.sum(stats, axis=0)                   # (2, F)
    mean = tot[0:1] / batch
    var = tot[1:2] / batch - mean * mean           # biased variance
    inv = lax.rsqrt(var + BN_EPS)
    scale = inv * gamma                            # (1, F)
    shift = beta - mean * scale                    # (1, F)
    w_f = scale.reshape(-1, 1) * w_next            # (F, F')
    b_f = jnp.dot(shift, w_next, precision=_PRECISION) + b_next
    return w_f, b_f


def _staged_forward(x, params):
    (w1, b1, g1, be1, w2, b2, g2, be2, w3, b3, g3, be3, w4, b4) = params
    B, d_in = x.shape
    tile, n_tiles = _choose_tiling(B, d_in)
    xp = jnp.pad(x, ((0, tile * n_tiles - B), (0, 0)))

    # TODO(synk): for very wide D_in (>~300) a materialized bf16-activation
    # variant would beat recompute-from-x; typical GP inputs are narrow.
    s1 = _stats_stage(xp, [(w1, b1)], tile=tile, n_tiles=n_tiles, batch=B)
    w2f, b2f = _fold_bn_into_next(s1, g1, be1, w2, b2, B)

    s2 = _stats_stage(xp, [(w1, b1), (w2f, b2f)],
                      tile=tile, n_tiles=n_tiles, batch=B)
    w3f, b3f = _fold_bn_into_next(s2, g2, be2, w3, b3, B)

    s3 = _stats_stage(xp, [(w1, b1), (w2f, b2f), (w3f, b3f)],
                      tile=tile, n_tiles=n_tiles, batch=B)
    w4f, b4f = _fold_bn_into_next(s3, g3, be3, w4, b4, B)

    out = _final_stage(xp, [(w1, b1), (w2f, b2f), (w3f, b3f), (w4f, b4f)],
                       tile=tile, n_tiles=n_tiles)
    return out[:B]


# --------------------------------------------------------------------------
# Public forward
# --------------------------------------------------------------------------
@jax.jit
def nn4_forward(x, params):
    B, d_in = x.shape
    d_out = params[-2].shape[1]
    if B <= _FUSED_MAX_ROWS and _fused_vmem_bytes(B, d_in, d_out) <= _FUSED_MAX_BYTES:
        return _fused_forward(x, params)
    return _staged_forward(x, params)


# --------------------------------------------------------------------------
# Parameter construction + plain-JAX reference
# --------------------------------------------------------------------------
def _init_linear(key, fan_in, fan_out):
    kw, kb = jax.random.split(key)
    bound = 1.0 / jnp.sqrt(fan_in)
    w = jax.random.uniform(kw, (fan_in, fan_out), jnp.float32, -bound, bound)
    b = jax.random.uniform(kb, (1, fan_out), jnp.float32, -bound, bound)
    return w, b


def make_params(d_in, d_out, key):
    keys = jax.random.split(key, 4)
    w1, b1 = _init_linear(keys[0], d_in, 128)
    w2, b2 = _init_linear(keys[1], 128, 256)
    w3, b3 = _init_linear(keys[2], 256, 64)
    w4, b4 = _init_linear(keys[3], 64, d_out)
    g1, be1 = jnp.ones((1, 128), jnp.float32), jnp.zeros((1, 128), jnp.float32)
    g2, be2 = jnp.ones((1, 256), jnp.float32), jnp.zeros((1, 256), jnp.float32)
    g3, be3 = jnp.ones((1, 64), jnp.float32), jnp.zeros((1, 64), jnp.float32)
    return (w1, b1, g1, be1, w2, b2, g2, be2, w3, b3, g3, be3, w4, b4)


def reference_forward(x, params):
    (w1, b1, g1, be1, w2, b2, g2, be2, w3, b3, g3, be3, w4, b4) = params

    def dot(a, b):
        return jnp.dot(a, b, precision=_PRECISION)

    def bn_relu(z, g, be):
        h = jnp.maximum(z, 0.0)
        m = jnp.mean(h, axis=0, keepdims=True)
        v = jnp.mean((h - m) ** 2, axis=0, keepdims=True)
        return (h - m) / jnp.sqrt(v + BN_EPS) * g + be

    h = bn_relu(dot(x, w1) + b1, g1, be1)
    h = bn_relu(dot(h, w2) + b2, g2, be2)
    h = bn_relu(dot(h, w3) + b3, g3, be3)
    return dot(h, w4) + b4


if __name__ == "__main__":
    key = jax.random.PRNGKey(0)
    k_x, k_p, k_x2 = jax.random.split(key, 3)

    B, D_IN, D_OUT = 16, 8, 4
    x = jax.random.normal(k_x, (B, D_IN), jnp.float32)
    params = make_params(D_IN, D_OUT, k_p)

    # Small batch -> fused single-kernel path.
    out = nn4_forward(x, params)
    jax.block_until_ready(out)
    ref = reference_forward(x, params)
    assert out.shape == (B, D_OUT)
    assert jnp.allclose(out, ref, atol=1e-4, rtol=1e-4), \
        float(jnp.max(jnp.abs(out - ref)))

    # Larger batch -> batch-tiled recompute path (exercises the partial last
    # tile masking and the even tile-count split).
    B2 = 1034
    x2 = jax.random.normal(k_x2, (B2, D_IN), jnp.float32)
    out2 = nn4_forward(x2, params)
    jax.block_until_ready(out2)
    ref2 = reference_forward(x2, params)
    assert out2.shape == (B2, D_OUT)
    assert jnp.allclose(out2, ref2, atol=1e-3, rtol=1e-3), \
        float(jnp.max(jnp.abs(out2 - ref2)))

    print("KERNEL_OK")
</pallas_src>

<mosaic_0001>
module attributes {stable_mosaic.version = 11 : i64} {
  func.func @_fused_kernel(%arg0: memref<16x8xf32, #tpu.memory_space<vmem>>, %arg1: memref<8x128xf32, #tpu.memory_space<vmem>>, %arg2: memref<1x128xf32, #tpu.memory_space<vmem>>, %arg3: memref<1x128xf32, #tpu.memory_space<vmem>>, %arg4: memref<1x128xf32, #tpu.memory_space<vmem>>, %arg5: memref<128x256xf32, #tpu.memory_space<vmem>>, %arg6: memref<1x256xf32, #tpu.memory_space<vmem>>, %arg7: memref<1x256xf32, #tpu.memory_space<vmem>>, %arg8: memref<1x256xf32, #tpu.memory_space<vmem>>, %arg9: memref<256x64xf32, #tpu.memory_space<vmem>>, %arg10: memref<1x64xf32, #tpu.memory_space<vmem>>, %arg11: memref<1x64xf32, #tpu.memory_space<vmem>>, %arg12: memref<1x64xf32, #tpu.memory_space<vmem>>, %arg13: memref<64x4xf32, #tpu.memory_space<vmem>>, %arg14: memref<1x4xf32, #tpu.memory_space<vmem>>, %arg15: memref<16x4xf32, #tpu.memory_space<vmem>>) attributes {dimension_semantics = [], scalar_prefetch = 0 : i64, scratch_operands = 0 : i64, tpu.core_type = #tpu.core_type<tc>} {
    %c0 = arith.constant 0 : index
    %c0_0 = arith.constant 0 : index
    %0 = vector.load %arg0[%c0, %c0_0] : memref<16x8xf32, #tpu.memory_space<vmem>>, vector<16x8xf32>
    %c0_1 = arith.constant 0 : index
    %c0_2 = arith.constant 0 : index
    %1 = vector.load %arg1[%c0_1, %c0_2] : memref<8x128xf32, #tpu.memory_space<vmem>>, vector<8x128xf32>
    %cst = arith.constant dense<0.000000e+00> : vector<16x128xf32>
    %2 = tpu.matmul %0, %1, %cst {dimension_numbers = #tpu.dot_dimension_numbers<[1], [0], [0], [1], [0, 0, 1, 1], [], []>, precision = #tpu.contract_precision<fp32>} : vector<16x8xf32>, vector<8x128xf32>, vector<16x128xf32> -> vector<16x128xf32>
    %c0_3 = arith.constant 0 : index
    %c0_4 = arith.constant 0 : index
    %3 = vector.load %arg2[%c0_3, %c0_4] : memref<1x128xf32, #tpu.memory_space<vmem>>, vector<1x128xf32>
    %4 = vector.broadcast %3 : vector<1x128xf32> to vector<16x128xf32>
    %5 = arith.addf %2, %4 : vector<16x128xf32>
    %c0_5 = arith.constant 0 : index
    %c0_6 = arith.constant 0 : index
    %6 = vector.load %arg3[%c0_5, %c0_6] : memref<1x128xf32, #tpu.memory_space<vmem>>, vector<1x128xf32>
    %c0_7 = arith.constant 0 : index
    %c0_8 = arith.constant 0 : index
    %7 = vector.load %arg4[%c0_7, %c0_8] : memref<1x128xf32, #tpu.memory_space<vmem>>, vector<1x128xf32>
    %cst_9 = arith.constant 0.000000e+00 : f32
    %8 = vector.broadcast %cst_9 : f32 to vector<16x128xf32>
    %9 = arith.maximumf %5, %8 : vector<16x128xf32>
    %cst_10 = arith.constant dense<0.000000e+00> : vector<128xf32>
    %10 = vector.multi_reduction <add>, %9, %cst_10 [0] : vector<16x128xf32> to vector<128xf32>
    %11 = vector.shape_cast %10 : vector<128xf32> to vector<1x128xf32>
    %12 = arith.mulf %9, %9 : vector<16x128xf32>
    %cst_11 = arith.constant dense<0.000000e+00> : vector<128xf32>
    %13 = vector.multi_reduction <add>, %12, %cst_11 [0] : vector<16x128xf32> to vector<128xf32>
    %14 = vector.shape_cast %13 : vector<128xf32> to vector<1x128xf32>
    %cst_12 = arith.constant 6.250000e-02 : f32
    %15 = vector.broadcast %cst_12 : f32 to vector<1x128xf32>
    %16 = arith.mulf %11, %15 : vector<1x128xf32>
    %cst_13 = arith.constant 6.250000e-02 : f32
    %17 = vector.broadcast %cst_13 : f32 to vector<1x128xf32>
    %18 = arith.mulf %14, %17 : vector<1x128xf32>
    %19 = arith.mulf %16, %16 : vector<1x128xf32>
    %20 = arith.subf %18, %19 : vector<1x128xf32>
    %cst_14 = arith.constant 9.99999974E-6 : f32
    %21 = vector.broadcast %cst_14 : f32 to vector<1x128xf32>
    %22 = arith.addf %20, %21 : vector<1x128xf32>
    %23 = math.rsqrt %22 : vector<1x128xf32>
    %24 = arith.mulf %23, %6 : vector<1x128xf32>
    %25 = arith.mulf %16, %24 : vector<1x128xf32>
    %26 = arith.subf %7, %25 : vector<1x128xf32>
    %27 = vector.broadcast %24 : vector<1x128xf32> to vector<16x128xf32>
    %28 = arith.mulf %9, %27 : vector<16x128xf32>
    %29 = vector.broadcast %26 : vector<1x128xf32> to vector<16x128xf32>
    %30 = arith.addf %28, %29 : vector<16x128xf32>
    %c0_15 = arith.constant 0 : index
    %c0_16 = arith.constant 0 : index
    %31 = vector.load %arg5[%c0_15, %c0_16] : memref<128x256xf32, #tpu.memory_space<vmem>>, vector<128x256xf32>
    %cst_17 = arith.constant dense<0.000000e+00> : vector<16x256xf32>
    %32 = tpu.matmul %30, %31, %cst_17 {dimension_numbers = #tpu.dot_dimension_numbers<[1], [0], [0], [1], [0, 0, 1, 1], [], []>, precision = #tpu.contract_precision<fp32>} : vector<16x128xf32>, vector<128x256xf32>, vector<16x256xf32> -> vector<16x256xf32>
    %c0_18 = arith.constant 0 : index
    %c0_19 = arith.constant 0 : index
    %33 = vector.load %arg6[%c0_18, %c0_19] : memref<1x256xf32, #tpu.memory_space<vmem>>, vector<1x256xf32>
    %34 = vector.broadcast %33 : vector<1x256xf32> to vector<16x256xf32>
    %35 = arith.addf %32, %34 : vector<16x256xf32>
    %c0_20 = arith.constant 0 : index
    %c0_21 = arith.constant 0 : index
    %36 = vector.load %arg7[%c0_20, %c0_21] : memref<1x256xf32, #tpu.memory_space<vmem>>, vector<1x256xf32>
    %c0_22 = arith.constant 0 : index
    %c0_23 = arith.constant 0 : index
    %37 = vector.load %arg8[%c0_22, %c0_23] : memref<1x256xf32, #tpu.memory_space<vmem>>, vector<1x256xf32>
    %cst_24 = arith.constant 0.000000e+00 : f32
    %38 = vector.broadcast %cst_24 : f32 to vector<16x256xf32>
    %39 = arith.maximumf %35, %38 : vector<16x256xf32>
    %cst_25 = arith.constant dense<0.000000e+00> : vector<256xf32>
    %40 = vector.multi_reduction <add>, %39, %cst_25 [0] : vector<16x256xf32> to vector<256xf32>
    %41 = vector.shape_cast %40 : vector<256xf32> to vector<1x256xf32>
    %42 = arith.mulf %39, %39 : vector<16x256xf32>
    %cst_26 = arith.constant dense<0.000000e+00> : vector<256xf32>
    %43 = vector.multi_reduction <add>, %42, %cst_26 [0] : vector<16x256xf32> to vector<256xf32>
    %44 = vector.shape_cast %43 : vector<256xf32> to vector<1x256xf32>
    %cst_27 = arith.constant 6.250000e-02 : f32
    %45 = vector.broadcast %cst_27 : f32 to vector<1x256xf32>
    %46 = arith.mulf %41, %45 : vector<1x256xf32>
    %cst_28 = arith.constant 6.250000e-02 : f32
    %47 = vector.broadcast %cst_28 : f32 to vector<1x256xf32>
    %48 = arith.mulf %44, %47 : vector<1x256xf32>
    %49 = arith.mulf %46, %46 : vector<1x256xf32>
    %50 = arith.subf %48, %49 : vector<1x256xf32>
    %cst_29 = arith.constant 9.99999974E-6 : f32
    %51 = vector.broadcast %cst_29 : f32 to vector<1x256xf32>
    %52 = arith.addf %50, %51 : vector<1x256xf32>
    %53 = math.rsqrt %52 : vector<1x256xf32>
    %54 = arith.mulf %53, %36 : vector<1x256xf32>
    %55 = arith.mulf %46, %54 : vector<1x256xf32>
    %56 = arith.subf %37, %55 : vector<1x256xf32>
    %57 = vector.broadcast %54 : vector<1x256xf32> to vector<16x256xf32>
    %58 = arith.mulf %39, %57 : vector<16x256xf32>
    %59 = vector.broadcast %56 : vector<1x256xf32> to vector<16x256xf32>
    %60 = arith.addf %58, %59 : vector<16x256xf32>
    %c0_30 = arith.constant 0 : index
    %c0_31 = arith.constant 0 : index
    %61 = vector.load %arg9[%c0_30, %c0_31] : memref<256x64xf32, #tpu.memory_space<vmem>>, vector<256x64xf32>
    %cst_32 = arith.constant dense<0.000000e+00> : vector<16x64xf32>
    %62 = tpu.matmul %60, %61, %cst_32 {dimension_numbers = #tpu.dot_dimension_numbers<[1], [0], [0], [1], [0, 0, 1, 1], [], []>, precision = #tpu.contract_precision<fp32>} : vector<16x256xf32>, vector<256x64xf32>, vector<16x64xf32> -> vector<16x64xf32>
    %c0_33 = arith.constant 0 : index
    %c0_34 = arith.constant 0 : index
    %63 = vector.load %arg10[%c0_33, %c0_34] : memref<1x64xf32, #tpu.memory_space<vmem>>, vector<1x64xf32>
    %64 = vector.broadcast %63 : vector<1x64xf32> to vector<16x64xf32>
    %65 = arith.addf %62, %64 : vector<16x64xf32>
    %c0_35 = arith.constant 0 : index
    %c0_36 = arith.constant 0 : index
    %66 = vector.load %arg11[%c0_35, %c0_36] : memref<1x64xf32, #tpu.memory_space<vmem>>, vector<1x64xf32>
    %c0_37 = arith.constant 0 : index
    %c0_38 = arith.constant 0 : index
    %67 = vector.load %arg12[%c0_37, %c0_38] : memref<1x64xf32, #tpu.memory_space<vmem>>, vector<1x64xf32>
    %cst_39 = arith.constant 0.000000e+00 : f32
    %68 = vector.broadcast %cst_39 : f32 to vector<16x64xf32>
    %69 = arith.maximumf %65, %68 : vector<16x64xf32>
    %cst_40 = arith.constant dense<0.000000e+00> : vector<64xf32>
    %70 = vector.multi_reduction <add>, %69, %cst_40 [0] : vector<16x64xf32> to vector<64xf32>
    %71 = vector.shape_cast %70 : vector<64xf32> to vector<1x64xf32>
    %72 = arith.mulf %69, %69 : vector<16x64xf32>
    %cst_41 = arith.constant dense<0.000000e+00> : vector<64xf32>
    %73 = vector.multi_reduction <add>, %72, %cst_41 [0] : vector<16x64xf32> to vector<64xf32>
    %74 = vector.shape_cast %73 : vector<64xf32> to vector<1x64xf32>
    %cst_42 = arith.constant 6.250000e-02 : f32
    %75 = vector.broadcast %cst_42 : f32 to vector<1x64xf32>
    %76 = arith.mulf %71, %75 : vector<1x64xf32>
    %cst_43 = arith.constant 6.250000e-02 : f32
    %77 = vector.broadcast %cst_43 : f32 to vector<1x64xf32>
    %78 = arith.mulf %74, %77 : vector<1x64xf32>
    %79 = arith.mulf %76, %76 : vector<1x64xf32>
    %80 = arith.subf %78, %79 : vector<1x64xf32>
    %cst_44 = arith.constant 9.99999974E-6 : f32
    %81 = vector.broadcast %cst_44 : f32 to vector<1x64xf32>
    %82 = arith.addf %80, %81 : vector<1x64xf32>
    %83 = math.rsqrt %82 : vector<1x64xf32>
    %84 = arith.mulf %83, %66 : vector<1x64xf32>
    %85 = arith.mulf %76, %84 : vector<1x64xf32>
    %86 = arith.subf %67, %85 : vector<1x64xf32>
    %87 = vector.broadcast %84 : vector<1x64xf32> to vector<16x64xf32>
    %88 = arith.mulf %69, %87 : vector<16x64xf32>
    %89 = vector.broadcast %86 : vector<1x64xf32> to vector<16x64xf32>
    %90 = arith.addf %88, %89 : vector<16x64xf32>
    %c0_45 = arith.constant 0 : index
    %c0_46 = arith.constant 0 : index
    %91 = vector.load %arg13[%c0_45, %c0_46] : memref<64x4xf32, #tpu.memory_space<vmem>>, vector<64x4xf32>
    %cst_47 = arith.constant dense<0.000000e+00> : vector<16x4xf32>
    %92 = tpu.matmul %90, %91, %cst_47 {dimension_numbers = #tpu.dot_dimension_numbers<[1], [0], [0], [1], [0, 0, 1, 1], [], []>, precision = #tpu.contract_precision<fp32>} : vector<16x64xf32>, vector<64x4xf32>, vector<16x4xf32> -> vector<16x4xf32>
    %c0_48 = arith.constant 0 : index
    %c0_49 = arith.constant 0 : index
    %93 = vector.load %arg14[%c0_48, %c0_49] : memref<1x4xf32, #tpu.memory_space<vmem>>, vector<1x4xf32>
    %94 = vector.broadcast %93 : vector<1x4xf32> to vector<16x4xf32>
    %95 = arith.addf %92, %94 : vector<16x4xf32>
    %c0_50 = arith.constant 0 : index
    %c0_51 = arith.constant 0 : index
    %96 = vector.load %arg15[%c0_50, %c0_51] : memref<16x4xf32, #tpu.memory_space<vmem>>, vector<16x4xf32>
    tpu.vector_store %arg15[%c0_50, %c0_51], %95 {strides = array<i32>} : memref<16x4xf32, #tpu.memory_space<vmem>>, vector<16x4xf32>,
    return
  }
}

</mosaic_0001>

<llo_original>
// kernel: nn4_forward.1
$region0: #{nn4_forward.1}
  #allocation0 [shape = 'u32[]', space=smem, size = 0x4, offset = 0x4, fixed_abs, tag = 'smem constant byte address 0x4 - core index']
  #allocation1 [shape = 'u32[144,128]{1,0:T(1,128)}', space=vmem, size = 0x12000, scoped, tag = 'internal scratch']
  %s0 = inlined_call_operand.vmem [shape: f32[16,8], index: 0, kind: input, shape index: {}]
  %s1 = inlined_call_operand.vmem [shape: f32[8,128], index: 1, kind: input, shape index: {}]
  %s2 = inlined_call_operand.vmem [shape: f32[1,128], index: 2, kind: input, shape index: {}]
  %s3 = inlined_call_operand.vmem [shape: f32[1,128], index: 3, kind: input, shape index: {}]
  %s4 = inlined_call_operand.vmem [shape: f32[1,128], index: 4, kind: input, shape index: {}]
  %s5 = inlined_call_operand.vmem [shape: f32[128,256], index: 5, kind: input, shape index: {}]
  %s6 = inlined_call_operand.vmem [shape: f32[1,256], index: 6, kind: input, shape index: {}]
  %s7 = inlined_call_operand.vmem [shape: f32[1,256], index: 7, kind: input, shape index: {}]
  %s8 = inlined_call_operand.vmem [shape: f32[1,256], index: 8, kind: input, shape index: {}]
  %s9 = inlined_call_operand.vmem [shape: f32[256,64], index: 9, kind: input, shape index: {}]
  %s10 = inlined_call_operand.vmem [shape: f32[1,64], index: 10, kind: input, shape index: {}]
  %s11 = inlined_call_operand.vmem [shape: f32[1,64], index: 11, kind: input, shape index: {}]
  %s12 = inlined_call_operand.vmem [shape: f32[1,64], index: 12, kind: input, shape index: {}]
  %s13 = inlined_call_operand.vmem [shape: f32[64,4], index: 13, kind: input, shape index: {}]
  %s14 = inlined_call_operand.vmem [shape: f32[1,4], index: 14, kind: input, shape index: {}]
  %s15 = inlined_call_operand.vmem [shape: f32[16,4], index: 15, kind: output, shape index: {}]
  %s16 = sld [smem:[#allocation0]]
  $region70: #{nn4_forward.1} parent=0
    _
  %s18 = ssub.s32 1, %s16
  %s19 = scalar_select 0, %s18, %s16
  // Predicated region
  $region2: #{nn4_forward.1} parent=0 // pred_check
    _
  $region3: #{nn4_forward.1} parent=0 // pred_check_branch
    %21 = sbr.rel (0) target = $region5
  $region4: #{nn4_forward.1} parent=0 // pred_region
    _
  $region5: #{nn4_forward.1} parent=0 // pred_fallthru
    _
  // Predicated region
  $region6: #{nn4_forward.1} parent=0 // pred_check
    _
  $region7: #{nn4_forward.1} parent=0 // pred_check_branch
    %23 = sbr.rel (0) target = $region9
  $region8: #{nn4_forward.1} parent=0 // pred_region
    _
  $region9: #{nn4_forward.1} parent=0 // pred_fallthru
    _
  // Predicated region
  $region10: #{nn4_forward.1} parent=0 // pred_check
    _
  $region11: #{nn4_forward.1} parent=0 // pred_check_branch
    %25 = sbr.rel (0) target = $region13
  $region12: #{nn4_forward.1} parent=0 // pred_region
    _
  $region13: #{nn4_forward.1} parent=0 // pred_fallthru
    _
  // Predicated region
  $region14: #{nn4_forward.1} parent=0 // pred_check
    _
  $region15: #{nn4_forward.1} parent=0 // pred_check_branch
    %27 = sbr.rel (0) target = $region17
  $region16: #{nn4_forward.1} parent=0 // pred_region
    _
  $region17: #{nn4_forward.1} parent=0 // pred_fallthru
    _
  // Predicated region
  $region18: #{nn4_forward.1} parent=0 // pred_check
    _
  $region19: #{nn4_forward.1} parent=0 // pred_check_branch
    %29 = sbr.rel (0) target = $region21
  $region20: #{nn4_forward.1} parent=0 // pred_region
    _
  $region21: #{nn4_forward.1} parent=0 // pred_fallthru
    _
  // Predicated region
  $region22: #{nn4_forward.1} parent=0 // pred_check
    _
  $region23: #{nn4_forward.1} parent=0 // pred_check_branch
    %31 = sbr.rel (0) target = $region25
  $region24: #{nn4_forward.1} parent=0 // pred_region
    _
  $region25: #{nn4_forward.1} parent=0 // pred_fallthru
    _
  // Predicated region
  $region26: #{nn4_forward.1} parent=0 // pred_check
    _
  $region27: #{nn4_forward.1} parent=0 // pred_check_branch
    %33 = sbr.rel (0) target = $region29
  $region28: #{nn4_forward.1} parent=0 // pred_region
    _
  $region29: #{nn4_forward.1} parent=0 // pred_fallthru
    _
  // Predicated region
  $region30: #{nn4_forward.1} parent=0 // pred_check
    _
  $region31: #{nn4_forward.1} parent=0 // pred_check_branch
    %35 = sbr.rel (0) target = $region33
  $region32: #{nn4_forward.1} parent=0 // pred_region
    _
  $region33: #{nn4_forward.1} parent=0 // pred_fallthru
    _
  // Predicated region
  $region34: #{nn4_forward.1} parent=0 // pred_check
    _
  $region35: #{nn4_forward.1} parent=0 // pred_check_branch
    %37 = sbr.rel (0) target = $region37
  $region36: #{nn4_forward.1} parent=0 // pred_region
    _
  $region37: #{nn4_forward.1} parent=0 // pred_fallthru
    _
  // Predicated region
  $region38: #{nn4_forward.1} parent=0 // pred_check
    _
  $region39: #{nn4_forward.1} parent=0 // pred_check_branch
    %39 = sbr.rel (0) target = $region41
  $region40: #{nn4_forward.1} parent=0 // pred_region
    _
  $region41: #{nn4_forward.1} parent=0 // pred_fallthru
    _
  // Predicated region
  $region42: #{nn4_forward.1} parent=0 // pred_check
    _
  $region43: #{nn4_forward.1} parent=0 // pred_check_branch
    %41 = sbr.rel (0) target = $region45
  $region44: #{nn4_forward.1} parent=0 // pred_region
    _
  $region45: #{nn4_forward.1} parent=0 // pred_fallthru
    _
  // Predicated region
  $region46: #{nn4_forward.1} parent=0 // pred_check
    _
  $region47: #{nn4_forward.1} parent=0 // pred_check_branch
    %43 = sbr.rel (0) target = $region49
  $region48: #{nn4_forward.1} parent=0 // pred_region
    _
  $region49: #{nn4_forward.1} parent=0 // pred_fallthru
    _
  // Predicated region
  $region50: #{nn4_forward.1} parent=0 // pred_check
    _
  $region51: #{nn4_forward.1} parent=0 // pred_check_branch
    %45 = sbr.rel (0) target = $region53
  $region52: #{nn4_forward.1} parent=0 // pred_region
    _
  $region53: #{nn4_forward.1} parent=0 // pred_fallthru
    _
  // Predicated region
  $region54: #{nn4_forward.1} parent=0 // pred_check
    _
  $region55: #{nn4_forward.1} parent=0 // pred_check_branch
    %47 = sbr.rel (0) target = $region57
  $region56: #{nn4_forward.1} parent=0 // pred_region
    _
  $region57: #{nn4_forward.1} parent=0 // pred_fallthru
    _
  // Predicated region
  $region58: #{nn4_forward.1} parent=0 // pred_check
    _
  $region59: #{nn4_forward.1} parent=0 // pred_check_branch
    %49 = sbr.rel (0) target = $region61
  $region60: #{nn4_forward.1} parent=0 // pred_region
    _
  $region61: #{nn4_forward.1} parent=0 // pred_fallthru
    _
  %v50 = vld [vmem:[%s0] sm:$0xff]
  %v51 = vld [vmem:[%s0 + $0x8] sm:$0xff]
  %v52 = vld [vmem:[%s1] sm:$0xff]
  %v53 = vld [vmem:[%s2] sm:$0x1]
  %v55 = vlaneseq
  %v56 = vshrl.u32 %v55, 7
  %v57 = vsub.s32 0, %v56
  %v58 = vrot.slane %v53, %v57
  %vm60 = vcmask 64512
  %v62 = vsel %vm60, %v50, 0
  %v65 = vsel %vm60, %v51, 0
  %67 = vmatprep.subr.mxu0 0.0
  %68 = vmatpush1.msra.mxu0 0.0
  %69 = vmatprep.subr.mxu0 0.0
  %70 = vmatpush1.msra.mxu0 0.0
  %71 = vmatprep.subr.mxu0 0.0
  %72 = vmatpush1.msra.mxu0 0.0
  %73 = vmatprep.subr.mxu0 0.0
  %74 = vmatpush1.msra.mxu0 0.0
  %75 = vmatprep.subr.mxu0 0.0
  %76 = vmatpush1.msra.mxu0 0.0
  %77 = vmatprep.subr.mxu0 0.0
  %78 = vmatpush1.msra.mxu0 0.0
  %79 = vmatprep.subr.mxu0 0.0
  %80 = vmatpush1.msra.mxu0 0.0
  %81 = vmatprep.subr.mxu0 0.0
  %82 = vmatpush1.msra.mxu0 0.0
  %83 = vmatprep.subr.mxu0 0.0
  %84 = vmatpush1.msra.mxu0 0.0
  %85 = vmatprep.subr.mxu0 0.0
  %86 = vmatpush1.msra.mxu0 0.0
  %87 = vmatprep.subr.mxu0 0.0
  %88 = vmatpush1.msra.mxu0 0.0
  %89 = vmatprep.subr.mxu0 0.0
  %90 = vmatpush1.msra.mxu0 0.0
  %91 = vmatprep.subr.mxu0 0.0
  %92 = vmatpush1.msra.mxu0 0.0
  %93 = vmatprep.subr.mxu0 0.0
  %94 = vmatpush1.msra.mxu0 0.0
  %95 = vmatprep.subr.mxu0 0.0
  %96 = vmatpush1.msra.mxu0 0.0
  %97 = vmatprep.subr.mxu0 0.0
  %v98 = vand.u32 %v52, 4294901760
  %99 = vmatpush1.msra.mxu0 %v98
  %100 = vmatprep.subr.mxu0 0.0
  %101 = vmatpush2.msra.mxu0 0.0
  %102 = vmatprep.subr.mxu0 0.0
  %103 = vmatpush2.msra.mxu0 0.0
  %104 = vmatprep.subr.mxu0 0.0
  %105 = vmatpush2.msra.mxu0 0.0
  %106 = vmatprep.subr.mxu0 0.0
  %107 = vmatpush2.msra.mxu0 0.0
  %108 = vmatprep.subr.mxu0 0.0
  %109 = vmatpush2.msra.mxu0 0.0
  %110 = vmatprep.subr.mxu0 0.0
  %111 = vmatpush2.msra.mxu0 0.0
  %112 = vmatprep.subr.mxu0 0.0
  %113 = vmatpush2.msra.mxu0 0.0
  %114 = vmatprep.subr.mxu0 0.0
  %115 = vmatpush2.msra.mxu0 0.0
  %116 = vmatprep.subr.mxu0 0.0
  %117 = vmatpush2.msra.mxu0 0.0
  %118 = vmatprep.subr.mxu0 0.0
  %119 = vmatpush2.msra.mxu0 0.0
  %120 = vmatprep.subr.mxu0 0.0
  %121 = vmatpush2.msra.mxu0 0.0
  %122 = vmatprep.subr.mxu0 0.0
  %123 = vmatpush2.msra.mxu0 0.0
  %124 = vmatprep.subr.mxu0 0.0
  %125 = vmatpush2.msra.mxu0 0.0
  %126 = vmatprep.subr.mxu0 0.0
  %127 = vmatpush2.msra.mxu0 0.0
  %128 = vmatprep.subr.mxu0 0.0
  %129 = vmatpush2.msra.mxu0 0.0
  %130 = vmatprep.subr.mxu0 0.0
  %131 = vmatpush2.msra.mxu0 0.0
  %132 = vmatprep.mubr.f32.mxu0 0.0
  %v133 = vand.u32 %v62, 4294901760
  %v134 = vsub.f32 %v62, %v133
  %v135 = vand.u32 %v134, 4294901760
  %v136 = vsub.f32 %v134, %v135
  %v137 = vand.u32 %v136, 4294901760
  %138 = vmatmul.mubr.f32.gmra.mxu0 %v137
  %v139 = vpop.f32.mrf.mxu0
  %v140 = vadd.f32 %v58, %v139
  %v141 = vpop.f32.mrf.mxu0
  %142 = vmatprep.mubr.f32.mxu0 0.0
  %v143 = vand.u32 %v65, 4294901760
  %v144 = vsub.f32 %v65, %v143
  %v145 = vand.u32 %v144, 4294901760
  %v146 = vsub.f32 %v144, %v145
  %v147 = vand.u32 %v146, 4294901760
  %148 = vmatmul.mubr.f32.gmra.mxu0 %v147
  %v149 = vpop.f32.mrf.mxu0
  %v150 = vadd.f32 %v58, %v149
  %v151 = vpop.f32.mrf.mxu0
  %152 = vdwg.mxu0
  %153 = vmatprep.subr.mxu0 0.0
  %154 = vmatpush1.msra.mxu0 0.0
  %155 = vmatprep.subr.mxu0 0.0
  %156 = vmatpush1.msra.mxu0 0.0
  %157 = vmatprep.subr.mxu0 0.0
  %158 = vmatpush1.msra.mxu0 0.0
  %159 = vmatprep.subr.mxu0 0.0
  %160 = vmatpush1.msra.mxu0 0.0
  %161 = vmatprep.subr.mxu0 0.0
  %162 = vmatpush1.msra.mxu0 0.0
  %163 = vmatprep.subr.mxu0 0.0
  %164 = vmatpush1.msra.mxu0 0.0
  %165 = vmatprep.subr.mxu0 0.0
  %166 = vmatpush1.msra.mxu0 0.0
  %167 = vmatprep.subr.mxu0 0.0
  %168 = vmatpush1.msra.mxu0 0.0
  %169 = vmatprep.subr.mxu0 0.0
  %170 = vmatpush1.msra.mxu0 0.0
  %171 = vmatprep.subr.mxu0 0.0
  %172 = vmatpush1.msra.mxu0 0.0
  %173 = vmatprep.subr.mxu0 0.0
  %174 = vmatpush1.msra.mxu0 0.0
  %175 = vmatprep.subr.mxu0 0.0
  %176 = vmatpush1.msra.mxu0 0.0
  %177 = vmatprep.subr.mxu0 0.0
  %178 = vmatpush1.msra.mxu0 0.0
  %179 = vmatprep.subr.mxu0 0.0
  %180 = vmatpush1.msra.mxu0 0.0
  %181 = vmatprep.subr.mxu0 0.0
  %182 = vmatpush1.msra.mxu0 0.0
  %183 = vmatprep.subr.mxu0 0.0
  %v184 = vand.u32 %v52, 4294901760
  %v185 = vsub.f32 %v52, %v184
  %v186 = vand.u32 %v185, 4294901760
  %v187 = vsub.f32 %v185, %v186
  %v188 = vand.u32 %v187, 4294901760
  %189 = vmatpush1.msra.mxu0 %v188
  %190 = vmatprep.subr.mxu0 0.0
  %191 = vmatpush2.msra.mxu0 0.0
  %192 = vmatprep.subr.mxu0 0.0
  %193 = vmatpush2.msra.mxu0 0.0
  %194 = vmatprep.subr.mxu0 0.0
  %195 = vmatpush2.msra.mxu0 0.0
  %196 = vmatprep.subr.mxu0 0.0
  %197 = vmatpush2.msra.mxu0 0.0
  %198 = vmatprep.subr.mxu0 0.0
  %199 = vmatpush2.msra.mxu0 0.0
  %200 = vmatprep.subr.mxu0 0.0
  %201 = vmatpush2.msra.mxu0 0.0
  %202 = vmatprep.subr.mxu0 0.0
  %203 = vmatpush2.msra.mxu0 0.0
  %204 = vmatprep.subr.mxu0 0.0
  %205 = vmatpush2.msra.mxu0 0.0
  %206 = vmatprep.subr.mxu0 0.0
  %207 = vmatpush2.msra.mxu0 0.0
  %208 = vmatprep.subr.mxu0 0.0
  %209 = vmatpush2.msra.mxu0 0.0
  %210 = vmatprep.subr.mxu0 0.0
  %211 = vmatpush2.msra.mxu0 0.0
  %212 = vmatprep.subr.mxu0 0.0
  %213 = vmatpush2.msra.mxu0 0.0
  %214 = vmatprep.subr.mxu0 0.0
  %215 = vmatpush2.msra.mxu0 0.0
  %216 = vmatprep.subr.mxu0 0.0
  %217 = vmatpush2.msra.mxu0 0.0
  %218 = vmatprep.subr.mxu0 0.0
  %219 = vmatpush2.msra.mxu0 0.0
  %220 = vmatprep.subr.mxu0 0.0
  %221 = vmatpush2.msra.mxu0 0.0
  %222 = vmatprep.mubr.f32.mxu0 0.0
  %v223 = vand.u32 %v62, 4294901760
  %224 = vmatmul.mubr.f32.gmra.mxu0 %v223
  %v225 = vpop.f32.mrf.mxu0
  %v226 = vadd.f32 %v140, %v225
  %v227 = vpop.f32.mrf.mxu0
  %228 = vmatprep.mubr.f32.mxu0 0.0
  %v229 = vand.u32 %v65, 4294901760
  %230 = vmatmul.mubr.f32.gmra.mxu0 %v229
  %v231 = vpop.f32.mrf.mxu0
  %v232 = vadd.f32 %v150, %v231
  %v233 = vpop.f32.mrf.mxu0
  %234 = vdwg.mxu0
  %235 = vmatprep.subr.mxu0 0.0
  %236 = vmatpush1.msra.mxu0 0.0
  %237 = vmatprep.subr.mxu0 0.0
  %238 = vmatpush1.msra.mxu0 0.0
  %239 = vmatprep.subr.mxu0 0.0
  %240 = vmatpush1.msra.mxu0 0.0
  %241 = vmatprep.subr.mxu0 0.0
  %242 = vmatpush1.msra.mxu0 0.0
  %243 = vmatprep.subr.mxu0 0.0
  %244 = vmatpush1.msra.mxu0 0.0
  %245 = vmatprep.subr.mxu0 0.0
  %246 = vmatpush1.msra.mxu0 0.0
  %247 = vmatprep.subr.mxu0 0.0
  %248 = vmatpush1.msra.mxu0 0.0
  %249 = vmatprep.subr.mxu0 0.0
  %250 = vmatpush1.msra.mxu0 0.0
  %251 = vmatprep.subr.mxu0 0.0
  %252 = vmatpush1.msra.mxu0 0.0
  %253 = vmatprep.subr.mxu0 0.0
  %254 = vmatpush1.msra.mxu0 0.0
  %255 = vmatprep.subr.mxu0 0.0
  %256 = vmatpush1.msra.mxu0 0.0
  %257 = vmatprep.subr.mxu0 0.0
  %258 = vmatpush1.msra.mxu0 0.0
  %259 = vmatprep.subr.mxu0 0.0
  %260 = vmatpush1.msra.mxu0 0.0
  %261 = vmatprep.subr.mxu0 0.0
  %262 = vmatpush1.msra.mxu0 0.0
  %263 = vmatprep.subr.mxu0 0.0
  %264 = vmatpush1.msra.mxu0 0.0
  %265 = vmatprep.subr.mxu0 0.0
  %v266 = vand.u32 %v52, 4294901760
  %v267 = vsub.f32 %v52, %v266
  %268 = vmatpush1.msra.mxu0 %v267
  %269 = vmatprep.subr.mxu0 0.0
  %270 = vmatpush2.msra.mxu0 0.0
  %271 = vmatprep.subr.mxu0 0.0
  %272 = vmatpush2.msra.mxu0 0.0
  %273 = vmatprep.subr.mxu0 0.0
  %274 = vmatpush2.msra.mxu0 0.0
  %275 = vmatprep.subr.mxu0 0.0
  %276 = vmatpush2.msra.mxu0 0.0
  %277 = vmatprep.subr.mxu0 0.0
  %278 = vmatpush2.msra.mxu0 0.0
  %279 = vmatprep.subr.mxu0 0.0
  %280 = vmatpush2.msra.mxu0 0.0
  %281 = vmatprep.subr.mxu0 0.0
  %282 = vmatpush2.msra.mxu0 0.0
  %283 = vmatprep.subr.mxu0 0.0
  %284 = vmatpush2.msra.mxu0 0.0
  %285 = vmatprep.subr.mxu0 0.0
  %286 = vmatpush2.msra.mxu0 0.0
  %287 = vmatprep.subr.mxu0 0.0
  %288 = vmatpush2.msra.mxu0 0.0
  %289 = vmatprep.subr.mxu0 0.0
  %290 = vmatpush2.msra.mxu0 0.0
  %291 = vmatprep.subr.mxu0 0.0
  %292 = vmatpush2.msra.mxu0 0.0
  %293 = vmatprep.subr.mxu0 0.0
  %294 = vmatpush2.msra.mxu0 0.0
  %295 = vmatprep.subr.mxu0 0.0
  %296 = vmatpush2.msra.mxu0 0.0
  %297 = vmatprep.subr.mxu0 0.0
  %298 = vmatpush2.msra.mxu0 0.0
  %299 = vmatprep.subr.mxu0 0.0
  %300 = vmatpush2.msra.mxu0 0.0
  %301 = vmatprep.mubr.f32.mxu0 0.0
  %v302 = vand.u32 %v62, 4294901760
  %v303 = vsub.f32 %v62, %v302
  %304 = vmatmul.mubr.f32.gmra.mxu0 %v303
  %v305 = vpop.f32.mrf.mxu0
  %v306 = vadd.f32 %v226, %v305
  %v307 = vpop.f32.mrf.mxu0
  %308 = vmatprep.mubr.f32.mxu0 0.0
  %v309 = vand.u32 %v65, 4294901760
  %v310 = vsub.f32 %v65, %v309
  %311 = vmatmul.mubr.f32.gmra.mxu0 %v310
  %v312 = vpop.f32.mrf.mxu0
  %v313 = vadd.f32 %v232, %v312
  %v314 = vpop.f32.mrf.mxu0
  %315 = vdwg.mxu0
  %316 = vmatprep.subr.mxu0 0.0
  %317 = vmatpush1.msra.mxu0 0.0
  %318 = vmatprep.subr.mxu0 0.0
  %319 = vmatpush1.msra.mxu0 0.0
  %320 = vmatprep.subr.mxu0 0.0
  %321 = vmatpush1.msra.mxu0 0.0
  %322 = vmatprep.subr.mxu0 0.0
  %323 = vmatpush1.msra.mxu0 0.0
  %324 = vmatprep.subr.mxu0 0.0
  %325 = vmatpush1.msra.mxu0 0.0
  %326 = vmatprep.subr.mxu0 0.0
  %327 = vmatpush1.msra.mxu0 0.0
  %328 = vmatprep.subr.mxu0 0.0
  %329 = vmatpush1.msra.mxu0 0.0
  %330 = vmatprep.subr.mxu0 0.0
  %331 = vmatpush1.msra.mxu0 0.0
  %332 = vmatprep.subr.mxu0 0.0
  %333 = vmatpush1.msra.mxu0 0.0
  %334 = vmatprep.subr.mxu0 0.0
  %335 = vmatpush1.msra.mxu0 0.0
  %336 = vmatprep.subr.mxu0 0.0
  %337 = vmatpush1.msra.mxu0 0.0
  %338 = vmatprep.subr.mxu0 0.0
  %339 = vmatpush1.msra.mxu0 0.0
  %340 = vmatprep.subr.mxu0 0.0
  %341 = vmatpush1.msra.mxu0 0.0
  %342 = vmatprep.subr.mxu0 0.0
  %343 = vmatpush1.msra.mxu0 0.0
  %344 = vmatprep.subr.mxu0 0.0
  %345 = vmatpush1.msra.mxu0 0.0
  %346 = vmatprep.subr.mxu0 0.0
  %v347 = vand.u32 %v52, 4294901760
  %348 = vmatpush1.msra.mxu0 %v347
  %349 = vmatprep.subr.mxu0 0.0
  %350 = vmatpush2.msra.mxu0 0.0
  %351 = vmatprep.subr.mxu0 0.0
  %352 = vmatpush2.msra.mxu0 0.0
  %353 = vmatprep.subr.mxu0 0.0
  %354 = vmatpush2.msra.mxu0 0.0
  %355 = vmatprep.subr.mxu0 0.0
  %356 = vmatpush2.msra.mxu0 0.0
  %357 = vmatprep.subr.mxu0 0.0
  %358 = vmatpush2.msra.mxu0 0.0
  %359 = vmatprep.subr.mxu0 0.0
  %360 = vmatpush2.msra.mxu0 0.0
  %361 = vmatprep.subr.mxu0 0.0
  %362 = vmatpush2.msra.mxu0 0.0
  %363 = vmatprep.subr.mxu0 0.0
  %364 = vmatpush2.msra.mxu0 0.0
  %365 = vmatprep.subr.mxu0 0.0
  %366 = vmatpush2.msra.mxu0 0.0
  %367 = vmatprep.subr.mxu0 0.0
  %368 = vmatpush2.msra.mxu0 0.0
  %369 = vmatprep.subr.mxu0 0.0
  %370 = vmatpush2.msra.mxu0 0.0
  %371 = vmatprep.subr.mxu0 0.0
  %372 = vmatpush2.msra.mxu0 0.0
  %373 = vmatprep.subr.mxu0 0.0
  %374 = vmatpush2.msra.mxu0 0.0
  %375 = vmatprep.subr.mxu0 0.0
  %376 = vmatpush2.msra.mxu0 0.0
  %377 = vmatprep.subr.mxu0 0.0
  %378 = vmatpush2.msra.mxu0 0.0
  %379 = vmatprep.subr.mxu0 0.0
  %380 = vmatpush2.msra.mxu0 0.0
  %381 = vmatprep.mubr.f32.mxu0 0.0
  %v382 = vand.u32 %v62, 4294901760
  %v383 = vsub.f32 %v62, %v382
  %v384 = vand.u32 %v383, 4294901760
  %385 = vmatmul.mubr.f32.gmra.mxu0 %v384
  %v386 = vpop.f32.mrf.mxu0
  %v387 = vadd.f32 %v306, %v386
  %v388 = vpop.f32.mrf.mxu0
  %389 = vmatprep.mubr.f32.mxu0 0.0
  %v390 = vand.u32 %v65, 4294901760
  %v391 = vsub.f32 %v65, %v390
  %v392 = vand.u32 %v391, 4294901760
  %393 = vmatmul.mubr.f32.gmra.mxu0 %v392
  %v394 = vpop.f32.mrf.mxu0
  %v395 = vadd.f32 %v313, %v394
  %v396 = vpop.f32.mrf.mxu0
  %397 = vdwg.mxu0
  %398 = vmatprep.subr.mxu0 0.0
  %399 = vmatpush1.msra.mxu0 0.0
  %400 = vmatprep.subr.mxu0 0.0
  %401 = vmatpush1.msra.mxu0 0.0
  %402 = vmatprep.subr.mxu0 0.0
  %403 = vmatpush1.msra.mxu0 0.0
  %404 = vmatprep.subr.mxu0 0.0
  %405 = vmatpush1.msra.mxu0 0.0
  %406 = vmatprep.subr.mxu0 0.0
  %407 = vmatpush1.msra.mxu0 0.0
  %408 = vmatprep.subr.mxu0 0.0
  %409 = vmatpush1.msra.mxu0 0.0
  %410 = vmatprep.subr.mxu0 0.0
  %411 = vmatpush1.msra.mxu0 0.0
  %412 = vmatprep.subr.mxu0 0.0
  %413 = vmatpush1.msra.mxu0 0.0
  %414 = vmatprep.subr.mxu0 0.0
  %415 = vmatpush1.msra.mxu0 0.0
  %416 = vmatprep.subr.mxu0 0.0
  %417 = vmatpush1.msra.mxu0 0.0
  %418 = vmatprep.subr.mxu0 0.0
  %419 = vmatpush1.msra.mxu0 0.0
  %420 = vmatprep.subr.mxu0 0.0
  %421 = vmatpush1.msra.mxu0 0.0
  %422 = vmatprep.subr.mxu0 0.0
  %423 = vmatpush1.msra.mxu0 0.0
  %424 = vmatprep.subr.mxu0 0.0
  %425 = vmatpush1.msra.mxu0 0.0
  %426 = vmatprep.subr.mxu0 0.0
  %427 = vmatpush1.msra.mxu0 0.0
  %428 = vmatprep.subr.mxu0 0.0
  %v429 = vand.u32 %v52, 4294901760
  %v430 = vsub.f32 %v52, %v429
  %v431 = vand.u32 %v430, 4294901760
  %432 = vmatpush1.msra.mxu0 %v431
  %433 = vmatprep.subr.mxu0 0.0
  %434 = vmatpush2.msra.mxu0 0.0
  %435 = vmatprep.subr.mxu0 0.0
  %436 = vmatpush2.msra.mxu0 0.0
  %437 = vmatprep.subr.mxu0 0.0
  %438 = vmatpush2.msra.mxu0 0.0
  %439 = vmatprep.subr.mxu0 0.0
  %440 = vmatpush2.msra.mxu0 0.0
  %441 = vmatprep.subr.mxu0 0.0
  %442 = vmatpush2.msra.mxu0 0.0
  %443 = vmatprep.subr.mxu0 0.0
  %444 = vmatpush2.msra.mxu0 0.0
  %445 = vmatprep.subr.mxu0 0.0
  %446 = vmatpush2.msra.mxu0 0.0
  %447 = vmatprep.subr.mxu0 0.0
  %448 = vmatpush2.msra.mxu0 0.0
  %449 = vmatprep.subr.mxu0 0.0
  %450 = vmatpush2.msra.mxu0 0.0
  %451 = vmatprep.subr.mxu0 0.0
  %452 = vmatpush2.msra.mxu0 0.0
  %453 = vmatprep.subr.mxu0 0.0
  %454 = vmatpush2.msra.mxu0 0.0
  %455 = vmatprep.subr.mxu0 0.0
  %456 = vmatpush2.msra.mxu0 0.0
  %457 = vmatprep.subr.mxu0 0.0
  %458 = vmatpush2.msra.mxu0 0.0
  %459 = vmatprep.subr.mxu0 0.0
  %460 = vmatpush2.msra.mxu0 0.0
  %461 = vmatprep.subr.mxu0 0.0
  %462 = vmatpush2.msra.mxu0 0.0
  %463 = vmatprep.subr.mxu0 0.0
  %464 = vmatpush2.msra.mxu0 0.0
  %465 = vmatprep.mubr.f32.mxu0 0.0
  %v466 = vand.u32 %v62, 4294901760
  %467 = vmatmul.mubr.f32.gmra.mxu0 %v466
  %v468 = vpop.f32.mrf.mxu0
  %v469 = vadd.f32 %v387, %v468
  %v470 = vpop.f32.mrf.mxu0
  %471 = vmatprep.mubr.f32.mxu0 0.0
  %v472 = vand.u32 %v65, 4294901760
  %473 = vmatmul.mubr.f32.gmra.mxu0 %v472
  %v474 = vpop.f32.mrf.mxu0
  %v475 = vadd.f32 %v395, %v474
  %v476 = vpop.f32.mrf.mxu0
  %477 = vdwg.mxu0
  %478 = vmatprep.subr.mxu0 0.0
  %479 = vmatpush1.msra.mxu0 0.0
  %480 = vmatprep.subr.mxu0 0.0
  %481 = vmatpush1.msra.mxu0 0.0
  %482 = vmatprep.subr.mxu0 0.0
  %483 = vmatpush1.msra.mxu0 0.0
  %484 = vmatprep.subr.mxu0 0.0
  %485 = vmatpush1.msra.mxu0 0.0
  %486 = vmatprep.subr.mxu0 0.0
  %487 = vmatpush1.msra.mxu0 0.0
  %488 = vmatprep.subr.mxu0 0.0
  %489 = vmatpush1.msra.mxu0 0.0
  %490 = vmatprep.subr.mxu0 0.0
  %491 = vmatpush1.msra.mxu0 0.0
  %492 = vmatprep.subr.mxu0 0.0
  %493 = vmatpush1.msra.mxu0 0.0
  %494 = vmatprep.subr.mxu0 0.0
  %495 = vmatpush1.msra.mxu0 0.0
  %496 = vmatprep.subr.mxu0 0.0
  %497 = vmatpush1.msra.mxu0 0.0
  %498 = vmatprep.subr.mxu0 0.0
  %499 = vmatpush1.msra.mxu0 0.0
  %500 = vmatprep.subr.mxu0 0.0
  %501 = vmatpush1.msra.mxu0 0.0
  %502 = vmatprep.subr.mxu0 0.0
  %503 = vmatpush1.msra.mxu0 0.0
  %504 = vmatprep.subr.mxu0 0.0
  %505 = vmatpush1.msra.mxu0 0.0
  %506 = vmatprep.subr.mxu0 0.0
  %507 = vmatpush1.msra.mxu0 0.0
  %508 = vmatprep.subr.mxu0 0.0
  %v509 = vand.u32 %v52, 4294901760
  %510 = vmatpush1.msra.mxu0 %v509
  %511 = vmatprep.subr.mxu0 0.0
  %512 = vmatpush2.msra.mxu0 0.0
  %513 = vmatprep.subr.mxu0 0.0
  %514 = vmatpush2.msra.mxu0 0.0
  %515 = vmatprep.subr.mxu0 0.0
  %516 = vmatpush2.msra.mxu0 0.0
  %517 = vmatprep.subr.mxu0 0.0
  %518 = vmatpush2.msra.mxu0 0.0
  %519 = vmatprep.subr.mxu0 0.0
  %520 = vmatpush2.msra.mxu0 0.0
  %521 = vmatprep.subr.mxu0 0.0
  %522 = vmatpush2.msra.mxu0 0.0
  %523 = vmatprep.subr.mxu0 0.0
  %524 = vmatpush2.msra.mxu0 0.0
  %525 = vmatprep.subr.mxu0 0.0
  %526 = vmatpush2.msra.mxu0 0.0
  %527 = vmatprep.subr.mxu0 0.0
  %528 = vmatpush2.msra.mxu0 0.0
  %529 = vmatprep.subr.mxu0 0.0
  %530 = vmatpush2.msra.mxu0 0.0
  %531 = vmatprep.subr.mxu0 0.0
  %532 = vmatpush2.msra.mxu0 0.0
  %533 = vmatprep.subr.mxu0 0.0
  %534 = vmatpush2.msra.mxu0 0.0
  %535 = vmatprep.subr.mxu0 0.0
  %536 = vmatpush2.msra.mxu0 0.0
  %537 = vmatprep.subr.mxu0 0.0
  %538 = vmatpush2.msra.mxu0 0.0
  %539 = vmatprep.subr.mxu0 0.0
  %540 = vmatpush2.msra.mxu0 0.0
  %541 = vmatprep.subr.mxu0 0.0
  %542 = vmatpush2.msra.mxu0 0.0
  %543 = vmatprep.mubr.f32.mxu0 0.0
  %v544 = vand.u32 %v62, 4294901760
  %545 = vmatmul.mubr.f32.gmra.mxu0 %v544
  %v546 = vpop.f32.mrf.mxu0
  %v547 = vadd.f32 %v469, %v546
  %v548 = vpop.f32.mrf.mxu0
  %549 = vmatprep.mubr.f32.mxu0 0.0
  %v550 = vand.u32 %v65, 4294901760
  %551 = vmatmul.mubr.f32.gmra.mxu0 %v550
  %v552 = vpop.f32.mrf.mxu0
  %v553 = vadd.f32 %v475, %v552
  %v554 = vpop.f32.mrf.mxu0
  %555 = vdwg.mxu0
  %v556 = vld [vmem:[%s3] sm:$0x1]
  %v557 = vld [vmem:[%s4] sm:$0x1]
  %v558 = vmax.f32 %v547, 0.0
  %v559 = vmax.f32 %v553, 0.0
  %v560 = vadd.f32 %v558, %v559
  %v561 = vrot.slane %v560, 4
  %v562 = vadd.f32 %v560, %v561
  %v563 = vrot.slane %v562, 2
  %v564 = vadd.f32 %v562, %v563
  %v565 = vrot.slane %v564, 1
  %v566 = vadd.f32 %v564, %v565
  %v567 = vmul.f32 %v558, %v558
  %v568 = vmul.f32 %v559, %v559
  %v569 = vadd.f32 %v567, %v568
  %v570 = vrot.slane %v569, 4
  %v571 = vadd.f32 %v569, %v570
  %v572 = vrot.slane %v571, 2
  %v573 = vadd.f32 %v571, %v572
  %v574 = vrot.slane %v573, 1
  %v575 = vadd.f32 %v573, %v574
  %v576 = vmul.f32 %v566, 0.0625
  %v577 = vmul.f32 %v575, 0.0625
  %v578 = vmul.f32 %v576, %v576
  %v579 = vsub.f32 %v577, %v578
  %v580 = vadd.f32 %v579, 1e-05
  %v581 = vrsqrt.pop %v580
  %v582 = vmul.f32 %v581, %v556
  %v583 = vmul.f32 %v576, %v582
  %v584 = vsub.f32 %v557, %v583
  %v585 = vlaneseq
  %v586 = vshrl.u32 %v585, 7
  %v587 = vsub.s32 0, %v586
  %v588 = vrot.slane %v582, %v587
  %v589 = vmul.f32 %v558, %v588
  %v590 = vmul.f32 %v559, %v588
  %v592 = vlaneseq
  %v593 = vshrl.u32 %v592, 7
  %v594 = vsub.s32 0, %v593
  %v595 = vrot.slane %v584, %v594
  %v597 = vadd.f32 %v589, %v595
  %v598 = vadd.f32 %v590, %v595
  %v599 = vld [vmem:[%s5] sm:$0xff]
  %v600 = vld [vmem:[%s5 + $0x8] sm:$0xff]
  %v601 = vld [vmem:[%s5 + $0x10] sm:$0xff]
  %v602 = vld [vmem:[%s5 + $0x18] sm:$0xff]
  %v603 = vld [vmem:[%s5 + $0x20] sm:$0xff]
  %v604 = vld [vmem:[%s5 + $0x28] sm:$0xff]
  %v605 = vld [vmem:[%s5 + $0x30] sm:$0xff]
  %v606 = vld [vmem:[%s5 + $0x38] sm:$0xff]
  %v607 = vld [vmem:[%s5 + $0x40] sm:$0xff]
  %v608 = vld [vmem:[%s5 + $0x48] sm:$0xff]
  %v609 = vld [vmem:[%s5 + $0x50] sm:$0xff]
  %v610 = vld [vmem:[%s5 + $0x58] sm:$0xff]
  %v611 = vld [vmem:[%s5 + $0x60] sm:$0xff]
  %v612 = vld [vmem:[%s5 + $0x68] sm:$0xff]
  %v613 = vld [vmem:[%s5 + $0x70] sm:$0xff]
  %v614 = vld [vmem:[%s5 + $0x78] sm:$0xff]
  %v615 = vld [vmem:[%s5 + $0x80] sm:$0xff]
  %v616 = vld [vmem:[%s5 + $0x88] sm:$0xff]
  %v617 = vld [vmem:[%s5 + $0x90] sm:$0xff]
  %v618 = vld [vmem:[%s5 + $0x98] sm:$0xff]
  %v619 = vld [vmem:[%s5 + $0xa0] sm:$0xff]
  %v620 = vld [vmem:[%s5 + $0xa8] sm:$0xff]
  %v621 = vld [vmem:[%s5 + $0xb0] sm:$0xff]
  %v622 = vld [vmem:[%s5 + $0xb8] sm:$0xff]
  %v623 = vld [vmem:[%s5 + $0xc0] sm:$0xff]
  %v624 = vld [vmem:[%s5 + $0xc8] sm:$0xff]
  %v625 = vld [vmem:[%s5 + $0xd0] sm:$0xff]
  %v626 = vld [vmem:[%s5 + $0xd8] sm:$0xff]
  %v627 = vld [vmem:[%s5 + $0xe0] sm:$0xff]
  %v628 = vld [vmem:[%s5 + $0xe8] sm:$0xff]
  %v629 = vld [vmem:[%s5 + $0xf0] sm:$0xff]
  %v630 = vld [vmem:[%s5 + $0xf8] sm:$0xff]
  %v631 = vld [vmem:[%s6] sm:$0x3]
  %v633 = vlaneseq
  %v634 = vshrl.u32 %v633, 7
  %v635 = vsub.s32 0, %v634
  %v636 = vrot.slane %v631, %v635
  %v637 = vlaneseq
  %v638 = vshrl.u32 %v637, 7
  %v639 = vsub.s32 1, %v638
  %v640 = vrot.slane %v631, %v639
  %v643 = vand.u32 %v630, 4294901760
  %644 = vmatprep.subr.mxu0 %v643
  %v645 = vand.u32 %v629, 4294901760
  %646 = vmatpush1.msra.mxu0 %v645
  %v647 = vand.u32 %v628, 4294901760
  %648 = vmatprep.subr.mxu0 %v647
  %v649 = vand.u32 %v627, 4294901760
  %650 = vmatpush1.msra.mxu0 %v649
  %v651 = vand.u32 %v626, 4294901760
  %652 = vmatprep.subr.mxu0 %v651
  %v653 = vand.u32 %v625, 4294901760
  %654 = vmatpush1.msra.mxu0 %v653
  %v655 = vand.u32 %v624, 4294901760
  %656 = vmatprep.subr.mxu0 %v655
  %v657 = vand.u32 %v623, 4294901760
  %658 = vmatpush1.msra.mxu0 %v657
  %v659 = vand.u32 %v622, 4294901760
  %660 = vmatprep.subr.mxu0 %v659
  %v661 = vand.u32 %v621, 4294901760
  %662 = vmatpush1.msra.mxu0 %v661
  %v663 = vand.u32 %v620, 4294901760
  %664 = vmatprep.subr.mxu0 %v663
  %v665 = vand.u32 %v619, 4294901760
  %666 = vmatpush1.msra.mxu0 %v665
  %v667 = vand.u32 %v618, 4294901760
  %668 = vmatprep.subr.mxu0 %v667
  %v669 = vand.u32 %v617, 4294901760
  %670 = vmatpush1.msra.mxu0 %v669
  %v671 = vand.u32 %v616, 4294901760
  %672 = vmatprep.subr.mxu0 %v671
  %v673 = vand.u32 %v615, 4294901760
  %674 = vmatpush1.msra.mxu0 %v673
  %v675 = vand.u32 %v614, 4294901760
  %676 = vmatprep.subr.mxu0 %v675
  %v677 = vand.u32 %v613, 4294901760
  %678 = vmatpush1.msra.mxu0 %v677
  %v679 = vand.u32 %v612, 4294901760
  %680 = vmatprep.subr.mxu0 %v679
  %v681 = vand.u32 %v611, 4294901760
  %682 = vmatpush1.msra.mxu0 %v681
  %v683 = vand.u32 %v610, 4294901760
  %684 = vmatprep.subr.mxu0 %v683
  %v685 = vand.u32 %v609, 4294901760
  %686 = vmatpush1.msra.mxu0 %v685
  %v687 = vand.u32 %v608, 4294901760
  %688 = vmatprep.subr.mxu0 %v687
  %v689 = vand.u32 %v607, 4294901760
  %690 = vmatpush1.msra.mxu0 %v689
  %v691 = vand.u32 %v606, 4294901760
  %692 = vmatprep.subr.mxu0 %v691
  %v693 = vand.u32 %v605, 4294901760
  %694 = vmatpush1.msra.mxu0 %v693
  %v695 = vand.u32 %v604, 4294901760
  %696 = vmatprep.subr.mxu0 %v695
  %v697 = vand.u32 %v603, 4294901760
  %698 = vmatpush1.msra.mxu0 %v697
  %v699 = vand.u32 %v602, 4294901760
  %700 = vmatprep.subr.mxu0 %v699
  %v701 = vand.u32 %v601, 4294901760
  %702 = vmatpush1.msra.mxu0 %v701
  %v703 = vand.u32 %v600, 4294901760
  %704 = vmatprep.subr.mxu0 %v703
  %v705 = vand.u32 %v599, 4294901760
  %706 = vmatpush1.msra.mxu0 %v705
  %707 = vmatprep.subr.mxu0 0.0
  %708 = vmatpush2.msra.mxu0 0.0
  %709 = vmatprep.subr.mxu0 0.0
  %710 = vmatpush2.msra.mxu0 0.0
  %711 = vmatprep.subr.mxu0 0.0
  %712 = vmatpush2.msra.mxu0 0.0
  %713 = vmatprep.subr.mxu0 0.0
  %714 = vmatpush2.msra.mxu0 0.0
  %715 = vmatprep.subr.mxu0 0.0
  %716 = vmatpush2.msra.mxu0 0.0
  %717 = vmatprep.subr.mxu0 0.0
  %718 = vmatpush2.msra.mxu0 0.0
  %719 = vmatprep.subr.mxu0 0.0
  %720 = vmatpush2.msra.mxu0 0.0
  %721 = vmatprep.subr.mxu0 0.0
  %722 = vmatpush2.msra.mxu0 0.0
  %723 = vmatprep.subr.mxu0 0.0
  %724 = vmatpush2.msra.mxu0 0.0
  %725 = vmatprep.subr.mxu0 0.0
  %726 = vmatpush2.msra.mxu0 0.0
  %727 = vmatprep.subr.mxu0 0.0
  %728 = vmatpush2.msra.mxu0 0.0
  %729 = vmatprep.subr.mxu0 0.0
  %730 = vmatpush2.msra.mxu0 0.0
  %731 = vmatprep.subr.mxu0 0.0
  %732 = vmatpush2.msra.mxu0 0.0
  %733 = vmatprep.subr.mxu0 0.0
  %734 = vmatpush2.msra.mxu0 0.0
  %735 = vmatprep.subr.mxu0 0.0
  %736 = vmatpush2.msra.mxu0 0.0
  %737 = vmatprep.subr.mxu0 0.0
  %738 = vmatpush2.msra.mxu0 0.0
  %739 = vmatprep.mubr.f32.mxu0 0.0
  %v740 = vand.u32 %v597, 4294901760
  %v741 = vsub.f32 %v597, %v740
  %v742 = vand.u32 %v741, 4294901760
  %v743 = vsub.f32 %v741, %v742
  %v744 = vand.u32 %v743, 4294901760
  %745 = vmatmul.mubr.f32.gmra.mxu0 %v744
  %v746 = vpop.f32.mrf.mxu0
  %v747 = vadd.f32 %v636, %v746
  %v748 = vpop.f32.mrf.mxu0
  %v749 = vadd.f32 %v640, %v748
  %750 = vmatprep.mubr.f32.mxu0 0.0
  %v751 = vand.u32 %v598, 4294901760
  %v752 = vsub.f32 %v598, %v751
  %v753 = vand.u32 %v752, 4294901760
  %v754 = vsub.f32 %v752, %v753
  %v755 = vand.u32 %v754, 4294901760
  %756 = vmatmul.mubr.f32.gmra.mxu0 %v755
  %v757 = vpop.f32.mrf.mxu0
  %v758 = vadd.f32 %v636, %v757
  %v759 = vpop.f32.mrf.mxu0
  %v760 = vadd.f32 %v640, %v759
  %761 = vdwg.mxu0
  %v762 = vand.u32 %v630, 4294901760
  %v763 = vsub.f32 %v630, %v762
  %v764 = vand.u32 %v763, 4294901760
  %v765 = vsub.f32 %v763, %v764
  %v766 = vand.u32 %v765, 4294901760
  %767 = vmatprep.subr.mxu0 %v766
  %v768 = vand.u32 %v629, 4294901760
  %v769 = vsub.f32 %v629, %v768
  %v770 = vand.u32 %v769, 4294901760
  %v771 = vsub.f32 %v769, %v770
  %v772 = vand.u32 %v771, 4294901760
  %773 = vmatpush1.msra.mxu0 %v772
  %v774 = vand.u32 %v628, 4294901760
  %v775 = vsub.f32 %v628, %v774
  %v776 = vand.u32 %v775, 4294901760
  %v777 = vsub.f32 %v775, %v776
  %v778 = vand.u32 %v777, 4294901760
  %779 = vmatprep.subr.mxu0 %v778
  %v780 = vand.u32 %v627, 4294901760
  %v781 = vsub.f32 %v627, %v780
  %v782 = vand.u32 %v781, 4294901760
  %v783 = vsub.f32 %v781, %v782
  %v784 = vand.u32 %v783, 4294901760
  %785 = vmatpush1.msra.mxu0 %v784
  %v786 = vand.u32 %v626, 4294901760
  %v787 = vsub.f32 %v626, %v786
  %v788 = vand.u32 %v787, 4294901760
  %v789 = vsub.f32 %v787, %v788
  %v790 = vand.u32 %v789, 4294901760
  %791 = vmatprep.subr.mxu0 %v790
  %v792 = vand.u32 %v625, 4294901760
  %v793 = vsub.f32 %v625, %v792
  %v794 = vand.u32 %v793, 4294901760
  %v795 = vsub.f32 %v793, %v794
  %v796 = vand.u32 %v795, 4294901760
  %797 = vmatpush1.msra.mxu0 %v796
  %v798 = vand.u32 %v624, 4294901760
  %v799 = vsub.f32 %v624, %v798
  %v800 = vand.u32 %v799, 4294901760
  %v801 = vsub.f32 %v799, %v800
  %v802 = vand.u32 %v801, 4294901760
  %803 = vmatprep.subr.mxu0 %v802
  %v804 = vand.u32 %v623, 4294901760
  %v805 = vsub.f32 %v623, %v804
  %v806 = vand.u32 %v805, 4294901760
  %v807 = vsub.f32 %v805, %v806
  %v808 = vand.u32 %v807, 4294901760
  %809 = vmatpush1.msra.mxu0 %v808
  %v810 = vand.u32 %v622, 4294901760
  %v811 = vsub.f32 %v622, %v810
  %v812 = vand.u32 %v811, 4294901760
  %v813 = vsub.f32 %v811, %v812
  %v814 = vand.u32 %v813, 4294901760
  %815 = vmatprep.subr.mxu0 %v814
  %v816 = vand.u32 %v621, 4294901760
  %v817 = vsub.f32 %v621, %v816
  %v818 = vand.u32 %v817, 4294901760
  %v819 = vsub.f32 %v817, %v818
  %v820 = vand.u32 %v819, 4294901760
  %821 = vmatpush1.msra.mxu0 %v820
  %v822 = vand.u32 %v620, 4294901760
  %v823 = vsub.f32 %v620, %v822
  %v824 = vand.u32 %v823, 4294901760
  %v825 = vsub.f32 %v823, %v824
  %v826 = vand.u32 %v825, 4294901760
  %827 = vmatprep.subr.mxu0 %v826
  %v828 = vand.u32 %v619, 4294901760
  %v829 = vsub.f32 %v619, %v828
  %v830 = vand.u32 %v829, 4294901760
  %v831 = vsub.f32 %v829, %v830
  %v832 = vand.u32 %v831, 4294901760
  %833 = vmatpush1.msra.mxu0 %v832
  %v834 = vand.u32 %v618, 4294901760
  %v835 = vsub.f32 %v618, %v834
  %v836 = vand.u32 %v835, 4294901760
  %v837 = vsub.f32 %v835, %v836
  %v838 = vand.u32 %v837, 4294901760
  %839 = vmatprep.subr.mxu0 %v838
  %v840 = vand.u32 %v617, 4294901760
  %v841 = vsub.f32 %v617, %v840
  %v842 = vand.u32 %v841, 4294901760
  %v843 = vsub.f32 %v841, %v842
  %v844 = vand.u32 %v843, 4294901760
  %845 = vmatpush1.msra.mxu0 %v844
  %v846 = vand.u32 %v616, 4294901760
  %v847 = vsub.f32 %v616, %v846
  %v848 = vand.u32 %v847, 4294901760
  %v849 = vsub.f32 %v847, %v848
  %v850 = vand.u32 %v849, 4294901760
  %851 = vmatprep.subr.mxu0 %v850
  %v852 = vand.u32 %v615, 4294901760
  %v853 = vsub.f32 %v615, %v852
  %v854 = vand.u32 %v853, 4294901760
  %v855 = vsub.f32 %v853, %v854
  %v856 = vand.u32 %v855, 4294901760
  %857 = vmatpush1.msra.mxu0 %v856
  %v858 = vand.u32 %v614, 4294901760
  %v859 = vsub.f32 %v614, %v858
  %v860 = vand.u32 %v859, 4294901760
  %v861 = vsub.f32 %v859, %v860
  %v862 = vand.u32 %v861, 4294901760
  %863 = vmatprep.subr.mxu0 %v862
  %v864 = vand.u32 %v613, 4294901760
  %v865 = vsub.f32 %v613, %v864
  %v866 = vand.u32 %v865, 4294901760
  %v867 = vsub.f32 %v865, %v866
  %v868 = vand.u32 %v867, 4294901760
  %869 = vmatpush1.msra.mxu0 %v868
  %v870 = vand.u32 %v612, 4294901760
  %v871 = vsub.f32 %v612, %v870
  %v872 = vand.u32 %v871, 4294901760
  %v873 = vsub.f32 %v871, %v872
  %v874 = vand.u32 %v873, 4294901760
  %875 = vmatprep.subr.mxu0 %v874
  %v876 = vand.u32 %v611, 4294901760
  %v877 = vsub.f32 %v611, %v876
  %v878 = vand.u32 %v877, 4294901760
  %v879 = vsub.f32 %v877, %v878
  %v880 = vand.u32 %v879, 4294901760
  %881 = vmatpush1.msra.mxu0 %v880
  %v882 = vand.u32 %v610, 4294901760
  %v883 = vsub.f32 %v610, %v882
  %v884 = vand.u32 %v883, 4294901760
  %v885 = vsub.f32 %v883, %v884
  %v886 = vand.u32 %v885, 4294901760
  %887 = vmatprep.subr.mxu0 %v886
  %v888 = vand.u32 %v609, 4294901760
  %v889 = vsub.f32 %v609, %v888
  %v890 = vand.u32 %v889, 4294901760
  %v891 = vsub.f32 %v889, %v890
  %v892 = vand.u32 %v891, 4294901760
  %893 = vmatpush1.msra.mxu0 %v892
  %v894 = vand.u32 %v608, 4294901760
  %v895 = vsub.f32 %v608, %v894
  %v896 = vand.u32 %v895, 4294901760
  %v897 = vsub.f32 %v895, %v896
  %v898 = vand.u32 %v897, 4294901760
  %899 = vmatprep.subr.mxu0 %v898
  %v900 = vand.u32 %v607, 4294901760
  %v901 = vsub.f32 %v607, %v900
  %v902 = vand.u32 %v901, 4294901760
  %v903 = vsub.f32 %v901, %v902
  %v904 = vand.u32 %v903, 4294901760
  %905 = vmatpush1.msra.mxu0 %v904
  %v906 = vand.u32 %v606, 4294901760
  %v907 = vsub.f32 %v606, %v906
  %v908 = vand.u32 %v907, 4294901760
  %v909 = vsub.f32 %v907, %v908
  %v910 = vand.u32 %v909, 4294901760
  %911 = vmatprep.subr.mxu0 %v910
  %v912 = vand.u32 %v605, 4294901760
  %v913 = vsub.f32 %v605, %v912
  %v914 = vand.u32 %v913, 4294901760
  %v915 = vsub.f32 %v913, %v914
  %v916 = vand.u32 %v915, 4294901760
  %917 = vmatpush1.msra.mxu0 %v916
  %v918 = vand.u32 %v604, 4294901760
  %v919 = vsub.f32 %v604, %v918
  %v920 = vand.u32 %v919, 4294901760
  %v921 = vsub.f32 %v919, %v920
  %v922 = vand.u32 %v921, 4294901760
  %923 = vmatprep.subr.mxu0 %v922
  %v924 = vand.u32 %v603, 4294901760
  %v925 = vsub.f32 %v603, %v924
  %v926 = vand.u32 %v925, 4294901760
  %v927 = vsub.f32 %v925, %v926
  %v928 = vand.u32 %v927, 4294901760
  %929 = vmatpush1.msra.mxu0 %v928
  %v930 = vand.u32 %v602, 4294901760
  %v931 = vsub.f32 %v602, %v930
  %v932 = vand.u32 %v931, 4294901760
  %v933 = vsub.f32 %v931, %v932
  %v934 = vand.u32 %v933, 4294901760
  %935 = vmatprep.subr.mxu0 %v934
  %v936 = vand.u32 %v601, 4294901760
  %v937 = vsub.f32 %v601, %v936
  %v938 = vand.u32 %v937, 4294901760
  %v939 = vsub.f32 %v937, %v938
  %v940 = vand.u32 %v939, 4294901760
  %941 = vmatpush1.msra.mxu0 %v940
  %v942 = vand.u32 %v600, 4294901760
  %v943 = vsub.f32 %v600, %v942
  %v944 = vand.u32 %v943, 4294901760
  %v945 = vsub.f32 %v943, %v944
  %v946 = vand.u32 %v945, 4294901760
  %947 = vmatprep.subr.mxu0 %v946
  %v948 = vand.u32 %v599, 4294901760
  %v949 = vsub.f32 %v599, %v948
  %v950 = vand.u32 %v949, 4294901760
  %v951 = vsub.f32 %v949, %v950
  %v952 = vand.u32 %v951, 4294901760
  %953 = vmatpush1.msra.mxu0 %v952
  %954 = vmatprep.subr.mxu0 0.0
  %955 = vmatpush2.msra.mxu0 0.0
  %956 = vmatprep.subr.mxu0 0.0
  %957 = vmatpush2.msra.mxu0 0.0
  %958 = vmatprep.subr.mxu0 0.0
  %959 = vmatpush2.msra.mxu0 0.0
  %960 = vmatprep.subr.mxu0 0.0
  %961 = vmatpush2.msra.mxu0 0.0
  %962 = vmatprep.subr.mxu0 0.0
  %963 = vmatpush2.msra.mxu0 0.0
  %964 = vmatprep.subr.mxu0 0.0
  %965 = vmatpush2.msra.mxu0 0.0
  %966 = vmatprep.subr.mxu0 0.0
  %967 = vmatpush2.msra.mxu0 0.0
  %968 = vmatprep.subr.mxu0 0.0
  %969 = vmatpush2.msra.mxu0 0.0
  %970 = vmatprep.subr.mxu0 0.0
  %971 = vmatpush2.msra.mxu0 0.0
  %972 = vmatprep.subr.mxu0 0.0
  %973 = vmatpush2.msra.mxu0 0.0
  %974 = vmatprep.subr.mxu0 0.0
  %975 = vmatpush2.msra.mxu0 0.0
  %976 = vmatprep.subr.mxu0 0.0
  %977 = vmatpush2.msra.mxu0 0.0
  %978 = vmatprep.subr.mxu0 0.0
  %979 = vmatpush2.msra.mxu0 0.0
  %980 = vmatprep.subr.mxu0 0.0
  %981 = vmatpush2.msra.mxu0 0.0
  %982 = vmatprep.subr.mxu0 0.0
  %983 = vmatpush2.msra.mxu0 0.0
  %984 = vmatprep.subr.mxu0 0.0
  %985 = vmatpush2.msra.mxu0 0.0
  %986 = vmatprep.mubr.f32.mxu0 0.0
  %v987 = vand.u32 %v597, 4294901760
  %988 = vmatmul.mubr.f32.gmra.mxu0 %v987
  %v989 = vpop.f32.mrf.mxu0
  %v990 = vadd.f32 %v747, %v989
  %v991 = vpop.f32.mrf.mxu0
  %v992 = vadd.f32 %v749, %v991
  %993 = vmatprep.mubr.f32.mxu0 0.0
  %v994 = vand.u32 %v598, 4294901760
  %995 = vmatmul.mubr.f32.gmra.mxu0 %v994
  %v996 = vpop.f32.mrf.mxu0
  %v997 = vadd.f32 %v758, %v996
  %v998 = vpop.f32.mrf.mxu0
  %v999 = vadd.f32 %v760, %v998
  %1000 = vdwg.mxu0
  %v1001 = vand.u32 %v630, 4294901760
  %v1002 = vsub.f32 %v630, %v1001
  %1003 = vmatprep.subr.mxu0 %v1002
  %v1004 = vand.u32 %v629, 4294901760
  %v1005 = vsub.f32 %v629, %v1004
  %1006 = vmatpush1.msra.mxu0 %v1005
  %v1007 = vand.u32 %v628, 4294901760
  %v1008 = vsub.f32 %v628, %v1007
  %1009 = vmatprep.subr.mxu0 %v1008
  %v1010 = vand.u32 %v627, 4294901760
  %v1011 = vsub.f32 %v627, %v1010
  %1012 = vmatpush1.msra.mxu0 %v1011
  %v1013 = vand.u32 %v626, 4294901760
  %v1014 = vsub.f32 %v626, %v1013
  %1015 = vmatprep.subr.mxu0 %v1014
  %v1016 = vand.u32 %v625, 4294901760
  %v1017 = vsub.f32 %v625, %v1016
  %1018 = vmatpush1.msra.mxu0 %v1017
  %v1019 = vand.u32 %v624, 4294901760
  %v1020 = vsub.f32 %v624, %v1019
  %1021 = vmatprep.subr.mxu0 %v1020
  %v1022 = vand.u32 %v623, 4294901760
  %v1023 = vsub.f32 %v623, %v1022
  %1024 = vmatpush1.msra.mxu0 %v1023
  %v1025 = vand.u32 %v622, 4294901760
  %v1026 = vsub.f32 %v622, %v1025
  %1027 = vmatprep.subr.mxu0 %v1026
  %v1028 = vand.u32 %v621, 4294901760
  %v1029 = vsub.f32 %v621, %v1028
  %1030 = vmatpush1.msra.mxu0 %v1029
  %v1031 = vand.u32 %v620, 4294901760
  %v1032 = vsub.f32 %v620, %v1031
  %1033 = vmatprep.subr.mxu0 %v1032
  %v1034 = vand.u32 %v619, 4294901760
  %v1035 = vsub.f32 %v619, %v1034
  %1036 = vmatpush1.msra.mxu0 %v1035
  %v1037 = vand.u32 %v618, 4294901760
  %v1038 = vsub.f32 %v618, %v1037
  %1039 = vmatprep.subr.mxu0 %v1038
  %v1040 = vand.u32 %v617, 4294901760
  %v1041 = vsub.f32 %v617, %v1040
  %1042 = vmatpush1.msra.mxu0 %v1041
  %v1043 = vand.u32 %v616, 4294901760
  %v1044 = vsub.f32 %v616, %v1043
  %1045 = vmatprep.subr.mxu0 %v1044
  %v1046 = vand.u32 %v615, 4294901760
  %v1047 = vsub.f32 %v615, %v1046
  %1048 = vmatpush1.msra.mxu0 %v1047
  %v1049 = vand.u32 %v614, 4294901760
  %v1050 = vsub.f32 %v614, %v1049
  %1051 = vmatprep.subr.mxu0 %v1050
  %v1052 = vand.u32 %v613, 4294901760
  %v1053 = vsub.f32 %v613, %v1052
  %1054 = vmatpush1.msra.mxu0 %v1053
  %v1055 = vand.u32 %v612, 4294901760
  %v1056 = vsub.f32 %v612, %v1055
  %1057 = vmatprep.subr.mxu0 %v1056
  %v1058 = vand.u32 %v611, 4294901760
  %v1059 = vsub.f32 %v611, %v1058
  %1060 = vmatpush1.msra.mxu0 %v1059
  %v1061 = vand.u32 %v610, 4294901760
  %v1062 = vsub.f32 %v610, %v1061
  %1063 = vmatprep.subr.mxu0 %v1062
  %v1064 = vand.u32 %v609, 4294901760
  %v1065 = vsub.f32 %v609, %v1064
  %1066 = vmatpush1.msra.mxu0 %v1065
  %v1067 = vand.u32 %v608, 4294901760
  %v1068 = vsub.f32 %v608, %v1067
  %1069 = vmatprep.subr.mxu0 %v1068
  %v1070 = vand.u32 %v607, 4294901760
  %v1071 = vsub.f32 %v607, %v1070
  %1072 = vmatpush1.msra.mxu0 %v1071
  %v1073 = vand.u32 %v606, 4294901760
  %v1074 = vsub.f32 %v606, %v1073
  %1075 = vmatprep.subr.mxu0 %v1074
  %v1076 = vand.u32 %v605, 4294901760
  %v1077 = vsub.f32 %v605, %v1076
  %1078 = vmatpush1.msra.mxu0 %v1077
  %v1079 = vand.u32 %v604, 4294901760
  %v1080 = vsub.f32 %v604, %v1079
  %1081 = vmatprep.subr.mxu0 %v1080
  %v1082 = vand.u32 %v603, 4294901760
  %v1083 = vsub.f32 %v603, %v1082
  %1084 = vmatpush1.msra.mxu0 %v1083
  %v1085 = vand.u32 %v602, 4294901760
  %v1086 = vsub.f32 %v602, %v1085
  %1087 = vmatprep.subr.mxu0 %v1086
  %v1088 = vand.u32 %v601, 4294901760
  %v1089 = vsub.f32 %v601, %v1088
  %1090 = vmatpush1.msra.mxu0 %v1089
  %v1091 = vand.u32 %v600, 4294901760
  %v1092 = vsub.f32 %v600, %v1091
  %1093 = vmatprep.subr.mxu0 %v1092
  %v1094 = vand.u32 %v599, 4294901760
  %v1095 = vsub.f32 %v599, %v1094
  %1096 = vmatpush1.msra.mxu0 %v1095
  %1097 = vmatprep.subr.mxu0 0.0
  %1098 = vmatpush2.msra.mxu0 0.0
  %1099 = vmatprep.subr.mxu0 0.0
  %1100 = vmatpush2.msra.mxu0 0.0
  %1101 = vmatprep.subr.mxu0 0.0
  %1102 = vmatpush2.msra.mxu0 0.0
  %1103 = vmatprep.subr.mxu0 0.0
  %1104 = vmatpush2.msra.mxu0 0.0
  %1105 = vmatprep.subr.mxu0 0.0
  %1106 = vmatpush2.msra.mxu0 0.0
  %1107 = vmatprep.subr.mxu0 0.0
  %1108 = vmatpush2.msra.mxu0 0.0
  %1109 = vmatprep.subr.mxu0 0.0
  %1110 = vmatpush2.msra.mxu0 0.0
  %1111 = vmatprep.subr.mxu0 0.0
  %1112 = vmatpush2.msra.mxu0 0.0
  %1113 = vmatprep.subr.mxu0 0.0
  %1114 = vmatpush2.msra.mxu0 0.0
  %1115 = vmatprep.subr.mxu0 0.0
  %1116 = vmatpush2.msra.mxu0 0.0
  %1117 = vmatprep.subr.mxu0 0.0
  %1118 = vmatpush2.msra.mxu0 0.0
  %1119 = vmatprep.subr.mxu0 0.0
  %1120 = vmatpush2.msra.mxu0 0.0
  %1121 = vmatprep.subr.mxu0 0.0
  %1122 = vmatpush2.msra.mxu0 0.0
  %1123 = vmatprep.subr.mxu0 0.0
  %1124 = vmatpush2.msra.mxu0 0.0
  %1125 = vmatprep.subr.mxu0 0.0
  %1126 = vmatpush2.msra.mxu0 0.0
  %1127 = vmatprep.subr.mxu0 0.0
  %1128 = vmatpush2.msra.mxu0 0.0
  %1129 = vmatprep.mubr.f32.mxu0 0.0
  %v1130 = vand.u32 %v597, 4294901760
  %v1131 = vsub.f32 %v597, %v1130
  %1132 = vmatmul.mubr.f32.gmra.mxu0 %v1131
  %v1133 = vpop.f32.mrf.mxu0
  %v1134 = vadd.f32 %v990, %v1133
  %v1135 = vpop.f32.mrf.mxu0
  %v1136 = vadd.f32 %v992, %v1135
  %1137 = vmatprep.mubr.f32.mxu0 0.0
  %v1138 = vand.u32 %v598, 4294901760
  %v1139 = vsub.f32 %v598, %v1138
  %1140 = vmatmul.mubr.f32.gmra.mxu0 %v1139
  %v1141 = vpop.f32.mrf.mxu0
  %v1142 = vadd.f32 %v997, %v1141
  %v1143 = vpop.f32.mrf.mxu0
  %v1144 = vadd.f32 %v999, %v1143
  %1145 = vdwg.mxu0
  %v1146 = vand.u32 %v630, 4294901760
  %1147 = vmatprep.subr.mxu0 %v1146
  %v1148 = vand.u32 %v629, 4294901760
  %1149 = vmatpush1.msra.mxu0 %v1148
  %v1150 = vand.u32 %v628, 4294901760
  %1151 = vmatprep.subr.mxu0 %v1150
  %v1152 = vand.u32 %v627, 4294901760
  %1153 = vmatpush1.msra.mxu0 %v1152
  %v1154 = vand.u32 %v626, 4294901760
  %1155 = vmatprep.subr.mxu0 %v1154
  %v1156 = vand.u32 %v625, 4294901760
  %1157 = vmatpush1.msra.mxu0 %v1156
  %v1158 = vand.u32 %v624, 4294901760
  %1159 = vmatprep.subr.mxu0 %v1158
  %v1160 = vand.u32 %v623, 4294901760
  %1161 = vmatpush1.msra.mxu0 %v1160
  %v1162 = vand.u32 %v622, 4294901760
  %1163 = vmatprep.subr.mxu0 %v1162
  %v1164 = vand.u32 %v621, 4294901760
  %1165 = vmatpush1.msra.mxu0 %v1164
  %v1166 = vand.u32 %v620, 4294901760
  %1167 = vmatprep.subr.mxu0 %v1166
  %v1168 = vand.u32 %v619, 4294901760
  %1169 = vmatpush1.msra.mxu0 %v1168
  %v1170 = vand.u32 %v618, 4294901760
  %1171 = vmatprep.subr.mxu0 %v1170
  %v1172 = vand.u32 %v617, 4294901760
  %1173 = vmatpush1.msra.mxu0 %v1172
  %v1174 = vand.u32 %v616, 4294901760
  %1175 = vmatprep.subr.mxu0 %v1174
  %v1176 = vand.u32 %v615, 4294901760
  %1177 = vmatpush1.msra.mxu0 %v1176
  %v1178 = vand.u32 %v614, 4294901760
  %1179 = vmatprep.subr.mxu0 %v1178
  %v1180 = vand.u32 %v613, 4294901760
  %1181 = vmatpush1.msra.mxu0 %v1180
  %v1182 = vand.u32 %v612, 4294901760
  %1183 = vmatprep.subr.mxu0 %v1182
  %v1184 = vand.u32 %v611, 4294901760
  %1185 = vmatpush1.msra.mxu0 %v1184
  %v1186 = vand.u32 %v610, 4294901760
  %1187 = vmatprep.subr.mxu0 %v1186
  %v1188 = vand.u32 %v609, 4294901760
  %1189 = vmatpush1.msra.mxu0 %v1188
  %v1190 = vand.u32 %v608, 4294901760
  %1191 = vmatprep.subr.mxu0 %v1190
  %v1192 = vand.u32 %v607, 4294901760
  %1193 = vmatpush1.msra.mxu0 %v1192
  %v1194 = vand.u32 %v606, 4294901760
  %1195 = vmatprep.subr.mxu0 %v1194
  %v1196 = vand.u32 %v605, 4294901760
  %1197 = vmatpush1.msra.mxu0 %v1196
  %v1198 = vand.u32 %v604, 4294901760
  %1199 = vmatprep.subr.mxu0 %v1198
  %v1200 = vand.u32 %v603, 4294901760
  %1201 = vmatpush1.msra.mxu0 %v1200
  %v1202 = vand.u32 %v602, 4294901760
  %1203 = vmatprep.subr.mxu0 %v1202
  %v1204 = vand.u32 %v601, 4294901760
  %1205 = vmatpush1.msra.mxu0 %v1204
  %v1206 = vand.u32 %v600, 4294901760
  %1207 = vmatprep.subr.mxu0 %v1206
  %v1208 = vand.u32 %v599, 4294901760
  %1209 = vmatpush1.msra.mxu0 %v1208
  %1210 = vmatprep.subr.mxu0 0.0
  %1211 = vmatpush2.msra.mxu0 0.0
  %1212 = vmatprep.subr.mxu0 0.0
  %1213 = vmatpush2.msra.mxu0 0.0
  %1214 = vmatprep.subr.mxu0 0.0
  %1215 = vmatpush2.msra.mxu0 0.0
  %1216 = vmatprep.subr.mxu0 0.0
  %1217 = vmatpush2.msra.mxu0 0.0
  %1218 = vmatprep.subr.mxu0 0.0
  %1219 = vmatpush2.msra.mxu0 0.0
  %1220 = vmatprep.subr.mxu0 0.0
  %1221 = vmatpush2.msra.mxu0 0.0
  %1222 = vmatprep.subr.mxu0 0.0
  %1223 = vmatpush2.msra.mxu0 0.0
  %1224 = vmatprep.subr.mxu0 0.0
  %1225 = vmatpush2.msra.mxu0 0.0
  %1226 = vmatprep.subr.mxu0 0.0
  %1227 = vmatpush2.msra.mxu0 0.0
  %1228 = vmatprep.subr.mxu0 0.0
  %1229 = vmatpush2.msra.mxu0 0.0
  %1230 = vmatprep.subr.mxu0 0.0
  %1231 = vmatpush2.msra.mxu0 0.0
  %1232 = vmatprep.subr.mxu0 0.0
  %1233 = vmatpush2.msra.mxu0 0.0
  %1234 = vmatprep.subr.mxu0 0.0
  %1235 = vmatpush2.msra.mxu0 0.0
  %1236 = vmatprep.subr.mxu0 0.0
  %1237 = vmatpush2.msra.mxu0 0.0
  %1238 = vmatprep.subr.mxu0 0.0
  %1239 = vmatpush2.msra.mxu0 0.0
  %1240 = vmatprep.subr.mxu0 0.0
  %1241 = vmatpush2.msra.mxu0 0.0
  %1242 = vmatprep.mubr.f32.mxu0 0.0
  %v1243 = vand.u32 %v597, 4294901760
  %v1244 = vsub.f32 %v597, %v1243
  %v1245 = vand.u32 %v1244, 4294901760
  %1246 = vmatmul.mubr.f32.gmra.mxu0 %v1245
  %v1247 = vpop.f32.mrf.mxu0
  %v1248 = vadd.f32 %v1134, %v1247
  %v1249 = vpop.f32.mrf.mxu0
  %v1250 = vadd.f32 %v1136, %v1249
  %1251 = vmatprep.mubr.f32.mxu0 0.0
  %v1252 = vand.u32 %v598, 4294901760
  %v1253 = vsub.f32 %v598, %v1252
  %v1254 = vand.u32 %v1253, 4294901760
  %1255 = vmatmul.mubr.f32.gmra.mxu0 %v1254
  %v1256 = vpop.f32.mrf.mxu0
  %v1257 = vadd.f32 %v1142, %v1256
  %v1258 = vpop.f32.mrf.mxu0
  %v1259 = vadd.f32 %v1144, %v1258
  %1260 = vdwg.mxu0
  %v1261 = vand.u32 %v630, 4294901760
  %v1262 = vsub.f32 %v630, %v1261
  %v1263 = vand.u32 %v1262, 4294901760
  %1264 = vmatprep.subr.mxu0 %v1263
  %v1265 = vand.u32 %v629, 4294901760
  %v1266 = vsub.f32 %v629, %v1265
  %v1267 = vand.u32 %v1266, 4294901760
  %1268 = vmatpush1.msra.mxu0 %v1267
  %v1269 = vand.u32 %v628, 4294901760
  %v1270 = vsub.f32 %v628, %v1269
  %v1271 = vand.u32 %v1270, 4294901760
  %1272 = vmatprep.subr.mxu0 %v1271
  %v1273 = vand.u32 %v627, 4294901760
  %v1274 = vsub.f32 %v627, %v1273
  %v1275 = vand.u32 %v1274, 4294901760
  %1276 = vmatpush1.msra.mxu0 %v1275
  %v1277 = vand.u32 %v626, 4294901760
  %v1278 = vsub.f32 %v626, %v1277
  %v1279 = vand.u32 %v1278, 4294901760
  %1280 = vmatprep.subr.mxu0 %v1279
  %v1281 = vand.u32 %v625, 4294901760
  %v1282 = vsub.f32 %v625, %v1281
  %v1283 = vand.u32 %v1282, 4294901760
  %1284 = vmatpush1.msra.mxu0 %v1283
  %v1285 = vand.u32 %v624, 4294901760
  %v1286 = vsub.f32 %v624, %v1285
  %v1287 = vand.u32 %v1286, 4294901760
  %1288 = vmatprep.subr.mxu0 %v1287
  %v1289 = vand.u32 %v623, 4294901760
  %v1290 = vsub.f32 %v623, %v1289
  %v1291 = vand.u32 %v1290, 4294901760
  %1292 = vmatpush1.msra.mxu0 %v1291
  %v1293 = vand.u32 %v622, 4294901760
  %v1294 = vsub.f32 %v622, %v1293
  %v1295 = vand.u32 %v1294, 4294901760
  %1296 = vmatprep.subr.mxu0 %v1295
  %v1297 = vand.u32 %v621, 4294901760
  %v1298 = vsub.f32 %v621, %v1297
  %v1299 = vand.u32 %v1298, 4294901760
  %1300 = vmatpush1.msra.mxu0 %v1299
  %v1301 = vand.u32 %v620, 4294901760
  %v1302 = vsub.f32 %v620, %v1301
  %v1303 = vand.u32 %v1302, 4294901760
  %1304 = vmatprep.subr.mxu0 %v1303
  %v1305 = vand.u32 %v619, 4294901760
  %v1306 = vsub.f32 %v619, %v1305
  %v1307 = vand.u32 %v1306, 4294901760
  %1308 = vmatpush1.msra.mxu0 %v1307
  %v1309 = vand.u32 %v618, 4294901760
  %v1310 = vsub.f32 %v618, %v1309
  %v1311 = vand.u32 %v1310, 4294901760
  %1312 = vmatprep.subr.mxu0 %v1311
  %v1313 = vand.u32 %v617, 4294901760
  %v1314 = vsub.f32 %v617, %v1313
  %v1315 = vand.u32 %v1314, 4294901760
  %1316 = vmatpush1.msra.mxu0 %v1315
  %v1317 = vand.u32 %v616, 4294901760
  %v1318 = vsub.f32 %v616, %v1317
  %v1319 = vand.u32 %v1318, 4294901760
  %1320 = vmatprep.subr.mxu0 %v1319
  %v1321 = vand.u32 %v615, 4294901760
  %v1322 = vsub.f32 %v615, %v1321
  %v1323 = vand.u32 %v1322, 4294901760
  %1324 = vmatpush1.msra.mxu0 %v1323
  %v1325 = vand.u32 %v614, 4294901760
  %v1326 = vsub.f32 %v614, %v1325
  %v1327 = vand.u32 %v1326, 4294901760
  %1328 = vmatprep.subr.mxu0 %v1327
  %v1329 = vand.u32 %v613, 4294901760
  %v1330 = vsub.f32 %v613, %v1329
  %v1331 = vand.u32 %v1330, 4294901760
  %1332 = vmatpush1.msra.mxu0 %v1331
  %v1333 = vand.u32 %v612, 4294901760
  %v1334 = vsub.f32 %v612, %v1333
  %v1335 = vand.u32 %v1334, 4294901760
  %1336 = vmatprep.subr.mxu0 %v1335
  %v1337 = vand.u32 %v611, 4294901760
  %v1338 = vsub.f32 %v611, %v1337
  %v1339 = vand.u32 %v1338, 4294901760
  %1340 = vmatpush1.msra.mxu0 %v1339
  %v1341 = vand.u32 %v610, 4294901760
  %v1342 = vsub.f32 %v610, %v1341
  %v1343 = vand.u32 %v1342, 4294901760
  %1344 = vmatprep.subr.mxu0 %v1343
  %v1345 = vand.u32 %v609, 4294901760
  %v1346 = vsub.f32 %v609, %v1345
  %v1347 = vand.u32 %v1346, 4294901760
  %1348 = vmatpush1.msra.mxu0 %v1347
  %v1349 = vand.u32 %v608, 4294901760
  %v1350 = vsub.f32 %v608, %v1349
  %v1351 = vand.u32 %v1350, 4294901760
  %1352 = vmatprep.subr.mxu0 %v1351
  %v1353 = vand.u32 %v607, 4294901760
  %v1354 = vsub.f32 %v607, %v1353
  %v1355 = vand.u32 %v1354, 4294901760
  %1356 = vmatpush1.msra.mxu0 %v1355
  %v1357 = vand.u32 %v606, 4294901760
  %v1358 = vsub.f32 %v606, %v1357
  %v1359 = vand.u32 %v1358, 4294901760
  %1360 = vmatprep.subr.mxu0 %v1359
  %v1361 = vand.u32 %v605, 4294901760
  %v1362 = vsub.f32 %v605, %v1361
  %v1363 = vand.u32 %v1362, 4294901760
  %1364 = vmatpush1.msra.mxu0 %v1363
  %v1365 = vand.u32 %v604, 4294901760
  %v1366 = vsub.f32 %v604, %v1365
  %v1367 = vand.u32 %v1366, 4294901760
  %1368 = vmatprep.subr.mxu0 %v1367
  %v1369 = vand.u32 %v603, 4294901760
  %v1370 = vsub.f32 %v603, %v1369
  %v1371 = vand.u32 %v1370, 4294901760
  %1372 = vmatpush1.msra.mxu0 %v1371
  %v1373 = vand.u32 %v602, 4294901760
  %v1374 = vsub.f32 %v602, %v1373
  %v1375 = vand.u32 %v1374, 4294901760
  %1376 = vmatprep.subr.mxu0 %v1375
  %v1377 = vand.u32 %v601, 4294901760
  %v1378 = vsub.f32 %v601, %v1377
  %v1379 = vand.u32 %v1378, 4294901760
  %1380 = vmatpush1.msra.mxu0 %v1379
  %v1381 = vand.u32 %v600, 4294901760
  %v1382 = vsub.f32 %v600, %v1381
  %v1383 = vand.u32 %v1382, 4294901760
  %1384 = vmatprep.subr.mxu0 %v1383
  %v1385 = vand.u32 %v599, 4294901760
  %v1386 = vsub.f32 %v599, %v1385
  %v1387 = vand.u32 %v1386, 4294901760
  %1388 = vmatpush1.msra.mxu0 %v1387
  %1389 = vmatprep.subr.mxu0 0.0
  %1390 = vmatpush2.msra.mxu0 0.0
  %1391 = vmatprep.subr.mxu0 0.0
  %1392 = vmatpush2.msra.mxu0 0.0
  %1393 = vmatprep.subr.mxu0 0.0
  %1394 = vmatpush2.msra.mxu0 0.0
  %1395 = vmatprep.subr.mxu0 0.0
  %1396 = vmatpush2.msra.mxu0 0.0
  %1397 = vmatprep.subr.mxu0 0.0
  %1398 = vmatpush2.msra.mxu0 0.0
  %1399 = vmatprep.subr.mxu0 0.0
  %1400 = vmatpush2.msra.mxu0 0.0
  %1401 = vmatprep.subr.mxu0 0.0
  %1402 = vmatpush2.msra.mxu0 0.0
  %1403 = vmatprep.subr.mxu0 0.0
  %1404 = vmatpush2.msra.mxu0 0.0
  %1405 = vmatprep.subr.mxu0 0.0
  %1406 = vmatpush2.msra.mxu0 0.0
  %1407 = vmatprep.subr.mxu0 0.0
  %1408 = vmatpush2.msra.mxu0 0.0
  %1409 = vmatprep.subr.mxu0 0.0
  %1410 = vmatpush2.msra.mxu0 0.0
  %1411 = vmatprep.subr.mxu0 0.0
  %1412 = vmatpush2.msra.mxu0 0.0
  %1413 = vmatprep.subr.mxu0 0.0
  %1414 = vmatpush2.msra.mxu0 0.0
  %1415 = vmatprep.subr.mxu0 0.0
  %1416 = vmatpush2.msra.mxu0 0.0
  %1417 = vmatprep.subr.mxu0 0.0
  %1418 = vmatpush2.msra.mxu0 0.0
  %1419 = vmatprep.subr.mxu0 0.0
  %1420 = vmatpush2.msra.mxu0 0.0
  %1421 = vmatprep.mubr.f32.mxu0 0.0
  %v1422 = vand.u32 %v597, 4294901760
  %1423 = vmatmul.mubr.f32.gmra.mxu0 %v1422
  %v1424 = vpop.f32.mrf.mxu0
  %v1425 = vadd.f32 %v1248, %v1424
  %v1426 = vpop.f32.mrf.mxu0
  %v1427 = vadd.f32 %v1250, %v1426
  %1428 = vmatprep.mubr.f32.mxu0 0.0
  %v1429 = vand.u32 %v598, 4294901760
  %1430 = vmatmul.mubr.f32.gmra.mxu0 %v1429
  %v1431 = vpop.f32.mrf.mxu0
  %v1432 = vadd.f32 %v1257, %v1431
  %v1433 = vpop.f32.mrf.mxu0
  %v1434 = vadd.f32 %v1259, %v1433
  %1435 = vdwg.mxu0
  %v1436 = vand.u32 %v630, 4294901760
  %1437 = vmatprep.subr.mxu0 %v1436
  %v1438 = vand.u32 %v629, 4294901760
  %1439 = vmatpush1.msra.mxu0 %v1438
  %v1440 = vand.u32 %v628, 4294901760
  %1441 = vmatprep.subr.mxu0 %v1440
  %v1442 = vand.u32 %v627, 4294901760
  %1443 = vmatpush1.msra.mxu0 %v1442
  %v1444 = vand.u32 %v626, 4294901760
  %1445 = vmatprep.subr.mxu0 %v1444
  %v1446 = vand.u32 %v625, 4294901760
  %1447 = vmatpush1.msra.mxu0 %v1446
  %v1448 = vand.u32 %v624, 4294901760
  %1449 = vmatprep.subr.mxu0 %v1448
  %v1450 = vand.u32 %v623, 4294901760
  %1451 = vmatpush1.msra.mxu0 %v1450
  %v1452 = vand.u32 %v622, 4294901760
  %1453 = vmatprep.subr.mxu0 %v1452
  %v1454 = vand.u32 %v621, 4294901760
  %1455 = vmatpush1.msra.mxu0 %v1454
  %v1456 = vand.u32 %v620, 4294901760
  %1457 = vmatprep.subr.mxu0 %v1456
  %v1458 = vand.u32 %v619, 4294901760
  %1459 = vmatpush1.msra.mxu0 %v1458
  %v1460 = vand.u32 %v618, 4294901760
  %1461 = vmatprep.subr.mxu0 %v1460
  %v1462 = vand.u32 %v617, 4294901760
  %1463 = vmatpush1.msra.mxu0 %v1462
  %v1464 = vand.u32 %v616, 4294901760
  %1465 = vmatprep.subr.mxu0 %v1464
  %v1466 = vand.u32 %v615, 4294901760
  %1467 = vmatpush1.msra.mxu0 %v1466
  %v1468 = vand.u32 %v614, 4294901760
  %1469 = vmatprep.subr.mxu0 %v1468
  %v1470 = vand.u32 %v613, 4294901760
  %1471 = vmatpush1.msra.mxu0 %v1470
  %v1472 = vand.u32 %v612, 4294901760
  %1473 = vmatprep.subr.mxu0 %v1472
  %v1474 = vand.u32 %v611, 4294901760
  %1475 = vmatpush1.msra.mxu0 %v1474
  %v1476 = vand.u32 %v610, 4294901760
  %1477 = vmatprep.subr.mxu0 %v1476
  %v1478 = vand.u32 %v609, 4294901760
  %1479 = vmatpush1.msra.mxu0 %v1478
  %v1480 = vand.u32 %v608, 4294901760
  %1481 = vmatprep.subr.mxu0 %v1480
  %v1482 = vand.u32 %v607, 4294901760
  %1483 = vmatpush1.msra.mxu0 %v1482
  %v1484 = vand.u32 %v606, 4294901760
  %1485 = vmatprep.subr.mxu0 %v1484
  %v1486 = vand.u32 %v605, 4294901760
  %1487 = vmatpush1.msra.mxu0 %v1486
  %v1488 = vand.u32 %v604, 4294901760
  %1489 = vmatprep.subr.mxu0 %v1488
  %v1490 = vand.u32 %v603, 4294901760
  %1491 = vmatpush1.msra.mxu0 %v1490
  %v1492 = vand.u32 %v602, 4294901760
  %1493 = vmatprep.subr.mxu0 %v1492
  %v1494 = vand.u32 %v601, 4294901760
  %1495 = vmatpush1.msra.mxu0 %v1494
  %v1496 = vand.u32 %v600, 4294901760
  %1497 = vmatprep.subr.mxu0 %v1496
  %v1498 = vand.u32 %v599, 4294901760
  %1499 = vmatpush1.msra.mxu0 %v1498
  %1500 = vmatprep.subr.mxu0 0.0
  %1501 = vmatpush2.msra.mxu0 0.0
  %1502 = vmatprep.subr.mxu0 0.0
  %1503 = vmatpush2.msra.mxu0 0.0
  %1504 = vmatprep.subr.mxu0 0.0
  %1505 = vmatpush2.msra.mxu0 0.0
  %1506 = vmatprep.subr.mxu0 0.0
  %1507 = vmatpush2.msra.mxu0 0.0
  %1508 = vmatprep.subr.mxu0 0.0
  %1509 = vmatpush2.msra.mxu0 0.0
  %1510 = vmatprep.subr.mxu0 0.0
  %1511 = vmatpush2.msra.mxu0 0.0
  %1512 = vmatprep.subr.mxu0 0.0
  %1513 = vmatpush2.msra.mxu0 0.0
  %1514 = vmatprep.subr.mxu0 0.0
  %1515 = vmatpush2.msra.mxu0 0.0
  %1516 = vmatprep.subr.mxu0 0.0
  %1517 = vmatpush2.msra.mxu0 0.0
  %1518 = vmatprep.subr.mxu0 0.0
  %1519 = vmatpush2.msra.mxu0 0.0
  %1520 = vmatprep.subr.mxu0 0.0
  %1521 = vmatpush2.msra.mxu0 0.0
  %1522 = vmatprep.subr.mxu0 0.0
  %1523 = vmatpush2.msra.mxu0 0.0
  %1524 = vmatprep.subr.mxu0 0.0
  %1525 = vmatpush2.msra.mxu0 0.0
  %1526 = vmatprep.subr.mxu0 0.0
  %1527 = vmatpush2.msra.mxu0 0.0
  %1528 = vmatprep.subr.mxu0 0.0
  %1529 = vmatpush2.msra.mxu0 0.0
  %1530 = vmatprep.subr.mxu0 0.0
  %1531 = vmatpush2.msra.mxu0 0.0
  %1532 = vmatprep.mubr.f32.mxu0 0.0
  %v1533 = vand.u32 %v597, 4294901760
  %1534 = vmatmul.mubr.f32.gmra.mxu0 %v1533
  %v1535 = vpop.f32.mrf.mxu0
  %v1536 = vadd.f32 %v1425, %v1535
  %v1537 = vpop.f32.mrf.mxu0
  %v1538 = vadd.f32 %v1427, %v1537
  %1539 = vmatprep.mubr.f32.mxu0 0.0
  %v1540 = vand.u32 %v598, 4294901760
  %1541 = vmatmul.mubr.f32.gmra.mxu0 %v1540
  %v1542 = vpop.f32.mrf.mxu0
  %v1543 = vadd.f32 %v1432, %v1542
  %v1544 = vpop.f32.mrf.mxu0
  %v1545 = vadd.f32 %v1434, %v1544
  %1546 = vdwg.mxu0
  %v1547 = vld [vmem:[%s7] sm:$0x3]
  %v1548 = vld [vmem:[%s8] sm:$0x3]
  %v1549 = vmax.f32 %v1536, 0.0
  %v1550 = vmax.f32 %v1538, 0.0
  %v1551 = vmax.f32 %v1543, 0.0
  %v1552 = vmax.f32 %v1545, 0.0
  %v1553 = vadd.f32 %v1549, %v1551
  %v1554 = vrot.slane %v1553, 4
  %v1555 = vadd.f32 %v1553, %v1554
  %v1556 = vrot.slane %v1555, 2
  %v1557 = vadd.f32 %v1555, %v1556
  %v1558 = vrot.slane %v1557, 1
  %v1559 = vadd.f32 %v1557, %v1558
  %v1560 = vadd.f32 %v1550, %v1552
  %v1561 = vrot.slane %v1560, 4
  %v1562 = vadd.f32 %v1560, %v1561
  %v1563 = vrot.slane %v1562, 2
  %v1564 = vadd.f32 %v1562, %v1563
  %v1565 = vrot.slane %v1564, 1
  %v1566 = vadd.f32 %v1564, %v1565
  %v1567 = vmul.f32 %v1549, %v1549
  %v1568 = vmul.f32 %v1550, %v1550
  %v1569 = vmul.f32 %v1551, %v1551
  %v1570 = vmul.f32 %v1552, %v1552
  %v1571 = vadd.f32 %v1567, %v1569
  %v1572 = vrot.slane %v1571, 4
  %v1573 = vadd.f32 %v1571, %v1572
  %v1574 = vrot.slane %v1573, 2
  %v1575 = vadd.f32 %v1573, %v1574
  %v1576 = vrot.slane %v1575, 1
  %v1577 = vadd.f32 %v1575, %v1576
  %v1578 = vadd.f32 %v1568, %v1570
  %v1579 = vrot.slane %v1578, 4
  %v1580 = vadd.f32 %v1578, %v1579
  %v1581 = vrot.slane %v1580, 2
  %v1582 = vadd.f32 %v1580, %v1581
  %v1583 = vrot.slane %v1582, 1
  %v1584 = vadd.f32 %v1582, %v1583
  %v1585 = vmul.f32 %v1559, 0.0625
  %v1586 = vmul.f32 %v1566, 0.0625
  %v1587 = vmul.f32 %v1577, 0.0625
  %v1588 = vmul.f32 %v1584, 0.0625
  %v1589 = vmul.f32 %v1585, %v1585
  %v1590 = vmul.f32 %v1586, %v1586
  %v1591 = vsub.f32 %v1587, %v1589
  %v1592 = vsub.f32 %v1588, %v1590
  %v1593 = vadd.f32 %v1591, 1e-05
  %v1594 = vadd.f32 %v1592, 1e-05
  %v1595 = vrsqrt.pop %v1593
  %v1596 = vrsqrt.pop %v1594
  %v1598 = vlaneseq
  %v1599 = vshrl.u32 %v1598, 7
  %v1600 = vsub.s32 0, %v1599
  %v1601 = vrot.slane %v1547, %v1600
  %v1602 = vlaneseq
  %v1603 = vshrl.u32 %v1602, 7
  %v1604 = vsub.s32 1, %v1603
  %v1605 = vrot.slane %v1547, %v1604
  %v1608 = vmul.f32 %v1595, %v1601
  %v1609 = vmul.f32 %v1596, %v1605
  %v1610 = vmul.f32 %v1585, %v1608
  %v1611 = vmul.f32 %v1586, %v1609
  %v1614 = vcombine.low %v1610, %v1611
  %v1616 = vunpack.c.l.s4 1966171168
  %v1617 = vunpack.c.0.s8 %v1616
  %v1618 = vlaneseq
  %v1619 = vshrl.u32 %v1618, 7
  %v1620 = vsub.s32 %v1617, %v1619
  %v1621 = vrot.slane %v1614, %v1620
  %v1623 = vunpack.c.l.s4 1966171168
  %v1624 = vunpack.c.0.s8 %v1623
  %v1625 = vlaneseq
  %v1626 = vshrl.u32 %v1625, 7
  %v1627 = vsub.s32 %v1624, %v1626
  %v1628 = vrot.slane %v1621, %v1627
  %v1630 = vsub.f32 %v1548, %v1628
  %v1631 = vlaneseq
  %v1632 = vshrl.u32 %v1631, 7
  %v1633 = vsub.s32 0, %v1632
  %v1634 = vrot.slane %v1608, %v1633
  %v1635 = vlaneseq
  %v1636 = vshrl.u32 %v1635, 7
  %v1637 = vsub.s32 0, %v1636
  %v1638 = vrot.slane %v1609, %v1637
  %v1639 = vmul.f32 %v1549, %v1634
  %v1640 = vmul.f32 %v1550, %v1638
  %v1641 = vmul.f32 %v1551, %v1634
  %v1642 = vmul.f32 %v1552, %v1638
  %v1644 = vlaneseq
  %v1645 = vshrl.u32 %v1644, 7
  %v1646 = vsub.s32 0, %v1645
  %v1647 = vrot.slane %v1630, %v1646
  %v1648 = vlaneseq
  %v1649 = vshrl.u32 %v1648, 7
  %v1650 = vsub.s32 1, %v1649
  %v1651 = vrot.slane %v1630, %v1650
  %v1654 = vadd.f32 %v1639, %v1647
  %v1655 = vadd.f32 %v1640, %v1651
  %v1656 = vadd.f32 %v1641, %v1647
  %v1657 = vadd.f32 %v1642, %v1651
  %v1658 = vld [vmem:[%s9] sm:$0xff]
  %v1659 = vld [vmem:[%s9 + $0x8] sm:$0xff]
  %v1660 = vld [vmem:[%s9 + $0x10] sm:$0xff]
  %v1661 = vld [vmem:[%s9 + $0x18] sm:$0xff]
  %v1662 = vld [vmem:[%s9 + $0x20] sm:$0xff]
  %v1663 = vld [vmem:[%s9 + $0x28] sm:$0xff]
  %v1664 = vld [vmem:[%s9 + $0x30] sm:$0xff]
  %v1665 = vld [vmem:[%s9 + $0x38] sm:$0xff]
  %v1666 = vld [vmem:[%s9 + $0x40] sm:$0xff]
  %v1667 = vld [vmem:[%s9 + $0x48] sm:$0xff]
  %v1668 = vld [vmem:[%s9 + $0x50] sm:$0xff]
  %v1669 = vld [vmem:[%s9 + $0x58] sm:$0xff]
  %v1670 = vld [vmem:[%s9 + $0x60] sm:$0xff]
  %v1671 = vld [vmem:[%s9 + $0x68] sm:$0xff]
  %v1672 = vld [vmem:[%s9 + $0x70] sm:$0xff]
  %v1673 = vld [vmem:[%s9 + $0x78] sm:$0xff]
  %v1674 = vld [vmem:[%s9 + $0x80] sm:$0xff]
  %v1675 = vld [vmem:[%s9 + $0x88] sm:$0xff]
  %v1676 = vld [vmem:[%s9 + $0x90] sm:$0xff]
  %v1677 = vld [vmem:[%s9 + $0x98] sm:$0xff]
  %v1678 = vld [vmem:[%s9 + $0xa0] sm:$0xff]
  %v1679 = vld [vmem:[%s9 + $0xa8] sm:$0xff]
  %v1680 = vld [vmem:[%s9 + $0xb0] sm:$0xff]
  %v1681 = vld [vmem:[%s9 + $0xb8] sm:$0xff]
  %v1682 = vld [vmem:[%s9 + $0xc0] sm:$0xff]
  %v1683 = vld [vmem:[%s9 + $0xc8] sm:$0xff]
  %v1684 = vld [vmem:[%s9 + $0xd0] sm:$0xff]
  %v1685 = vld [vmem:[%s9 + $0xd8] sm:$0xff]
  %v1686 = vld [vmem:[%s9 + $0xe0] sm:$0xff]
  %v1687 = vld [vmem:[%s9 + $0xe8] sm:$0xff]
  %v1688 = vld [vmem:[%s9 + $0xf0] sm:$0xff]
  %v1689 = vld [vmem:[%s9 + $0xf8] sm:$0xff]
  %v1690 = vld [vmem:[%s10] sm:$0x1]
  %v1692 = vlaneseq
  %v1693 = vshrl.u32 %v1692, 7
  %v1694 = vsub.s32 0, %v1693
  %v1695 = vrot.slane %v1690, %v1694
  %1697 = vmatprep.subr.mxu0 0.0
  %v1698 = vand.u32 %v1673, 4294901760
  %1699 = vmatpush1.msra.mxu0 %v1698
  %1700 = vmatprep.subr.mxu0 0.0
  %v1701 = vand.u32 %v1672, 4294901760
  %1702 = vmatpush1.msra.mxu0 %v1701
  %1703 = vmatprep.subr.mxu0 0.0
  %v1704 = vand.u32 %v1671, 4294901760
  %1705 = vmatpush1.msra.mxu0 %v1704
  %1706 = vmatprep.subr.mxu0 0.0
  %v1707 = vand.u32 %v1670, 4294901760
  %1708 = vmatpush1.msra.mxu0 %v1707
  %1709 = vmatprep.subr.mxu0 0.0
  %v1710 = vand.u32 %v1669, 4294901760
  %1711 = vmatpush1.msra.mxu0 %v1710
  %1712 = vmatprep.subr.mxu0 0.0
  %v1713 = vand.u32 %v1668, 4294901760
  %1714 = vmatpush1.msra.mxu0 %v1713
  %1715 = vmatprep.subr.mxu0 0.0
  %v1716 = vand.u32 %v1667, 4294901760
  %1717 = vmatpush1.msra.mxu0 %v1716
  %1718 = vmatprep.subr.mxu0 0.0
  %v1719 = vand.u32 %v1666, 4294901760
  %1720 = vmatpush1.msra.mxu0 %v1719
  %1721 = vmatprep.subr.mxu0 0.0
  %v1722 = vand.u32 %v1665, 4294901760
  %1723 = vmatpush1.msra.mxu0 %v1722
  %1724 = vmatprep.subr.mxu0 0.0
  %v1725 = vand.u32 %v1664, 4294901760
  %1726 = vmatpush1.msra.mxu0 %v1725
  %1727 = vmatprep.subr.mxu0 0.0
  %v1728 = vand.u32 %v1663, 4294901760
  %1729 = vmatpush1.msra.mxu0 %v1728
  %1730 = vmatprep.subr.mxu0 0.0
  %v1731 = vand.u32 %v1662, 4294901760
  %1732 = vmatpush1.msra.mxu0 %v1731
  %1733 = vmatprep.subr.mxu0 0.0
  %v1734 = vand.u32 %v1661, 4294901760
  %1735 = vmatpush1.msra.mxu0 %v1734
  %1736 = vmatprep.subr.mxu0 0.0
  %v1737 = vand.u32 %v1660, 4294901760
  %1738 = vmatpush1.msra.mxu0 %v1737
  %1739 = vmatprep.subr.mxu0 0.0
  %v1740 = vand.u32 %v1659, 4294901760
  %1741 = vmatpush1.msra.mxu0 %v1740
  %1742 = vmatprep.subr.mxu0 0.0
  %v1743 = vand.u32 %v1658, 4294901760
  %1744 = vmatpush1.msra.mxu0 %v1743
  %1745 = vmatprep.subr.mxu0 0.0
  %v1746 = vand.u32 %v1689, 4294901760
  %1747 = vmatpush2.msra.mxu0 %v1746
  %1748 = vmatprep.subr.mxu0 0.0
  %v1749 = vand.u32 %v1688, 4294901760
  %1750 = vmatpush2.msra.mxu0 %v1749
  %1751 = vmatprep.subr.mxu0 0.0
  %v1752 = vand.u32 %v1687, 4294901760
  %1753 = vmatpush2.msra.mxu0 %v1752
  %1754 = vmatprep.subr.mxu0 0.0
  %v1755 = vand.u32 %v1686, 4294901760
  %1756 = vmatpush2.msra.mxu0 %v1755
  %1757 = vmatprep.subr.mxu0 0.0
  %v1758 = vand.u32 %v1685, 4294901760
  %1759 = vmatpush2.msra.mxu0 %v1758
  %1760 = vmatprep.subr.mxu0 0.0
  %v1761 = vand.u32 %v1684, 4294901760
  %1762 = vmatpush2.msra.mxu0 %v1761
  %1763 = vmatprep.subr.mxu0 0.0
  %v1764 = vand.u32 %v1683, 4294901760
  %1765 = vmatpush2.msra.mxu0 %v1764
  %1766 = vmatprep.subr.mxu0 0.0
  %v1767 = vand.u32 %v1682, 4294901760
  %1768 = vmatpush2.msra.mxu0 %v1767
  %1769 = vmatprep.subr.mxu0 0.0
  %v1770 = vand.u32 %v1681, 4294901760
  %1771 = vmatpush2.msra.mxu0 %v1770
  %1772 = vmatprep.subr.mxu0 0.0
  %v1773 = vand.u32 %v1680, 4294901760
  %1774 = vmatpush2.msra.mxu0 %v1773
  %1775 = vmatprep.subr.mxu0 0.0
  %v1776 = vand.u32 %v1679, 4294901760
  %1777 = vmatpush2.msra.mxu0 %v1776
  %1778 = vmatprep.subr.mxu0 0.0
  %v1779 = vand.u32 %v1678, 4294901760
  %1780 = vmatpush2.msra.mxu0 %v1779
  %1781 = vmatprep.subr.mxu0 0.0
  %v1782 = vand.u32 %v1677, 4294901760
  %1783 = vmatpush2.msra.mxu0 %v1782
  %1784 = vmatprep.subr.mxu0 0.0
  %v1785 = vand.u32 %v1676, 4294901760
  %1786 = vmatpush2.msra.mxu0 %v1785
  %1787 = vmatprep.subr.mxu0 0.0
  %v1788 = vand.u32 %v1675, 4294901760
  %1789 = vmatpush2.msra.mxu0 %v1788
  %1790 = vmatprep.subr.mxu0 0.0
  %v1791 = vand.u32 %v1674, 4294901760
  %1792 = vmatpush2.msra.mxu0 %v1791
  %v1793 = vand.u32 %v1655, 4294901760
  %v1794 = vsub.f32 %v1655, %v1793
  %v1795 = vand.u32 %v1794, 4294901760
  %v1796 = vsub.f32 %v1794, %v1795
  %v1797 = vand.u32 %v1796, 4294901760
  %1798 = vmatprep.mubr.f32.mxu0 %v1797
  %v1799 = vand.u32 %v1654, 4294901760
  %v1800 = vsub.f32 %v1654, %v1799
  %v1801 = vand.u32 %v1800, 4294901760
  %v1802 = vsub.f32 %v1800, %v1801
  %v1803 = vand.u32 %v1802, 4294901760
  %1804 = vmatmul.mubr.f32.gmra.mxu0 %v1803
  %v1805 = vpop.f32.mrf.mxu0
  %v1806 = vadd.f32 %v1695, %v1805
  %v1807 = vpop.f32.mrf.mxu0
  %v1808 = vand.u32 %v1657, 4294901760
  %v1809 = vsub.f32 %v1657, %v1808
  %v1810 = vand.u32 %v1809, 4294901760
  %v1811 = vsub.f32 %v1809, %v1810
  %v1812 = vand.u32 %v1811, 4294901760
  %1813 = vmatprep.mubr.f32.mxu0 %v1812
  %v1814 = vand.u32 %v1656, 4294901760
  %v1815 = vsub.f32 %v1656, %v1814
  %v1816 = vand.u32 %v1815, 4294901760
  %v1817 = vsub.f32 %v1815, %v1816
  %v1818 = vand.u32 %v1817, 4294901760
  %1819 = vmatmul.mubr.f32.gmra.mxu0 %v1818
  %v1820 = vpop.f32.mrf.mxu0
  %v1821 = vadd.f32 %v1695, %v1820
  %v1822 = vpop.f32.mrf.mxu0
  %1823 = vdwg.mxu0
  %1824 = vmatprep.subr.mxu0 0.0
  %v1825 = vand.u32 %v1673, 4294901760
  %v1826 = vsub.f32 %v1673, %v1825
  %v1827 = vand.u32 %v1826, 4294901760
  %v1828 = vsub.f32 %v1826, %v1827
  %v1829 = vand.u32 %v1828, 4294901760
  %1830 = vmatpush1.msra.mxu0 %v1829
  %1831 = vmatprep.subr.mxu0 0.0
  %v1832 = vand.u32 %v1672, 4294901760
  %v1833 = vsub.f32 %v1672, %v1832
  %v1834 = vand.u32 %v1833, 4294901760
  %v1835 = vsub.f32 %v1833, %v1834
  %v1836 = vand.u32 %v1835, 4294901760
  %1837 = vmatpush1.msra.mxu0 %v1836
  %1838 = vmatprep.subr.mxu0 0.0
  %v1839 = vand.u32 %v1671, 4294901760
  %v1840 = vsub.f32 %v1671, %v1839
  %v1841 = vand.u32 %v1840, 4294901760
  %v1842 = vsub.f32 %v1840, %v1841
  %v1843 = vand.u32 %v1842, 4294901760
  %1844 = vmatpush1.msra.mxu0 %v1843
  %1845 = vmatprep.subr.mxu0 0.0
  %v1846 = vand.u32 %v1670, 4294901760
  %v1847 = vsub.f32 %v1670, %v1846
  %v1848 = vand.u32 %v1847, 4294901760
  %v1849 = vsub.f32 %v1847, %v1848
  %v1850 = vand.u32 %v1849, 4294901760
  %1851 = vmatpush1.msra.mxu0 %v1850
  %1852 = vmatprep.subr.mxu0 0.0
  %v1853 = vand.u32 %v1669, 4294901760
  %v1854 = vsub.f32 %v1669, %v1853
  %v1855 = vand.u32 %v1854, 4294901760
  %v1856 = vsub.f32 %v1854, %v1855
  %v1857 = vand.u32 %v1856, 4294901760
  %1858 = vmatpush1.msra.mxu0 %v1857
  %1859 = vmatprep.subr.mxu0 0.0
  %v1860 = vand.u32 %v1668, 4294901760
  %v1861 = vsub.f32 %v1668, %v1860
  %v1862 = vand.u32 %v1861, 4294901760
  %v1863 = vsub.f32 %v1861, %v1862
  %v1864 = vand.u32 %v1863, 4294901760
  %1865 = vmatpush1.msra.mxu0 %v1864
  %1866 = vmatprep.subr.mxu0 0.0
  %v1867 = vand.u32 %v1667, 4294901760
  %v1868 = vsub.f32 %v1667, %v1867
  %v1869 = vand.u32 %v1868, 4294901760
  %v1870 = vsub.f32 %v1868, %v1869
  %v1871 = vand.u32 %v1870, 4294901760
  %1872 = vmatpush1.msra.mxu0 %v1871
  %1873 = vmatprep.subr.mxu0 0.0
  %v1874 = vand.u32 %v1666, 4294901760
  %v1875 = vsub.f32 %v1666, %v1874
  %v1876 = vand.u32 %v1875, 4294901760
  %v1877 = vsub.f32 %v1875, %v1876
  %v1878 = vand.u32 %v1877, 4294901760
  %1879 = vmatpush1.msra.mxu0 %v1878
  %1880 = vmatprep.subr.mxu0 0.0
  %v1881 = vand.u32 %v1665, 4294901760
  %v1882 = vsub.f32 %v1665, %v1881
  %v1883 = vand.u32 %v1882, 4294901760
  %v1884 = vsub.f32 %v1882, %v1883
  %v1885 = vand.u32 %v1884, 4294901760
  %1886 = vmatpush1.msra.mxu0 %v1885
  %1887 = vmatprep.subr.mxu0 0.0
  %v1888 = vand.u32 %v1664, 4294901760
  %v1889 = vsub.f32 %v1664, %v1888
  %v1890 = vand.u32 %v1889, 4294901760
  %v1891 = vsub.f32 %v1889, %v1890
  %v1892 = vand.u32 %v1891, 4294901760
  %1893 = vmatpush1.msra.mxu0 %v1892
  %1894 = vmatprep.subr.mxu0 0.0
  %v1895 = vand.u32 %v1663, 4294901760
  %v1896 = vsub.f32 %v1663, %v1895
  %v1897 = vand.u32 %v1896, 4294901760
  %v1898 = vsub.f32 %v1896, %v1897
  %v1899 = vand.u32 %v1898, 4294901760
  %1900 = vmatpush1.msra.mxu0 %v1899
  %1901 = vmatprep.subr.mxu0 0.0
  %v1902 = vand.u32 %v1662, 4294901760
  %v1903 = vsub.f32 %v1662, %v1902
  %v1904 = vand.u32 %v1903, 4294901760
  %v1905 = vsub.f32 %v1903, %v1904
  %v1906 = vand.u32 %v1905, 4294901760
  %1907 = vmatpush1.msra.mxu0 %v1906
  %1908 = vmatprep.subr.mxu0 0.0
  %v1909 = vand.u32 %v1661, 4294901760
  %v1910 = vsub.f32 %v1661, %v1909
  %v1911 = vand.u32 %v1910, 4294901760
  %v1912 = vsub.f32 %v1910, %v1911
  %v1913 = vand.u32 %v1912, 4294901760
  %1914 = vmatpush1.msra.mxu0 %v1913
  %1915 = vmatprep.subr.mxu0 0.0
  %v1916 = vand.u32 %v1660, 4294901760
  %v1917 = vsub.f32 %v1660, %v1916
  %v1918 = vand.u32 %v1917, 4294901760
  %v1919 = vsub.f32 %v1917, %v1918
  %v1920 = vand.u32 %v1919, 4294901760
  %1921 = vmatpush1.msra.mxu0 %v1920
  %1922 = vmatprep.subr.mxu0 0.0
  %v1923 = vand.u32 %v1659, 4294901760
  %v1924 = vsub.f32 %v1659, %v1923
  %v1925 = vand.u32 %v1924, 4294901760
  %v1926 = vsub.f32 %v1924, %v1925
  %v1927 = vand.u32 %v1926, 4294901760
  %1928 = vmatpush1.msra.mxu0 %v1927
  %1929 = vmatprep.subr.mxu0 0.0
  %v1930 = vand.u32 %v1658, 4294901760
  %v1931 = vsub.f32 %v1658, %v1930
  %v1932 = vand.u32 %v1931, 4294901760
  %v1933 = vsub.f32 %v1931, %v1932
  %v1934 = vand.u32 %v1933, 4294901760
  %1935 = vmatpush1.msra.mxu0 %v1934
  %1936 = vmatprep.subr.mxu0 0.0
  %v1937 = vand.u32 %v1689, 4294901760
  %v1938 = vsub.f32 %v1689, %v1937
  %v1939 = vand.u32 %v1938, 4294901760
  %v1940 = vsub.f32 %v1938, %v1939
  %v1941 = vand.u32 %v1940, 4294901760
  %1942 = vmatpush2.msra.mxu0 %v1941
  %1943 = vmatprep.subr.mxu0 0.0
  %v1944 = vand.u32 %v1688, 4294901760
  %v1945 = vsub.f32 %v1688, %v1944
  %v1946 = vand.u32 %v1945, 4294901760
  %v1947 = vsub.f32 %v1945, %v1946
  %v1948 = vand.u32 %v1947, 4294901760
  %1949 = vmatpush2.msra.mxu0 %v1948
  %1950 = vmatprep.subr.mxu0 0.0
  %v1951 = vand.u32 %v1687, 4294901760
  %v1952 = vsub.f32 %v1687, %v1951
  %v1953 = vand.u32 %v1952, 4294901760
  %v1954 = vsub.f32 %v1952, %v1953
  %v1955 = vand.u32 %v1954, 4294901760
  %1956 = vmatpush2.msra.mxu0 %v1955
  %1957 = vmatprep.subr.mxu0 0.0
  %v1958 = vand.u32 %v1686, 4294901760
  %v1959 = vsub.f32 %v1686, %v1958
  %v1960 = vand.u32 %v1959, 4294901760
  %v1961 = vsub.f32 %v1959, %v1960
  %v1962 = vand.u32 %v1961, 4294901760
  %1963 = vmatpush2.msra.mxu0 %v1962
  %1964 = vmatprep.subr.mxu0 0.0
  %v1965 = vand.u32 %v1685, 4294901760
  %v1966 = vsub.f32 %v1685, %v1965
  %v1967 = vand.u32 %v1966, 4294901760
  %v1968 = vsub.f32 %v1966, %v1967
  %v1969 = vand.u32 %v1968, 4294901760
  %1970 = vmatpush2.msra.mxu0 %v1969
  %1971 = vmatprep.subr.mxu0 0.0
  %v1972 = vand.u32 %v1684, 4294901760
  %v1973 = vsub.f32 %v1684, %v1972
  %v1974 = vand.u32 %v1973, 4294901760
  %v1975 = vsub.f32 %v1973, %v1974
  %v1976 = vand.u32 %v1975, 4294901760
  %1977 = vmatpush2.msra.mxu0 %v1976
  %1978 = vmatprep.subr.mxu0 0.0
  %v1979 = vand.u32 %v1683, 4294901760
  %v1980 = vsub.f32 %v1683, %v1979
  %v1981 = vand.u32 %v1980, 4294901760
  %v1982 = vsub.f32 %v1980, %v1981
  %v1983 = vand.u32 %v1982, 4294901760
  %1984 = vmatpush2.msra.mxu0 %v1983
  %1985 = vmatprep.subr.mxu0 0.0
  %v1986 = vand.u32 %v1682, 4294901760
  %v1987 = vsub.f32 %v1682, %v1986
  %v1988 = vand.u32 %v1987, 4294901760
  %v1989 = vsub.f32 %v1987, %v1988
  %v1990 = vand.u32 %v1989, 4294901760
  %1991 = vmatpush2.msra.mxu0 %v1990
  %1992 = vmatprep.subr.mxu0 0.0
  %v1993 = vand.u32 %v1681, 4294901760
  %v1994 = vsub.f32 %v1681, %v1993
  %v1995 = vand.u32 %v1994, 4294901760
  %v1996 = vsub.f32 %v1994, %v1995
  %v1997 = vand.u32 %v1996, 4294901760
  %1998 = vmatpush2.msra.mxu0 %v1997
  %1999 = vmatprep.subr.mxu0 0.0
  %v2000 = vand.u32 %v1680, 4294901760
  %v2001 = vsub.f32 %v1680, %v2000
  %v2002 = vand.u32 %v2001, 4294901760
  %v2003 = vsub.f32 %v2001, %v2002
  %v2004 = vand.u32 %v2003, 4294901760
  %2005 = vmatpush2.msra.mxu0 %v2004
  %2006 = vmatprep.subr.mxu0 0.0
  %v2007 = vand.u32 %v1679, 4294901760
  %v2008 = vsub.f32 %v1679, %v2007
  %v2009 = vand.u32 %v2008, 4294901760
  %v2010 = vsub.f32 %v2008, %v2009
  %v2011 = vand.u32 %v2010, 4294901760
  %2012 = vmatpush2.msra.mxu0 %v2011
  %2013 = vmatprep.subr.mxu0 0.0
  %v2014 = vand.u32 %v1678, 4294901760
  %v2015 = vsub.f32 %v1678, %v2014
  %v2016 = vand.u32 %v2015, 4294901760
  %v2017 = vsub.f32 %v2015, %v2016
  %v2018 = vand.u32 %v2017, 4294901760
  %2019 = vmatpush2.msra.mxu0 %v2018
  %2020 = vmatprep.subr.mxu0 0.0
  %v2021 = vand.u32 %v1677, 4294901760
  %v2022 = vsub.f32 %v1677, %v2021
  %v2023 = vand.u32 %v2022, 4294901760
  %v2024 = vsub.f32 %v2022, %v2023
  %v2025 = vand.u32 %v2024, 4294901760
  %2026 = vmatpush2.msra.mxu0 %v2025
  %2027 = vmatprep.subr.mxu0 0.0
  %v2028 = vand.u32 %v1676, 4294901760
  %v2029 = vsub.f32 %v1676, %v2028
  %v2030 = vand.u32 %v2029, 4294901760
  %v2031 = vsub.f32 %v2029, %v2030
  %v2032 = vand.u32 %v2031, 4294901760
  %2033 = vmatpush2.msra.mxu0 %v2032
  %2034 = vmatprep.subr.mxu0 0.0
  %v2035 = vand.u32 %v1675, 4294901760
  %v2036 = vsub.f32 %v1675, %v2035
  %v2037 = vand.u32 %v2036, 4294901760
  %v2038 = vsub.f32 %v2036, %v2037
  %v2039 = vand.u32 %v2038, 4294901760
  %2040 = vmatpush2.msra.mxu0 %v2039
  %2041 = vmatprep.subr.mxu0 0.0
  %v2042 = vand.u32 %v1674, 4294901760
  %v2043 = vsub.f32 %v1674, %v2042
  %v2044 = vand.u32 %v2043, 4294901760
  %v2045 = vsub.f32 %v2043, %v2044
  %v2046 = vand.u32 %v2045, 4294901760
  %2047 = vmatpush2.msra.mxu0 %v2046
  %v2048 = vand.u32 %v1655, 4294901760
  %2049 = vmatprep.mubr.f32.mxu0 %v2048
  %v2050 = vand.u32 %v1654, 4294901760
  %2051 = vmatmul.mubr.f32.gmra.mxu0 %v2050
  %v2052 = vpop.f32.mrf.mxu0
  %v2053 = vadd.f32 %v1806, %v2052
  %v2054 = vpop.f32.mrf.mxu0
  %v2055 = vand.u32 %v1657, 4294901760
  %2056 = vmatprep.mubr.f32.mxu0 %v2055
  %v2057 = vand.u32 %v1656, 4294901760
  %2058 = vmatmul.mubr.f32.gmra.mxu0 %v2057
  %v2059 = vpop.f32.mrf.mxu0
  %v2060 = vadd.f32 %v1821, %v2059
  %v2061 = vpop.f32.mrf.mxu0
  %2062 = vdwg.mxu0
  %2063 = vmatprep.subr.mxu0 0.0
  %v2064 = vand.u32 %v1673, 4294901760
  %v2065 = vsub.f32 %v1673, %v2064
  %2066 = vmatpush1.msra.mxu0 %v2065
  %2067 = vmatprep.subr.mxu0 0.0
  %v2068 = vand.u32 %v1672, 4294901760
  %v2069 = vsub.f32 %v1672, %v2068
  %2070 = vmatpush1.msra.mxu0 %v2069
  %2071 = vmatprep.subr.mxu0 0.0
  %v2072 = vand.u32 %v1671, 4294901760
  %v2073 = vsub.f32 %v1671, %v2072
  %2074 = vmatpush1.msra.mxu0 %v2073
  %2075 = vmatprep.subr.mxu0 0.0
  %v2076 = vand.u32 %v1670, 4294901760
  %v2077 = vsub.f32 %v1670, %v2076
  %2078 = vmatpush1.msra.mxu0 %v2077
  %2079 = vmatprep.subr.mxu0 0.0
  %v2080 = vand.u32 %v1669, 4294901760
  %v2081 = vsub.f32 %v1669, %v2080
  %2082 = vmatpush1.msra.mxu0 %v2081
  %2083 = vmatprep.subr.mxu0 0.0
  %v2084 = vand.u32 %v1668, 4294901760
  %v2085 = vsub.f32 %v1668, %v2084
  %2086 = vmatpush1.msra.mxu0 %v2085
  %2087 = vmatprep.subr.mxu0 0.0
  %v2088 = vand.u32 %v1667, 4294901760
  %v2089 = vsub.f32 %v1667, %v2088
  %2090 = vmatpush1.msra.mxu0 %v2089
  %2091 = vmatprep.subr.mxu0 0.0
  %v2092 = vand.u32 %v1666, 4294901760
  %v2093 = vsub.f32 %v1666, %v2092
  %2094 = vmatpush1.msra.mxu0 %v2093
  %2095 = vmatprep.subr.mxu0 0.0
  %v2096 = vand.u32 %v1665, 4294901760
  %v2097 = vsub.f32 %v1665, %v2096
  %2098 = vmatpush1.msra.mxu0 %v2097
  %2099 = vmatprep.subr.mxu0 0.0
  %v2100 = vand.u32 %v1664, 4294901760
  %v2101 = vsub.f32 %v1664, %v2100
  %2102 = vmatpush1.msra.mxu0 %v2101
  %2103 = vmatprep.subr.mxu0 0.0
  %v2104 = vand.u32 %v1663, 4294901760
  %v2105 = vsub.f32 %v1663, %v2104
  %2106 = vmatpush1.msra.mxu0 %v2105
  %2107 = vmatprep.subr.mxu0 0.0
  %v2108 = vand.u32 %v1662, 4294901760
  %v2109 = vsub.f32 %v1662, %v2108
  %2110 = vmatpush1.msra.mxu0 %v2109
  %2111 = vmatprep.subr.mxu0 0.0
  %v2112 = vand.u32 %v1661, 4294901760
  %v2113 = vsub.f32 %v1661, %v2112
  %2114 = vmatpush1.msra.mxu0 %v2113
  %2115 = vmatprep.subr.mxu0 0.0
  %v2116 = vand.u32 %v1660, 4294901760
  %v2117 = vsub.f32 %v1660, %v2116
  %2118 = vmatpush1.msra.mxu0 %v2117
  %2119 = vmatprep.subr.mxu0 0.0
  %v2120 = vand.u32 %v1659, 4294901760
  %v2121 = vsub.f32 %v1659, %v2120
  %2122 = vmatpush1.msra.mxu0 %v2121
  %2123 = vmatprep.subr.mxu0 0.0
  %v2124 = vand.u32 %v1658, 4294901760
  %v2125 = vsub.f32 %v1658, %v2124
  %2126 = vmatpush1.msra.mxu0 %v2125
  %2127 = vmatprep.subr.mxu0 0.0
  %v2128 = vand.u32 %v1689, 4294901760
  %v2129 = vsub.f32 %v1689, %v2128
  %2130 = vmatpush2.msra.mxu0 %v2129
  %2131 = vmatprep.subr.mxu0 0.0
  %v2132 = vand.u32 %v1688, 4294901760
  %v2133 = vsub.f32 %v1688, %v2132
  %2134 = vmatpush2.msra.mxu0 %v2133
  %2135 = vmatprep.subr.mxu0 0.0
  %v2136 = vand.u32 %v1687, 4294901760
  %v2137 = vsub.f32 %v1687, %v2136
  %2138 = vmatpush2.msra.mxu0 %v2137
  %2139 = vmatprep.subr.mxu0 0.0
  %v2140 = vand.u32 %v1686, 4294901760
  %v2141 = vsub.f32 %v1686, %v2140
  %2142 = vmatpush2.msra.mxu0 %v2141
  %2143 = vmatprep.subr.mxu0 0.0
  %v2144 = vand.u32 %v1685, 4294901760
  %v2145 = vsub.f32 %v1685, %v2144
  %2146 = vmatpush2.msra.mxu0 %v2145
  %2147 = vmatprep.subr.mxu0 0.0
  %v2148 = vand.u32 %v1684, 4294901760
  %v2149 = vsub.f32 %v1684, %v2148
  %2150 = vmatpush2.msra.mxu0 %v2149
  %2151 = vmatprep.subr.mxu0 0.0
  %v2152 = vand.u32 %v1683, 4294901760
  %v2153 = vsub.f32 %v1683, %v2152
  %2154 = vmatpush2.msra.mxu0 %v2153
  %2155 = vmatprep.subr.mxu0 0.0
  %v2156 = vand.u32 %v1682, 4294901760
  %v2157 = vsub.f32 %v1682, %v2156
  %2158 = vmatpush2.msra.mxu0 %v2157
  %2159 = vmatprep.subr.mxu0 0.0
  %v2160 = vand.u32 %v1681, 4294901760
  %v2161 = vsub.f32 %v1681, %v2160
  %2162 = vmatpush2.msra.mxu0 %v2161
  %2163 = vmatprep.subr.mxu0 0.0
  %v2164 = vand.u32 %v1680, 4294901760
  %v2165 = vsub.f32 %v1680, %v2164
  %2166 = vmatpush2.msra.mxu0 %v2165
  %2167 = vmatprep.subr.mxu0 0.0
  %v2168 = vand.u32 %v1679, 4294901760
  %v2169 = vsub.f32 %v1679, %v2168
  %2170 = vmatpush2.msra.mxu0 %v2169
  %2171 = vmatprep.subr.mxu0 0.0
  %v2172 = vand.u32 %v1678, 4294901760
  %v2173 = vsub.f32 %v1678, %v2172
  %2174 = vmatpush2.msra.mxu0 %v2173
  %2175 = vmatprep.subr.mxu0 0.0
  %v2176 = vand.u32 %v1677, 4294901760
  %v2177 = vsub.f32 %v1677, %v2176
  %2178 = vmatpush2.msra.mxu0 %v2177
  %2179 = vmatprep.subr.mxu0 0.0
  %v2180 = vand.u32 %v1676, 4294901760
  %v2181 = vsub.f32 %v1676, %v2180
  %2182 = vmatpush2.msra.mxu0 %v2181
  %2183 = vmatprep.subr.mxu0 0.0
  %v2184 = vand.u32 %v1675, 4294901760
  %v2185 = vsub.f32 %v1675, %v2184
  %2186 = vmatpush2.msra.mxu0 %v2185
  %2187 = vmatprep.subr.mxu0 0.0
  %v2188 = vand.u32 %v1674, 4294901760
  %v2189 = vsub.f32 %v1674, %v2188
  %2190 = vmatpush2.msra.mxu0 %v2189
  %v2191 = vand.u32 %v1655, 4294901760
  %v2192 = vsub.f32 %v1655, %v2191
  %2193 = vmatprep.mubr.f32.mxu0 %v2192
  %v2194 = vand.u32 %v1654, 4294901760
  %v2195 = vsub.f32 %v1654, %v2194
  %2196 = vmatmul.mubr.f32.gmra.mxu0 %v2195
  %v2197 = vpop.f32.mrf.mxu0
  %v2198 = vadd.f32 %v2053, %v2197
  %v2199 = vpop.f32.mrf.mxu0
  %v2200 = vand.u32 %v1657, 4294901760
  %v2201 = vsub.f32 %v1657, %v2200
  %2202 = vmatprep.mubr.f32.mxu0 %v2201
  %v2203 = vand.u32 %v1656, 4294901760
  %v2204 = vsub.f32 %v1656, %v2203
  %2205 = vmatmul.mubr.f32.gmra.mxu0 %v2204
  %v2206 = vpop.f32.mrf.mxu0
  %v2207 = vadd.f32 %v2060, %v2206
  %v2208 = vpop.f32.mrf.mxu0
  %2209 = vdwg.mxu0
  %2210 = vmatprep.subr.mxu0 0.0
  %v2211 = vand.u32 %v1673, 4294901760
  %2212 = vmatpush1.msra.mxu0 %v2211
  %2213 = vmatprep.subr.mxu0 0.0
  %v2214 = vand.u32 %v1672, 4294901760
  %2215 = vmatpush1.msra.mxu0 %v2214
  %2216 = vmatprep.subr.mxu0 0.0
  %v2217 = vand.u32 %v1671, 4294901760
  %2218 = vmatpush1.msra.mxu0 %v2217
  %2219 = vmatprep.subr.mxu0 0.0
  %v2220 = vand.u32 %v1670, 4294901760
  %2221 = vmatpush1.msra.mxu0 %v2220
  %2222 = vmatprep.subr.mxu0 0.0
  %v2223 = vand.u32 %v1669, 4294901760
  %2224 = vmatpush1.msra.mxu0 %v2223
  %2225 = vmatprep.subr.mxu0 0.0
  %v2226 = vand.u32 %v1668, 4294901760
  %2227 = vmatpush1.msra.mxu0 %v2226
  %2228 = vmatprep.subr.mxu0 0.0
  %v2229 = vand.u32 %v1667, 4294901760
  %2230 = vmatpush1.msra.mxu0 %v2229
  %2231 = vmatprep.subr.mxu0 0.0
  %v2232 = vand.u32 %v1666, 4294901760
  %2233 = vmatpush1.msra.mxu0 %v2232
  %2234 = vmatprep.subr.mxu0 0.0
  %v2235 = vand.u32 %v1665, 4294901760
  %2236 = vmatpush1.msra.mxu0 %v2235
  %2237 = vmatprep.subr.mxu0 0.0
  %v2238 = vand.u32 %v1664, 4294901760
  %2239 = vmatpush1.msra.mxu0 %v2238
  %2240 = vmatprep.subr.mxu0 0.0
  %v2241 = vand.u32 %v1663, 4294901760
  %2242 = vmatpush1.msra.mxu0 %v2241
  %2243 = vmatprep.subr.mxu0 0.0
  %v2244 = vand.u32 %v1662, 4294901760
  %2245 = vmatpush1.msra.mxu0 %v2244
  %2246 = vmatprep.subr.mxu0 0.0
  %v2247 = vand.u32 %v1661, 4294901760
  %2248 = vmatpush1.msra.mxu0 %v2247
  %2249 = vmatprep.subr.mxu0 0.0
  %v2250 = vand.u32 %v1660, 4294901760
  %2251 = vmatpush1.msra.mxu0 %v2250
  %2252 = vmatprep.subr.mxu0 0.0
  %v2253 = vand.u32 %v1659, 4294901760
  %2254 = vmatpush1.msra.mxu0 %v2253
  %2255 = vmatprep.subr.mxu0 0.0
  %v2256 = vand.u32 %v1658, 4294901760
  %2257 = vmatpush1.msra.mxu0 %v2256
  %2258 = vmatprep.subr.mxu0 0.0
  %v2259 = vand.u32 %v1689, 4294901760
  %2260 = vmatpush2.msra.mxu0 %v2259
  %2261 = vmatprep.subr.mxu0 0.0
  %v2262 = vand.u32 %v1688, 4294901760
  %2263 = vmatpush2.msra.mxu0 %v2262
  %2264 = vmatprep.subr.mxu0 0.0
  %v2265 = vand.u32 %v1687, 4294901760
  %2266 = vmatpush2.msra.mxu0 %v2265
  %2267 = vmatprep.subr.mxu0 0.0
  %v2268 = vand.u32 %v1686, 4294901760
  %2269 = vmatpush2.msra.mxu0 %v2268
  %2270 = vmatprep.subr.mxu0 0.0
  %v2271 = vand.u32 %v1685, 4294901760
  %2272 = vmatpush2.msra.mxu0 %v2271
  %2273 = vmatprep.subr.mxu0 0.0
  %v2274 = vand.u32 %v1684, 4294901760
  %2275 = vmatpush2.msra.mxu0 %v2274
  %2276 = vmatprep.subr.mxu0 0.0
  %v2277 = vand.u32 %v1683, 4294901760
  %2278 = vmatpush2.msra.mxu0 %v2277
  %2279 = vmatprep.subr.mxu0 0.0
  %v2280 = vand.u32 %v1682, 4294901760
  %2281 = vmatpush2.msra.mxu0 %v2280
  %2282 = vmatprep.subr.mxu0 0.0
  %v2283 = vand.u32 %v1681, 4294901760
  %2284 = vmatpush2.msra.mxu0 %v2283
  %2285 = vmatprep.subr.mxu0 0.0
  %v2286 = vand.u32 %v1680, 4294901760
  %2287 = vmatpush2.msra.mxu0 %v2286
  %2288 = vmatprep.subr.mxu0 0.0
  %v2289 = vand.u32 %v1679, 4294901760
  %2290 = vmatpush2.msra.mxu0 %v2289
  %2291 = vmatprep.subr.mxu0 0.0
  %v2292 = vand.u32 %v1678, 4294901760
  %2293 = vmatpush2.msra.mxu0 %v2292
  %2294 = vmatprep.subr.mxu0 0.0
  %v2295 = vand.u32 %v1677, 4294901760
  %2296 = vmatpush2.msra.mxu0 %v2295
  %2297 = vmatprep.subr.mxu0 0.0
  %v2298 = vand.u32 %v1676, 4294901760
  %2299 = vmatpush2.msra.mxu0 %v2298
  %2300 = vmatprep.subr.mxu0 0.0
  %v2301 = vand.u32 %v1675, 4294901760
  %2302 = vmatpush2.msra.mxu0 %v2301
  %2303 = vmatprep.subr.mxu0 0.0
  %v2304 = vand.u32 %v1674, 4294901760
  %2305 = vmatpush2.msra.mxu0 %v2304
  %v2306 = vand.u32 %v1655, 4294901760
  %v2307 = vsub.f32 %v1655, %v2306
  %v2308 = vand.u32 %v2307, 4294901760
  %2309 = vmatprep.mubr.f32.mxu0 %v2308
  %v2310 = vand.u32 %v1654, 4294901760
  %v2311 = vsub.f32 %v1654, %v2310
  %v2312 = vand.u32 %v2311, 4294901760
  %2313 = vmatmul.mubr.f32.gmra.mxu0 %v2312
  %v2314 = vpop.f32.mrf.mxu0
  %v2315 = vadd.f32 %v2198, %v2314
  %v2316 = vpop.f32.mrf.mxu0
  %v2317 = vand.u32 %v1657, 4294901760
  %v2318 = vsub.f32 %v1657, %v2317
  %v2319 = vand.u32 %v2318, 4294901760
  %2320 = vmatprep.mubr.f32.mxu0 %v2319
  %v2321 = vand.u32 %v1656, 4294901760
  %v2322 = vsub.f32 %v1656, %v2321
  %v2323 = vand.u32 %v2322, 4294901760
  %2324 = vmatmul.mubr.f32.gmra.mxu0 %v2323
  %v2325 = vpop.f32.mrf.mxu0
  %v2326 = vadd.f32 %v2207, %v2325
  %v2327 = vpop.f32.mrf.mxu0
  %2328 = vdwg.mxu0
  %2329 = vmatprep.subr.mxu0 0.0
  %v2330 = vand.u32 %v1673, 4294901760
  %v2331 = vsub.f32 %v1673, %v2330
  %v2332 = vand.u32 %v2331, 4294901760
  %2333 = vmatpush1.msra.mxu0 %v2332
  %2334 = vmatprep.subr.mxu0 0.0
  %v2335 = vand.u32 %v1672, 4294901760
  %v2336 = vsub.f32 %v1672, %v2335
  %v2337 = vand.u32 %v2336, 4294901760
  %2338 = vmatpush1.msra.mxu0 %v2337
  %2339 = vmatprep.subr.mxu0 0.0
  %v2340 = vand.u32 %v1671, 4294901760
  %v2341 = vsub.f32 %v1671, %v2340
  %v2342 = vand.u32 %v2341, 4294901760
  %2343 = vmatpush1.msra.mxu0 %v2342
  %2344 = vmatprep.subr.mxu0 0.0
  %v2345 = vand.u32 %v1670, 4294901760
  %v2346 = vsub.f32 %v1670, %v2345
  %v2347 = vand.u32 %v2346, 4294901760
  %2348 = vmatpush1.msra.mxu0 %v2347
  %2349 = vmatprep.subr.mxu0 0.0
  %v2350 = vand.u32 %v1669, 4294901760
  %v2351 = vsub.f32 %v1669, %v2350
  %v2352 = vand.u32 %v2351, 4294901760
  %2353 = vmatpush1.msra.mxu0 %v2352
  %2354 = vmatprep.subr.mxu0 0.0
  %v2355 = vand.u32 %v1668, 4294901760
  %v2356 = vsub.f32 %v1668, %v2355
  %v2357 = vand.u32 %v2356, 4294901760
  %2358 = vmatpush1.msra.mxu0 %v2357
  %2359 = vmatprep.subr.mxu0 0.0
  %v2360 = vand.u32 %v1667, 4294901760
  %v2361 = vsub.f32 %v1667, %v2360
  %v2362 = vand.u32 %v2361, 4294901760
  %2363 = vmatpush1.msra.mxu0 %v2362
  %2364 = vmatprep.subr.mxu0 0.0
  %v2365 = vand.u32 %v1666, 4294901760
  %v2366 = vsub.f32 %v1666, %v2365
  %v2367 = vand.u32 %v2366, 4294901760
  %2368 = vmatpush1.msra.mxu0 %v2367
  %2369 = vmatprep.subr.mxu0 0.0
  %v2370 = vand.u32 %v1665, 4294901760
  %v2371 = vsub.f32 %v1665, %v2370
  %v2372 = vand.u32 %v2371, 4294901760
  %2373 = vmatpush1.msra.mxu0 %v2372
  %2374 = vmatprep.subr.mxu0 0.0
  %v2375 = vand.u32 %v1664, 4294901760
  %v2376 = vsub.f32 %v1664, %v2375
  %v2377 = vand.u32 %v2376, 4294901760
  %2378 = vmatpush1.msra.mxu0 %v2377
  %2379 = vmatprep.subr.mxu0 0.0
  %v2380 = vand.u32 %v1663, 4294901760
  %v2381 = vsub.f32 %v1663, %v2380
  %v2382 = vand.u32 %v2381, 4294901760
  %2383 = vmatpush1.msra.mxu0 %v2382
  %2384 = vmatprep.subr.mxu0 0.0
  %v2385 = vand.u32 %v1662, 4294901760
  %v2386 = vsub.f32 %v1662, %v2385
  %v2387 = vand.u32 %v2386, 4294901760
  %2388 = vmatpush1.msra.mxu0 %v2387
  %2389 = vmatprep.subr.mxu0 0.0
  %v2390 = vand.u32 %v1661, 4294901760
  %v2391 = vsub.f32 %v1661, %v2390
  %v2392 = vand.u32 %v2391, 4294901760
  %2393 = vmatpush1.msra.mxu0 %v2392
  %2394 = vmatprep.subr.mxu0 0.0
  %v2395 = vand.u32 %v1660, 4294901760
  %v2396 = vsub.f32 %v1660, %v2395
  %v2397 = vand.u32 %v2396, 4294901760
  %2398 = vmatpush1.msra.mxu0 %v2397
  %2399 = vmatprep.subr.mxu0 0.0
  %v2400 = vand.u32 %v1659, 4294901760
  %v2401 = vsub.f32 %v1659, %v2400
  %v2402 = vand.u32 %v2401, 4294901760
  %2403 = vmatpush1.msra.mxu0 %v2402
  %2404 = vmatprep.subr.mxu0 0.0
  %v2405 = vand.u32 %v1658, 4294901760
  %v2406 = vsub.f32 %v1658, %v2405
  %v2407 = vand.u32 %v2406, 4294901760
  %2408 = vmatpush1.msra.mxu0 %v2407
  %2409 = vmatprep.subr.mxu0 0.0
  %v2410 = vand.u32 %v1689, 4294901760
  %v2411 = vsub.f32 %v1689, %v2410
  %v2412 = vand.u32 %v2411, 4294901760
  %2413 = vmatpush2.msra.mxu0 %v2412
  %2414 = vmatprep.subr.mxu0 0.0
  %v2415 = vand.u32 %v1688, 4294901760
  %v2416 = vsub.f32 %v1688, %v2415
  %v2417 = vand.u32 %v2416, 4294901760
  %2418 = vmatpush2.msra.mxu0 %v2417
  %2419 = vmatprep.subr.mxu0 0.0
  %v2420 = vand.u32 %v1687, 4294901760
  %v2421 = vsub.f32 %v1687, %v2420
  %v2422 = vand.u32 %v2421, 4294901760
  %2423 = vmatpush2.msra.mxu0 %v2422
  %2424 = vmatprep.subr.mxu0 0.0
  %v2425 = vand.u32 %v1686, 4294901760
  %v2426 = vsub.f32 %v1686, %v2425
  %v2427 = vand.u32 %v2426, 4294901760
  %2428 = vmatpush2.msra.mxu0 %v2427
  %2429 = vmatprep.subr.mxu0 0.0
  %v2430 = vand.u32 %v1685, 4294901760
  %v2431 = vsub.f32 %v1685, %v2430
  %v2432 = vand.u32 %v2431, 4294901760
  %2433 = vmatpush2.msra.mxu0 %v2432
  %2434 = vmatprep.subr.mxu0 0.0
  %v2435 = vand.u32 %v1684, 4294901760
  %v2436 = vsub.f32 %v1684, %v2435
  %v2437 = vand.u32 %v2436, 4294901760
  %2438 = vmatpush2.msra.mxu0 %v2437
  %2439 = vmatprep.subr.mxu0 0.0
  %v2440 = vand.u32 %v1683, 4294901760
  %v2441 = vsub.f32 %v1683, %v2440
  %v2442 = vand.u32 %v2441, 4294901760
  %2443 = vmatpush2.msra.mxu0 %v2442
  %2444 = vmatprep.subr.mxu0 0.0
  %v2445 = vand.u32 %v1682, 4294901760
  %v2446 = vsub.f32 %v1682, %v2445
  %v2447 = vand.u32 %v2446, 4294901760
  %2448 = vmatpush2.msra.mxu0 %v2447
  %2449 = vmatprep.subr.mxu0 0.0
  %v2450 = vand.u32 %v1681, 4294901760
  %v2451 = vsub.f32 %v1681, %v2450
  %v2452 = vand.u32 %v2451, 4294901760
  %2453 = vmatpush2.msra.mxu0 %v2452
  %2454 = vmatprep.subr.mxu0 0.0
  %v2455 = vand.u32 %v1680, 4294901760
  %v2456 = vsub.f32 %v1680, %v2455
  %v2457 = vand.u32 %v2456, 4294901760
  %2458 = vmatpush2.msra.mxu0 %v2457
  %2459 = vmatprep.subr.mxu0 0.0
  %v2460 = vand.u32 %v1679, 4294901760
  %v2461 = vsub.f32 %v1679, %v2460
  %v2462 = vand.u32 %v2461, 4294901760
  %2463 = vmatpush2.msra.mxu0 %v2462
  %2464 = vmatprep.subr.mxu0 0.0
  %v2465 = vand.u32 %v1678, 4294901760
  %v2466 = vsub.f32 %v1678, %v2465
  %v2467 = vand.u32 %v2466, 4294901760
  %2468 = vmatpush2.msra.mxu0 %v2467
  %2469 = vmatprep.subr.mxu0 0.0
  %v2470 = vand.u32 %v1677, 4294901760
  %v2471 = vsub.f32 %v1677, %v2470
  %v2472 = vand.u32 %v2471, 4294901760
  %2473 = vmatpush2.msra.mxu0 %v2472
  %2474 = vmatprep.subr.mxu0 0.0
  %v2475 = vand.u32 %v1676, 4294901760
  %v2476 = vsub.f32 %v1676, %v2475
  %v2477 = vand.u32 %v2476, 4294901760
  %2478 = vmatpush2.msra.mxu0 %v2477
  %2479 = vmatprep.subr.mxu0 0.0
  %v2480 = vand.u32 %v1675, 4294901760
  %v2481 = vsub.f32 %v1675, %v2480
  %v2482 = vand.u32 %v2481, 4294901760
  %2483 = vmatpush2.msra.mxu0 %v2482
  %2484 = vmatprep.subr.mxu0 0.0
  %v2485 = vand.u32 %v1674, 4294901760
  %v2486 = vsub.f32 %v1674, %v2485
  %v2487 = vand.u32 %v2486, 4294901760
  %2488 = vmatpush2.msra.mxu0 %v2487
  %v2489 = vand.u32 %v1655, 4294901760
  %2490 = vmatprep.mubr.f32.mxu0 %v2489
  %v2491 = vand.u32 %v1654, 4294901760
  %2492 = vmatmul.mubr.f32.gmra.mxu0 %v2491
  %v2493 = vpop.f32.mrf.mxu0
  %v2494 = vadd.f32 %v2315, %v2493
  %v2495 = vpop.f32.mrf.mxu0
  %v2496 = vand.u32 %v1657, 4294901760
  %2497 = vmatprep.mubr.f32.mxu0 %v2496
  %v2498 = vand.u32 %v1656, 4294901760
  %2499 = vmatmul.mubr.f32.gmra.mxu0 %v2498
  %v2500 = vpop.f32.mrf.mxu0
  %v2501 = vadd.f32 %v2326, %v2500
  %v2502 = vpop.f32.mrf.mxu0
  %2503 = vdwg.mxu0
  %2504 = vmatprep.subr.mxu0 0.0
  %v2505 = vand.u32 %v1673, 4294901760
  %2506 = vmatpush1.msra.mxu0 %v2505
  %2507 = vmatprep.subr.mxu0 0.0
  %v2508 = vand.u32 %v1672, 4294901760
  %2509 = vmatpush1.msra.mxu0 %v2508
  %2510 = vmatprep.subr.mxu0 0.0
  %v2511 = vand.u32 %v1671, 4294901760
  %2512 = vmatpush1.msra.mxu0 %v2511
  %2513 = vmatprep.subr.mxu0 0.0
  %v2514 = vand.u32 %v1670, 4294901760
  %2515 = vmatpush1.msra.mxu0 %v2514
  %2516 = vmatprep.subr.mxu0 0.0
  %v2517 = vand.u32 %v1669, 4294901760
  %2518 = vmatpush1.msra.mxu0 %v2517
  %2519 = vmatprep.subr.mxu0 0.0
  %v2520 = vand.u32 %v1668, 4294901760
  %2521 = vmatpush1.msra.mxu0 %v2520
  %2522 = vmatprep.subr.mxu0 0.0
  %v2523 = vand.u32 %v1667, 4294901760
  %2524 = vmatpush1.msra.mxu0 %v2523
  %2525 = vmatprep.subr.mxu0 0.0
  %v2526 = vand.u32 %v1666, 4294901760
  %2527 = vmatpush1.msra.mxu0 %v2526
  %2528 = vmatprep.subr.mxu0 0.0
  %v2529 = vand.u32 %v1665, 4294901760
  %2530 = vmatpush1.msra.mxu0 %v2529
  %2531 = vmatprep.subr.mxu0 0.0
  %v2532 = vand.u32 %v1664, 4294901760
  %2533 = vmatpush1.msra.mxu0 %v2532
  %2534 = vmatprep.subr.mxu0 0.0
  %v2535 = vand.u32 %v1663, 4294901760
  %2536 = vmatpush1.msra.mxu0 %v2535
  %2537 = vmatprep.subr.mxu0 0.0
  %v2538 = vand.u32 %v1662, 4294901760
  %2539 = vmatpush1.msra.mxu0 %v2538
  %2540 = vmatprep.subr.mxu0 0.0
  %v2541 = vand.u32 %v1661, 4294901760
  %2542 = vmatpush1.msra.mxu0 %v2541
  %2543 = vmatprep.subr.mxu0 0.0
  %v2544 = vand.u32 %v1660, 4294901760
  %2545 = vmatpush1.msra.mxu0 %v2544
  %2546 = vmatprep.subr.mxu0 0.0
  %v2547 = vand.u32 %v1659, 4294901760
  %2548 = vmatpush1.msra.mxu0 %v2547
  %2549 = vmatprep.subr.mxu0 0.0
  %v2550 = vand.u32 %v1658, 4294901760
  %2551 = vmatpush1.msra.mxu0 %v2550
  %2552 = vmatprep.subr.mxu0 0.0
  %v2553 = vand.u32 %v1689, 4294901760
  %2554 = vmatpush2.msra.mxu0 %v2553
  %2555 = vmatprep.subr.mxu0 0.0
  %v2556 = vand.u32 %v1688, 4294901760
  %2557 = vmatpush2.msra.mxu0 %v2556
  %2558 = vmatprep.subr.mxu0 0.0
  %v2559 = vand.u32 %v1687, 4294901760
  %2560 = vmatpush2.msra.mxu0 %v2559
  %2561 = vmatprep.subr.mxu0 0.0
  %v2562 = vand.u32 %v1686, 4294901760
  %2563 = vmatpush2.msra.mxu0 %v2562
  %2564 = vmatprep.subr.mxu0 0.0
  %v2565 = vand.u32 %v1685, 4294901760
  %2566 = vmatpush2.msra.mxu0 %v2565
  %2567 = vmatprep.subr.mxu0 0.0
  %v2568 = vand.u32 %v1684, 4294901760
  %2569 = vmatpush2.msra.mxu0 %v2568
  %2570 = vmatprep.subr.mxu0 0.0
  %v2571 = vand.u32 %v1683, 4294901760
  %2572 = vmatpush2.msra.mxu0 %v2571
  %2573 = vmatprep.subr.mxu0 0.0
  %v2574 = vand.u32 %v1682, 4294901760
  %2575 = vmatpush2.msra.mxu0 %v2574
  %2576 = vmatprep.subr.mxu0 0.0
  %v2577 = vand.u32 %v1681, 4294901760
  %2578 = vmatpush2.msra.mxu0 %v2577
  %2579 = vmatprep.subr.mxu0 0.0
  %v2580 = vand.u32 %v1680, 4294901760
  %2581 = vmatpush2.msra.mxu0 %v2580
  %2582 = vmatprep.subr.mxu0 0.0
  %v2583 = vand.u32 %v1679, 4294901760
  %2584 = vmatpush2.msra.mxu0 %v2583
  %2585 = vmatprep.subr.mxu0 0.0
  %v2586 = vand.u32 %v1678, 4294901760
  %2587 = vmatpush2.msra.mxu0 %v2586
  %2588 = vmatprep.subr.mxu0 0.0
  %v2589 = vand.u32 %v1677, 4294901760
  %2590 = vmatpush2.msra.mxu0 %v2589
  %2591 = vmatprep.subr.mxu0 0.0
  %v2592 = vand.u32 %v1676, 4294901760
  %2593 = vmatpush2.msra.mxu0 %v2592
  %2594 = vmatprep.subr.mxu0 0.0
  %v2595 = vand.u32 %v1675, 4294901760
  %2596 = vmatpush2.msra.mxu0 %v2595
  %2597 = vmatprep.subr.mxu0 0.0
  %v2598 = vand.u32 %v1674, 4294901760
  %2599 = vmatpush2.msra.mxu0 %v2598
  %v2600 = vand.u32 %v1655, 4294901760
  %2601 = vmatprep.mubr.f32.mxu0 %v2600
  %v2602 = vand.u32 %v1654, 4294901760
  %2603 = vmatmul.mubr.f32.gmra.mxu0 %v2602
  %v2604 = vpop.f32.mrf.mxu0
  %v2605 = vadd.f32 %v2494, %v2604
  %v2606 = vpop.f32.mrf.mxu0
  %v2607 = vand.u32 %v1657, 4294901760
  %2608 = vmatprep.mubr.f32.mxu0 %v2607
  %v2609 = vand.u32 %v1656, 4294901760
  %2610 = vmatmul.mubr.f32.gmra.mxu0 %v2609
  %v2611 = vpop.f32.mrf.mxu0
  %v2612 = vadd.f32 %v2501, %v2611
  %v2613 = vpop.f32.mrf.mxu0
  %2614 = vdwg.mxu0
  %v2615 = vld [vmem:[%s11] sm:$0x1]
  %v2616 = vld [vmem:[%s12] sm:$0x1]
  %v2617 = vmax.f32 %v2605, 0.0
  %v2618 = vmax.f32 %v2612, 0.0
  %vm2619 = vcmask 523264
  %v2620 = vsel %vm2619, %v2617, 0.0
  %v2621 = vsel %vm2619, %v2618, 0.0
  %v2622 = vadd.f32 %v2620, %v2621
  %v2623 = vrot.slane %v2622, 4
  %v2624 = vadd.f32 %v2622, %v2623
  %v2625 = vrot.slane %v2624, 2
  %v2626 = vadd.f32 %v2624, %v2625
  %v2627 = vrot.slane %v2626, 1
  %v2628 = vadd.f32 %v2626, %v2627
  %v2629 = vmul.f32 %v2617, %v2617
  %v2630 = vmul.f32 %v2618, %v2618
  %v2631 = vsel %vm2619, %v2629, 0.0
  %v2632 = vsel %vm2619, %v2630, 0.0
  %v2633 = vadd.f32 %v2631, %v2632
  %v2634 = vrot.slane %v2633, 4
  %v2635 = vadd.f32 %v2633, %v2634
  %v2636 = vrot.slane %v2635, 2
  %v2637 = vadd.f32 %v2635, %v2636
  %v2638 = vrot.slane %v2637, 1
  %v2639 = vadd.f32 %v2637, %v2638
  %v2640 = vmul.f32 %v2628, 0.0625
  %v2641 = vmul.f32 %v2639, 0.0625
  %v2642 = vmul.f32 %v2640, %v2640
  %v2643 = vsub.f32 %v2641, %v2642
  %v2644 = vadd.f32 %v2643, 1e-05
  %v2645 = vrsqrt.pop %v2644
  %v2646 = vmul.f32 %v2645, %v2615
  %v2647 = vmul.f32 %v2640, %v2646
  %v2648 = vsub.f32 %v2616, %v2647
  %v2649 = vlaneseq
  %v2650 = vshrl.u32 %v2649, 7
  %v2651 = vsub.s32 0, %v2650
  %v2652 = vrot.slane %v2646, %v2651
  %v2653 = vmul.f32 %v2617, %v2652
  %v2654 = vmul.f32 %v2618, %v2652
  %v2656 = vlaneseq
  %v2657 = vshrl.u32 %v2656, 7
  %v2658 = vsub.s32 0, %v2657
  %v2659 = vrot.slane %v2648, %v2658
  %v2661 = vadd.f32 %v2653, %v2659
  %v2662 = vadd.f32 %v2654, %v2659
  %v2663 = vld [vmem:[%s13] sm:$0xff]
  %v2664 = vld [vmem:[%s13 + $0x8] sm:$0xff]
  %v2665 = vld [vmem:[%s13 + $0x10] sm:$0xff]
  %v2666 = vld [vmem:[%s13 + $0x18] sm:$0xff]
  %v2667 = vld [vmem:[%s13 + $0x20] sm:$0xff]
  %v2668 = vld [vmem:[%s13 + $0x28] sm:$0xff]
  %v2669 = vld [vmem:[%s13 + $0x30] sm:$0xff]
  %v2670 = vld [vmem:[%s13 + $0x38] sm:$0xff]
  %v2671 = vld [vmem:[%s14] sm:$0x1]
  %v2673 = vlaneseq
  %v2674 = vshrl.u32 %v2673, 7
  %v2675 = vsub.s32 0, %v2674
  %v2676 = vrot.slane %v2671, %v2675
  %v2679 = vsel %vm2619, %v2661, 0
  %v2682 = vsel %vm2619, %v2662, 0
  %2684 = vmatprep.subr.mxu0 0.0
  %2685 = vmatpush1.msra.mxu0 0.0
  %2686 = vmatprep.subr.mxu0 0.0
  %2687 = vmatpush1.msra.mxu0 0.0
  %2688 = vmatprep.subr.mxu0 0.0
  %2689 = vmatpush1.msra.mxu0 0.0
  %2690 = vmatprep.subr.mxu0 0.0
  %2691 = vmatpush1.msra.mxu0 0.0
  %2692 = vmatprep.subr.mxu0 0.0
  %2693 = vmatpush1.msra.mxu0 0.0
  %2694 = vmatprep.subr.mxu0 0.0
  %2695 = vmatpush1.msra.mxu0 0.0
  %2696 = vmatprep.subr.mxu0 0.0
  %2697 = vmatpush1.msra.mxu0 0.0
  %2698 = vmatprep.subr.mxu0 0.0
  %2699 = vmatpush1.msra.mxu0 0.0
  %2700 = vmatprep.subr.mxu0 0.0
  %v2701 = vand.u32 %v2670, 4294901760
  %2702 = vmatpush1.msra.mxu0 %v2701
  %2703 = vmatprep.subr.mxu0 0.0
  %v2704 = vand.u32 %v2669, 4294901760
  %2705 = vmatpush1.msra.mxu0 %v2704
  %2706 = vmatprep.subr.mxu0 0.0
  %v2707 = vand.u32 %v2668, 4294901760
  %2708 = vmatpush1.msra.mxu0 %v2707
  %2709 = vmatprep.subr.mxu0 0.0
  %v2710 = vand.u32 %v2667, 4294901760
  %2711 = vmatpush1.msra.mxu0 %v2710
  %2712 = vmatprep.subr.mxu0 0.0
  %v2713 = vand.u32 %v2666, 4294901760
  %2714 = vmatpush1.msra.mxu0 %v2713
  %2715 = vmatprep.subr.mxu0 0.0
  %v2716 = vand.u32 %v2665, 4294901760
  %2717 = vmatpush1.msra.mxu0 %v2716
  %2718 = vmatprep.subr.mxu0 0.0
  %v2719 = vand.u32 %v2664, 4294901760
  %2720 = vmatpush1.msra.mxu0 %v2719
  %2721 = vmatprep.subr.mxu0 0.0
  %v2722 = vand.u32 %v2663, 4294901760
  %2723 = vmatpush1.msra.mxu0 %v2722
  %2724 = vmatprep.subr.mxu0 0.0
  %2725 = vmatpush2.msra.mxu0 0.0
  %2726 = vmatprep.subr.mxu0 0.0
  %2727 = vmatpush2.msra.mxu0 0.0
  %2728 = vmatprep.subr.mxu0 0.0
  %2729 = vmatpush2.msra.mxu0 0.0
  %2730 = vmatprep.subr.mxu0 0.0
  %2731 = vmatpush2.msra.mxu0 0.0
  %2732 = vmatprep.subr.mxu0 0.0
  %2733 = vmatpush2.msra.mxu0 0.0
  %2734 = vmatprep.subr.mxu0 0.0
  %2735 = vmatpush2.msra.mxu0 0.0
  %2736 = vmatprep.subr.mxu0 0.0
  %2737 = vmatpush2.msra.mxu0 0.0
  %2738 = vmatprep.subr.mxu0 0.0
  %2739 = vmatpush2.msra.mxu0 0.0
  %2740 = vmatprep.subr.mxu0 0.0
  %2741 = vmatpush2.msra.mxu0 0.0
  %2742 = vmatprep.subr.mxu0 0.0
  %2743 = vmatpush2.msra.mxu0 0.0
  %2744 = vmatprep.subr.mxu0 0.0
  %2745 = vmatpush2.msra.mxu0 0.0
  %2746 = vmatprep.subr.mxu0 0.0
  %2747 = vmatpush2.msra.mxu0 0.0
  %2748 = vmatprep.subr.mxu0 0.0
  %2749 = vmatpush2.msra.mxu0 0.0
  %2750 = vmatprep.subr.mxu0 0.0
  %2751 = vmatpush2.msra.mxu0 0.0
  %2752 = vmatprep.subr.mxu0 0.0
  %2753 = vmatpush2.msra.mxu0 0.0
  %2754 = vmatprep.subr.mxu0 0.0
  %2755 = vmatpush2.msra.mxu0 0.0
  %2756 = vmatprep.mubr.f32.mxu0 0.0
  %v2757 = vand.u32 %v2679, 4294901760
  %v2758 = vsub.f32 %v2679, %v2757
  %v2759 = vand.u32 %v2758, 4294901760
  %v2760 = vsub.f32 %v2758, %v2759
  %v2761 = vand.u32 %v2760, 4294901760
  %2762 = vmatmul.mubr.f32.gmra.mxu0 %v2761
  %v2763 = vpop.f32.mrf.mxu0
  %v2764 = vadd.f32 %v2676, %v2763
  %v2765 = vpop.f32.mrf.mxu0
  %2766 = vmatprep.mubr.f32.mxu0 0.0
  %v2767 = vand.u32 %v2682, 4294901760
  %v2768 = vsub.f32 %v2682, %v2767
  %v2769 = vand.u32 %v2768, 4294901760
  %v2770 = vsub.f32 %v2768, %v2769
  %v2771 = vand.u32 %v2770, 4294901760
  %2772 = vmatmul.mubr.f32.gmra.mxu0 %v2771
  %v2773 = vpop.f32.mrf.mxu0
  %v2774 = vadd.f32 %v2676, %v2773
  %v2775 = vpop.f32.mrf.mxu0
  %2776 = vdwg.mxu0
  %2777 = vmatprep.subr.mxu0 0.0
  %2778 = vmatpush1.msra.mxu0 0.0
  %2779 = vmatprep.subr.mxu0 0.0
  %2780 = vmatpush1.msra.mxu0 0.0
  %2781 = vmatprep.subr.mxu0 0.0
  %2782 = vmatpush1.msra.mxu0 0.0
  %2783 = vmatprep.subr.mxu0 0.0
  %2784 = vmatpush1.msra.mxu0 0.0
  %2785 = vmatprep.subr.mxu0 0.0
  %2786 = vmatpush1.msra.mxu0 0.0
  %2787 = vmatprep.subr.mxu0 0.0
  %2788 = vmatpush1.msra.mxu0 0.0
  %2789 = vmatprep.subr.mxu0 0.0
  %2790 = vmatpush1.msra.mxu0 0.0
  %2791 = vmatprep.subr.mxu0 0.0
  %2792 = vmatpush1.msra.mxu0 0.0
  %2793 = vmatprep.subr.mxu0 0.0
  %v2794 = vand.u32 %v2670, 4294901760
  %v2795 = vsub.f32 %v2670, %v2794
  %v2796 = vand.u32 %v2795, 4294901760
  %v2797 = vsub.f32 %v2795, %v2796
  %v2798 = vand.u32 %v2797, 4294901760
  %2799 = vmatpush1.msra.mxu0 %v2798
  %2800 = vmatprep.subr.mxu0 0.0
  %v2801 = vand.u32 %v2669, 4294901760
  %v2802 = vsub.f32 %v2669, %v2801
  %v2803 = vand.u32 %v2802, 4294901760
  %v2804 = vsub.f32 %v2802, %v2803
  %v2805 = vand.u32 %v2804, 4294901760
  %2806 = vmatpush1.msra.mxu0 %v2805
  %2807 = vmatprep.subr.mxu0 0.0
  %v2808 = vand.u32 %v2668, 4294901760
  %v2809 = vsub.f32 %v2668, %v2808
  %v2810 = vand.u32 %v2809, 4294901760
  %v2811 = vsub.f32 %v2809, %v2810
  %v2812 = vand.u32 %v2811, 4294901760
  %2813 = vmatpush1.msra.mxu0 %v2812
  %2814 = vmatprep.subr.mxu0 0.0
  %v2815 = vand.u32 %v2667, 4294901760
  %v2816 = vsub.f32 %v2667, %v2815
  %v2817 = vand.u32 %v2816, 4294901760
  %v2818 = vsub.f32 %v2816, %v2817
  %v2819 = vand.u32 %v2818, 4294901760
  %2820 = vmatpush1.msra.mxu0 %v2819
  %2821 = vmatprep.subr.mxu0 0.0
  %v2822 = vand.u32 %v2666, 4294901760
  %v2823 = vsub.f32 %v2666, %v2822
  %v2824 = vand.u32 %v2823, 4294901760
  %v2825 = vsub.f32 %v2823, %v2824
  %v2826 = vand.u32 %v2825, 4294901760
  %2827 = vmatpush1.msra.mxu0 %v2826
  %2828 = vmatprep.subr.mxu0 0.0
  %v2829 = vand.u32 %v2665, 4294901760
  %v2830 = vsub.f32 %v2665, %v2829
  %v2831 = vand.u32 %v2830, 4294901760
  %v2832 = vsub.f32 %v2830, %v2831
  %v2833 = vand.u32 %v2832, 4294901760
  %2834 = vmatpush1.msra.mxu0 %v2833
  %2835 = vmatprep.subr.mxu0 0.0
  %v2836 = vand.u32 %v2664, 4294901760
  %v2837 = vsub.f32 %v2664, %v2836
  %v2838 = vand.u32 %v2837, 4294901760
  %v2839 = vsub.f32 %v2837, %v2838
  %v2840 = vand.u32 %v2839, 4294901760
  %2841 = vmatpush1.msra.mxu0 %v2840
  %2842 = vmatprep.subr.mxu0 0.0
  %v2843 = vand.u32 %v2663, 4294901760
  %v2844 = vsub.f32 %v2663, %v2843
  %v2845 = vand.u32 %v2844, 4294901760
  %v2846 = vsub.f32 %v2844, %v2845
  %v2847 = vand.u32 %v2846, 4294901760
  %2848 = vmatpush1.msra.mxu0 %v2847
  %2849 = vmatprep.subr.mxu0 0.0
  %2850 = vmatpush2.msra.mxu0 0.0
  %2851 = vmatprep.subr.mxu0 0.0
  %2852 = vmatpush2.msra.mxu0 0.0
  %2853 = vmatprep.subr.mxu0 0.0
  %2854 = vmatpush2.msra.mxu0 0.0
  %2855 = vmatprep.subr.mxu0 0.0
  %2856 = vmatpush2.msra.mxu0 0.0
  %2857 = vmatprep.subr.mxu0 0.0
  %2858 = vmatpush2.msra.mxu0 0.0
  %2859 = vmatprep.subr.mxu0 0.0
  %2860 = vmatpush2.msra.mxu0 0.0
  %2861 = vmatprep.subr.mxu0 0.0
  %2862 = vmatpush2.msra.mxu0 0.0
  %2863 = vmatprep.subr.mxu0 0.0
  %2864 = vmatpush2.msra.mxu0 0.0
  %2865 = vmatprep.subr.mxu0 0.0
  %2866 = vmatpush2.msra.mxu0 0.0
  %2867 = vmatprep.subr.mxu0 0.0
  %2868 = vmatpush2.msra.mxu0 0.0
  %2869 = vmatprep.subr.mxu0 0.0
  %2870 = vmatpush2.msra.mxu0 0.0
  %2871 = vmatprep.subr.mxu0 0.0
  %2872 = vmatpush2.msra.mxu0 0.0
  %2873 = vmatprep.subr.mxu0 0.0
  %2874 = vmatpush2.msra.mxu0 0.0
  %2875 = vmatprep.subr.mxu0 0.0
  %2876 = vmatpush2.msra.mxu0 0.0
  %2877 = vmatprep.subr.mxu0 0.0
  %2878 = vmatpush2.msra.mxu0 0.0
  %2879 = vmatprep.subr.mxu0 0.0
  %2880 = vmatpush2.msra.mxu0 0.0
  %2881 = vmatprep.mubr.f32.mxu0 0.0
  %v2882 = vand.u32 %v2679, 4294901760
  %2883 = vmatmul.mubr.f32.gmra.mxu0 %v2882
  %v2884 = vpop.f32.mrf.mxu0
  %v2885 = vadd.f32 %v2764, %v2884
  %v2886 = vpop.f32.mrf.mxu0
  %2887 = vmatprep.mubr.f32.mxu0 0.0
  %v2888 = vand.u32 %v2682, 4294901760
  %2889 = vmatmul.mubr.f32.gmra.mxu0 %v2888
  %v2890 = vpop.f32.mrf.mxu0
  %v2891 = vadd.f32 %v2774, %v2890
  %v2892 = vpop.f32.mrf.mxu0
  %2893 = vdwg.mxu0
  %2894 = vmatprep.subr.mxu0 0.0
  %2895 = vmatpush1.msra.mxu0 0.0
  %2896 = vmatprep.subr.mxu0 0.0
  %2897 = vmatpush1.msra.mxu0 0.0
  %2898 = vmatprep.subr.mxu0 0.0
  %2899 = vmatpush1.msra.mxu0 0.0
  %2900 = vmatprep.subr.mxu0 0.0
  %2901 = vmatpush1.msra.mxu0 0.0
  %2902 = vmatprep.subr.mxu0 0.0
  %2903 = vmatpush1.msra.mxu0 0.0
  %2904 = vmatprep.subr.mxu0 0.0
  %2905 = vmatpush1.msra.mxu0 0.0
  %2906 = vmatprep.subr.mxu0 0.0
  %2907 = vmatpush1.msra.mxu0 0.0
  %2908 = vmatprep.subr.mxu0 0.0
  %2909 = vmatpush1.msra.mxu0 0.0
  %2910 = vmatprep.subr.mxu0 0.0
  %v2911 = vand.u32 %v2670, 4294901760
  %v2912 = vsub.f32 %v2670, %v2911
  %2913 = vmatpush1.msra.mxu0 %v2912
  %2914 = vmatprep.subr.mxu0 0.0
  %v2915 = vand.u32 %v2669, 4294901760
  %v2916 = vsub.f32 %v2669, %v2915
  %2917 = vmatpush1.msra.mxu0 %v2916
  %2918 = vmatprep.subr.mxu0 0.0
  %v2919 = vand.u32 %v2668, 4294901760
  %v2920 = vsub.f32 %v2668, %v2919
  %2921 = vmatpush1.msra.mxu0 %v2920
  %2922 = vmatprep.subr.mxu0 0.0
  %v2923 = vand.u32 %v2667, 4294901760
  %v2924 = vsub.f32 %v2667, %v2923
  %2925 = vmatpush1.msra.mxu0 %v2924
  %2926 = vmatprep.subr.mxu0 0.0
  %v2927 = vand.u32 %v2666, 4294901760
  %v2928 = vsub.f32 %v2666, %v2927
  %2929 = vmatpush1.msra.mxu0 %v2928
  %2930 = vmatprep.subr.mxu0 0.0
  %v2931 = vand.u32 %v2665, 4294901760
  %v2932 = vsub.f32 %v2665, %v2931
  %2933 = vmatpush1.msra.mxu0 %v2932
  %2934 = vmatprep.subr.mxu0 0.0
  %v2935 = vand.u32 %v2664, 4294901760
  %v2936 = vsub.f32 %v2664, %v2935
  %2937 = vmatpush1.msra.mxu0 %v2936
  %2938 = vmatprep.subr.mxu0 0.0
  %v2939 = vand.u32 %v2663, 4294901760
  %v2940 = vsub.f32 %v2663, %v2939
  %2941 = vmatpush1.msra.mxu0 %v2940
  %2942 = vmatprep.subr.mxu0 0.0
  %2943 = vmatpush2.msra.mxu0 0.0
  %2944 = vmatprep.subr.mxu0 0.0
  %2945 = vmatpush2.msra.mxu0 0.0
  %2946 = vmatprep.subr.mxu0 0.0
  %2947 = vmatpush2.msra.mxu0 0.0
  %2948 = vmatprep.subr.mxu0 0.0
  %2949 = vmatpush2.msra.mxu0 0.0
  %2950 = vmatprep.subr.mxu0 0.0
  %2951 = vmatpush2.msra.mxu0 0.0
  %2952 = vmatprep.subr.mxu0 0.0
  %2953 = vmatpush2.msra.mxu0 0.0
  %2954 = vmatprep.subr.mxu0 0.0
  %2955 = vmatpush2.msra.mxu0 0.0
  %2956 = vmatprep.subr.mxu0 0.0
  %2957 = vmatpush2.msra.mxu0 0.0
  %2958 = vmatprep.subr.mxu0 0.0
  %2959 = vmatpush2.msra.mxu0 0.0
  %2960 = vmatprep.subr.mxu0 0.0
  %2961 = vmatpush2.msra.mxu0 0.0
  %2962 = vmatprep.subr.mxu0 0.0
  %2963 = vmatpush2.msra.mxu0 0.0
  %2964 = vmatprep.subr.mxu0 0.0
  %2965 = vmatpush2.msra.mxu0 0.0
  %2966 = vmatprep.subr.mxu0 0.0
  %2967 = vmatpush2.msra.mxu0 0.0
  %2968 = vmatprep.subr.mxu0 0.0
  %2969 = vmatpush2.msra.mxu0 0.0
  %2970 = vmatprep.subr.mxu0 0.0
  %2971 = vmatpush2.msra.mxu0 0.0
  %2972 = vmatprep.subr.mxu0 0.0
  %2973 = vmatpush2.msra.mxu0 0.0
  %2974 = vmatprep.mubr.f32.mxu0 0.0
  %v2975 = vand.u32 %v2679, 4294901760
  %v2976 = vsub.f32 %v2679, %v2975
  %2977 = vmatmul.mubr.f32.gmra.mxu0 %v2976
  %v2978 = vpop.f32.mrf.mxu0
  %v2979 = vadd.f32 %v2885, %v2978
  %v2980 = vpop.f32.mrf.mxu0
  %2981 = vmatprep.mubr.f32.mxu0 0.0
  %v2982 = vand.u32 %v2682, 4294901760
  %v2983 = vsub.f32 %v2682, %v2982
  %2984 = vmatmul.mubr.f32.gmra.mxu0 %v2983
  %v2985 = vpop.f32.mrf.mxu0
  %v2986 = vadd.f32 %v2891, %v2985
  %v2987 = vpop.f32.mrf.mxu0
  %2988 = vdwg.mxu0
  %2989 = vmatprep.subr.mxu0 0.0
  %2990 = vmatpush1.msra.mxu0 0.0
  %2991 = vmatprep.subr.mxu0 0.0
  %2992 = vmatpush1.msra.mxu0 0.0
  %2993 = vmatprep.subr.mxu0 0.0
  %2994 = vmatpush1.msra.mxu0 0.0
  %2995 = vmatprep.subr.mxu0 0.0
  %2996 = vmatpush1.msra.mxu0 0.0
  %2997 = vmatprep.subr.mxu0 0.0
  %2998 = vmatpush1.msra.mxu0 0.0
  %2999 = vmatprep.subr.mxu0 0.0
  %3000 = vmatpush1.msra.mxu0 0.0
  %3001 = vmatprep.subr.mxu0 0.0
  %3002 = vmatpush1.msra.mxu0 0.0
  %3003 = vmatprep.subr.mxu0 0.0
  %3004 = vmatpush1.msra.mxu0 0.0
  %3005 = vmatprep.subr.mxu0 0.0
  %v3006 = vand.u32 %v2670, 4294901760
  %3007 = vmatpush1.msra.mxu0 %v3006
  %3008 = vmatprep.subr.mxu0 0.0
  %v3009 = vand.u32 %v2669, 4294901760
  %3010 = vmatpush1.msra.mxu0 %v3009
  %3011 = vmatprep.subr.mxu0 0.0
  %v3012 = vand.u32 %v2668, 4294901760
  %3013 = vmatpush1.msra.mxu0 %v3012
  %3014 = vmatprep.subr.mxu0 0.0
  %v3015 = vand.u32 %v2667, 4294901760
  %3016 = vmatpush1.msra.mxu0 %v3015
  %3017 = vmatprep.subr.mxu0 0.0
  %v3018 = vand.u32 %v2666, 4294901760
  %3019 = vmatpush1.msra.mxu0 %v3018
  %3020 = vmatprep.subr.mxu0 0.0
  %v3021 = vand.u32 %v2665, 4294901760
  %3022 = vmatpush1.msra.mxu0 %v3021
  %3023 = vmatprep.subr.mxu0 0.0
  %v3024 = vand.u32 %v2664, 4294901760
  %3025 = vmatpush1.msra.mxu0 %v3024
  %3026 = vmatprep.subr.mxu0 0.0
  %v3027 = vand.u32 %v2663, 4294901760
  %3028 = vmatpush1.msra.mxu0 %v3027
  %3029 = vmatprep.subr.mxu0 0.0
  %3030 = vmatpush2.msra.mxu0 0.0
  %3031 = vmatprep.subr.mxu0 0.0
  %3032 = vmatpush2.msra.mxu0 0.0
  %3033 = vmatprep.subr.mxu0 0.0
  %3034 = vmatpush2.msra.mxu0 0.0
  %3035 = vmatprep.subr.mxu0 0.0
  %3036 = vmatpush2.msra.mxu0 0.0
  %3037 = vmatprep.subr.mxu0 0.0
  %3038 = vmatpush2.msra.mxu0 0.0
  %3039 = vmatprep.subr.mxu0 0.0
  %3040 = vmatpush2.msra.mxu0 0.0
  %3041 = vmatprep.subr.mxu0 0.0
  %3042 = vmatpush2.msra.mxu0 0.0
  %3043 = vmatprep.subr.mxu0 0.0
  %3044 = vmatpush2.msra.mxu0 0.0
  %3045 = vmatprep.subr.mxu0 0.0
  %3046 = vmatpush2.msra.mxu0 0.0
  %3047 = vmatprep.subr.mxu0 0.0
  %3048 = vmatpush2.msra.mxu0 0.0
  %3049 = vmatprep.subr.mxu0 0.0
  %3050 = vmatpush2.msra.mxu0 0.0
  %3051 = vmatprep.subr.mxu0 0.0
  %3052 = vmatpush2.msra.mxu0 0.0
  %3053 = vmatprep.subr.mxu0 0.0
  %3054 = vmatpush2.msra.mxu0 0.0
  %3055 = vmatprep.subr.mxu0 0.0
  %3056 = vmatpush2.msra.mxu0 0.0
  %3057 = vmatprep.subr.mxu0 0.0
  %3058 = vmatpush2.msra.mxu0 0.0
  %3059 = vmatprep.subr.mxu0 0.0
  %3060 = vmatpush2.msra.mxu0 0.0
  %3061 = vmatprep.mubr.f32.mxu0 0.0
  %v3062 = vand.u32 %v2679, 4294901760
  %v3063 = vsub.f32 %v2679, %v3062
  %v3064 = vand.u32 %v3063, 4294901760
  %3065 = vmatmul.mubr.f32.gmra.mxu0 %v3064
  %v3066 = vpop.f32.mrf.mxu0
  %v3067 = vadd.f32 %v2979, %v3066
  %v3068 = vpop.f32.mrf.mxu0
  %3069 = vmatprep.mubr.f32.mxu0 0.0
  %v3070 = vand.u32 %v2682, 4294901760
  %v3071 = vsub.f32 %v2682, %v3070
  %v3072 = vand.u32 %v3071, 4294901760
  %3073 = vmatmul.mubr.f32.gmra.mxu0 %v3072
  %v3074 = vpop.f32.mrf.mxu0
  %v3075 = vadd.f32 %v2986, %v3074
  %v3076 = vpop.f32.mrf.mxu0
  %3077 = vdwg.mxu0
  %3078 = vmatprep.subr.mxu0 0.0
  %3079 = vmatpush1.msra.mxu0 0.0
  %3080 = vmatprep.subr.mxu0 0.0
  %3081 = vmatpush1.msra.mxu0 0.0
  %3082 = vmatprep.subr.mxu0 0.0
  %3083 = vmatpush1.msra.mxu0 0.0
  %3084 = vmatprep.subr.mxu0 0.0
  %3085 = vmatpush1.msra.mxu0 0.0
  %3086 = vmatprep.subr.mxu0 0.0
  %3087 = vmatpush1.msra.mxu0 0.0
  %3088 = vmatprep.subr.mxu0 0.0
  %3089 = vmatpush1.msra.mxu0 0.0
  %3090 = vmatprep.subr.mxu0 0.0
  %3091 = vmatpush1.msra.mxu0 0.0
  %3092 = vmatprep.subr.mxu0 0.0
  %3093 = vmatpush1.msra.mxu0 0.0
  %3094 = vmatprep.subr.mxu0 0.0
  %v3095 = vand.u32 %v2670, 4294901760
  %v3096 = vsub.f32 %v2670, %v3095
  %v3097 = vand.u32 %v3096, 4294901760
  %3098 = vmatpush1.msra.mxu0 %v3097
  %3099 = vmatprep.subr.mxu0 0.0
  %v3100 = vand.u32 %v2669, 4294901760
  %v3101 = vsub.f32 %v2669, %v3100
  %v3102 = vand.u32 %v3101, 4294901760
  %3103 = vmatpush1.msra.mxu0 %v3102
  %3104 = vmatprep.subr.mxu0 0.0
  %v3105 = vand.u32 %v2668, 4294901760
  %v3106 = vsub.f32 %v2668, %v3105
  %v3107 = vand.u32 %v3106, 4294901760
  %3108 = vmatpush1.msra.mxu0 %v3107
  %3109 = vmatprep.subr.mxu0 0.0
  %v3110 = vand.u32 %v2667, 4294901760
  %v3111 = vsub.f32 %v2667, %v3110
  %v3112 = vand.u32 %v3111, 4294901760
  %3113 = vmatpush1.msra.mxu0 %v3112
  %3114 = vmatprep.subr.mxu0 0.0
  %v3115 = vand.u32 %v2666, 4294901760
  %v3116 = vsub.f32 %v2666, %v3115
  %v3117 = vand.u32 %v3116, 4294901760
  %3118 = vmatpush1.msra.mxu0 %v3117
  %3119 = vmatprep.subr.mxu0 0.0
  %v3120 = vand.u32 %v2665, 4294901760
  %v3121 = vsub.f32 %v2665, %v3120
  %v3122 = vand.u32 %v3121, 4294901760
  %3123 = vmatpush1.msra.mxu0 %v3122
  %3124 = vmatprep.subr.mxu0 0.0
  %v3125 = vand.u32 %v2664, 4294901760
  %v3126 = vsub.f32 %v2664, %v3125
  %v3127 = vand.u32 %v3126, 4294901760
  %3128 = vmatpush1.msra.mxu0 %v3127
  %3129 = vmatprep.subr.mxu0 0.0
  %v3130 = vand.u32 %v2663, 4294901760
  %v3131 = vsub.f32 %v2663, %v3130
  %v3132 = vand.u32 %v3131, 4294901760
  %3133 = vmatpush1.msra.mxu0 %v3132
  %3134 = vmatprep.subr.mxu0 0.0
  %3135 = vmatpush2.msra.mxu0 0.0
  %3136 = vmatprep.subr.mxu0 0.0
  %3137 = vmatpush2.msra.mxu0 0.0
  %3138 = vmatprep.subr.mxu0 0.0
  %3139 = vmatpush2.msra.mxu0 0.0
  %3140 = vmatprep.subr.mxu0 0.0
  %3141 = vmatpush2.msra.mxu0 0.0
  %3142 = vmatprep.subr.mxu0 0.0
  %3143 = vmatpush2.msra.mxu0 0.0
  %3144 = vmatprep.subr.mxu0 0.0
  %3145 = vmatpush2.msra.mxu0 0.0
  %3146 = vmatprep.subr.mxu0 0.0
  %3147 = vmatpush2.msra.mxu0 0.0
  %3148 = vmatprep.subr.mxu0 0.0
  %3149 = vmatpush2.msra.mxu0 0.0
  %3150 = vmatprep.subr.mxu0 0.0
  %3151 = vmatpush2.msra.mxu0 0.0
  %3152 = vmatprep.subr.mxu0 0.0
  %3153 = vmatpush2.msra.mxu0 0.0
  %3154 = vmatprep.subr.mxu0 0.0
  %3155 = vmatpush2.msra.mxu0 0.0
  %3156 = vmatprep.subr.mxu0 0.0
  %3157 = vmatpush2.msra.mxu0 0.0
  %3158 = vmatprep.subr.mxu0 0.0
  %3159 = vmatpush2.msra.mxu0 0.0
  %3160 = vmatprep.subr.mxu0 0.0
  %3161 = vmatpush2.msra.mxu0 0.0
  %3162 = vmatprep.subr.mxu0 0.0
  %3163 = vmatpush2.msra.mxu0 0.0
  %3164 = vmatprep.subr.mxu0 0.0
  %3165 = vmatpush2.msra.mxu0 0.0
  %3166 = vmatprep.mubr.f32.mxu0 0.0
  %v3167 = vand.u32 %v2679, 4294901760
  %3168 = vmatmul.mubr.f32.gmra.mxu0 %v3167
  %v3169 = vpop.f32.mrf.mxu0
  %v3170 = vadd.f32 %v3067, %v3169
  %v3171 = vpop.f32.mrf.mxu0
  %3172 = vmatprep.mubr.f32.mxu0 0.0
  %v3173 = vand.u32 %v2682, 4294901760
  %3174 = vmatmul.mubr.f32.gmra.mxu0 %v3173
  %v3175 = vpop.f32.mrf.mxu0
  %v3176 = vadd.f32 %v3075, %v3175
  %v3177 = vpop.f32.mrf.mxu0
  %3178 = vdwg.mxu0
  %3179 = vmatprep.subr.mxu0 0.0
  %3180 = vmatpush1.msra.mxu0 0.0
  %3181 = vmatprep.subr.mxu0 0.0
  %3182 = vmatpush1.msra.mxu0 0.0
  %3183 = vmatprep.subr.mxu0 0.0
  %3184 = vmatpush1.msra.mxu0 0.0
  %3185 = vmatprep.subr.mxu0 0.0
  %3186 = vmatpush1.msra.mxu0 0.0
  %3187 = vmatprep.subr.mxu0 0.0
  %3188 = vmatpush1.msra.mxu0 0.0
  %3189 = vmatprep.subr.mxu0 0.0
  %3190 = vmatpush1.msra.mxu0 0.0
  %3191 = vmatprep.subr.mxu0 0.0
  %3192 = vmatpush1.msra.mxu0 0.0
  %3193 = vmatprep.subr.mxu0 0.0
  %3194 = vmatpush1.msra.mxu0 0.0
  %3195 = vmatprep.subr.mxu0 0.0
  %v3196 = vand.u32 %v2670, 4294901760
  %3197 = vmatpush1.msra.mxu0 %v3196
  %3198 = vmatprep.subr.mxu0 0.0
  %v3199 = vand.u32 %v2669, 4294901760
  %3200 = vmatpush1.msra.mxu0 %v3199
  %3201 = vmatprep.subr.mxu0 0.0
  %v3202 = vand.u32 %v2668, 4294901760
  %3203 = vmatpush1.msra.mxu0 %v3202
  %3204 = vmatprep.subr.mxu0 0.0
  %v3205 = vand.u32 %v2667, 4294901760
  %3206 = vmatpush1.msra.mxu0 %v3205
  %3207 = vmatprep.subr.mxu0 0.0
  %v3208 = vand.u32 %v2666, 4294901760
  %3209 = vmatpush1.msra.mxu0 %v3208
  %3210 = vmatprep.subr.mxu0 0.0
  %v3211 = vand.u32 %v2665, 4294901760
  %3212 = vmatpush1.msra.mxu0 %v3211
  %3213 = vmatprep.subr.mxu0 0.0
  %v3214 = vand.u32 %v2664, 4294901760
  %3215 = vmatpush1.msra.mxu0 %v3214
  %3216 = vmatprep.subr.mxu0 0.0
  %v3217 = vand.u32 %v2663, 4294901760
  %3218 = vmatpush1.msra.mxu0 %v3217
  %3219 = vmatprep.subr.mxu0 0.0
  %3220 = vmatpush2.msra.mxu0 0.0
  %3221 = vmatprep.subr.mxu0 0.0
  %3222 = vmatpush2.msra.mxu0 0.0
  %3223 = vmatprep.subr.mxu0 0.0
  %3224 = vmatpush2.msra.mxu0 0.0
  %3225 = vmatprep.subr.mxu0 0.0
  %3226 = vmatpush2.msra.mxu0 0.0
  %3227 = vmatprep.subr.mxu0 0.0
  %3228 = vmatpush2.msra.mxu0 0.0
  %3229 = vmatprep.subr.mxu0 0.0
  %3230 = vmatpush2.msra.mxu0 0.0
  %3231 = vmatprep.subr.mxu0 0.0
  %3232 = vmatpush2.msra.mxu0 0.0
  %3233 = vmatprep.subr.mxu0 0.0
  %3234 = vmatpush2.msra.mxu0 0.0
  %3235 = vmatprep.subr.mxu0 0.0
  %3236 = vmatpush2.msra.mxu0 0.0
  %3237 = vmatprep.subr.mxu0 0.0
  %3238 = vmatpush2.msra.mxu0 0.0
  %3239 = vmatprep.subr.mxu0 0.0
  %3240 = vmatpush2.msra.mxu0 0.0
  %3241 = vmatprep.subr.mxu0 0.0
  %3242 = vmatpush2.msra.mxu0 0.0
  %3243 = vmatprep.subr.mxu0 0.0
  %3244 = vmatpush2.msra.mxu0 0.0
  %3245 = vmatprep.subr.mxu0 0.0
  %3246 = vmatpush2.msra.mxu0 0.0
  %3247 = vmatprep.subr.mxu0 0.0
  %3248 = vmatpush2.msra.mxu0 0.0
  %3249 = vmatprep.subr.mxu0 0.0
  %3250 = vmatpush2.msra.mxu0 0.0
  %3251 = vmatprep.mubr.f32.mxu0 0.0
  %v3252 = vand.u32 %v2679, 4294901760
  %3253 = vmatmul.mubr.f32.gmra.mxu0 %v3252
  %v3254 = vpop.f32.mrf.mxu0
  %v3255 = vadd.f32 %v3170, %v3254
  %v3256 = vpop.f32.mrf.mxu0
  %3257 = vmatprep.mubr.f32.mxu0 0.0
  %v3258 = vand.u32 %v2682, 4294901760
  %3259 = vmatmul.mubr.f32.gmra.mxu0 %v3258
  %v3260 = vpop.f32.mrf.mxu0
  %v3261 = vadd.f32 %v3176, %v3260
  %v3262 = vpop.f32.mrf.mxu0
  %3263 = vdwg.mxu0
  %vm3264 = vcmask 31744
  %3265 = vst.msk [vmem:[%s15] sm:$0xff] %vm3264, %v3255
  %3266 = vst.msk [vmem:[%s15 + $0x8] sm:$0xff] %vm3264, %v3261
  // Predicated region
  $region62: #{nn4_forward.1} parent=0 // pred_check
    _
  $region63: #{nn4_forward.1} parent=0 // pred_check_branch
    %3268 = sbr.rel (0) target = $region65
  $region64: #{nn4_forward.1} parent=0 // pred_region
    _
  $region65: #{nn4_forward.1} parent=0 // pred_fallthru
    _
  // Predicated region
  $region66: #{nn4_forward.1} parent=0 // pred_check
    _
  $region67: #{nn4_forward.1} parent=0 // pred_check_branch
    %3270 = sbr.rel (0) target = $region69
  $region68: #{nn4_forward.1} parent=0 // pred_region
    _
  $region69: #{nn4_forward.1} parent=0 // pred_fallthru
    _

</llo_original>
